<compile_context>
chip_gen: v5e
topology: v5e:2x2
jax: 0.10.0
libtpu: 0.0.40
codegen_flags: <defaults>
</compile_context>

<pallas_src>
import functools

import numpy as np
import jax
import jax.numpy as jnp
from jax.experimental import pallas as pl
from jax.experimental.pallas import tpu as pltpu

EPS = 1e-5

# Static problem geometry (EuroSAT: 3 x 64 x 64 input).
H1, W1 = 64, 64          # conv1 output spatial
H2, W2 = 32, 32          # conv2 output spatial (= conv1 pooled)
H3 = 16                  # conv2 pooled height (and width)
C1, C2 = 4, 8            # conv1 / conv2 output channels
K1, K2 = 256, 128        # fused (w, cin) lane widths (conv1's 64*3=192 zero-padded to 256)
LH = 128                 # per-parity conv-output lane width (= 32*4 = 16*8)


def _full_spec(shape):
    # Whole-array block: the problem is tiny, so every operand sits in VMEM for the call.
    return pl.BlockSpec(shape, lambda *_: (0,) * len(shape))


# ---------------------------------------------------------------------------
# The single fused forward kernel
# ---------------------------------------------------------------------------
def eurosat_fwd_kernel(x1_ref, w1_ref, w2_ref,
                       fold1_ref, bc1_ref, gb1_ref,
                       fold2_ref, bc2_ref, gb2_ref,
                       wf1_ref, bf1_ref, wf2_ref, bf2_ref,
                       o_ref, x2_ref, flat_ref, *, B):

    def conv_bn_relu_pool(slab, w_ref, fold_ref, bc_ref, gb_ref, BH, cnt):
        """slab(dh) -> (BH, K) bf16 row-shifted input; returns pooled (BH//2, 128) f32.

        Conv output lanes are [even output cols | odd output cols], each (w, cout)
        fused to 128 lanes, so the 2x2 maxpool is an aligned lane-half max plus an
        adjacent-row max -- no lane shuffles.
        """
        # 3x3 conv as 3 MXU matmuls (one per kernel row); width taps, width padding and
        # output-parity split are all folded into the banded weights.
        y = jnp.dot(slab(0), w_ref[0], preferred_element_type=jnp.float32)
        y = y + jnp.dot(slab(1), w_ref[1], preferred_element_type=jnp.float32)
        y = y + jnp.dot(slab(2), w_ref[2], preferred_element_type=jnp.float32)
        # (conv bias intentionally omitted: it cancels exactly under train-mode BN)

        # BatchNorm2d, training mode: one-pass biased batch stats, batched fold /
        # broadcast selector dots (one (2,256)x(256,C), one (2,C)x(C,256)).
        s_ss = jnp.concatenate([jnp.sum(y, axis=0, keepdims=True),
                                jnp.sum(y * y, axis=0, keepdims=True)], axis=0)  # (2, 256)
        s_ss_c = jnp.dot(s_ss, fold_ref[...],
                         preferred_element_type=jnp.float32)                     # (2, C)
        mean_c = s_ss_c[0:1] / cnt
        var_c = s_ss_c[1:2] / cnt - mean_c * mean_c
        gb = gb_ref[...]                                                          # (2, C)
        scale_c = gb[0:1] * jax.lax.rsqrt(var_c + EPS)
        shift_c = gb[1:2] - mean_c * scale_c
        aff = jnp.dot(jnp.concatenate([scale_c, shift_c], axis=0), bc_ref[...],
                      preferred_element_type=jnp.float32)                         # (2, 256)

        # BN affine + ReLU (f32 VPU), then 2x2 maxpool epilogue.
        y = jnp.maximum(y * aff[0:1] + aff[1:2], 0.0)
        ym = jnp.maximum(y[:, :LH], y[:, LH:])                    # width-parity max
        return jnp.max(ym.reshape(BH // 2, 2, LH), axis=1)        # adjacent-row max

    # ---- conv block 1: reads the H- and lane-padded input (B, 66, 256) bf16 ----
    x1 = x1_ref[...]

    def slab1(dh):
        return x1[:, dh:dh + H1, :].reshape(B * H1, K1)

    p1 = conv_bn_relu_pool(slab1, w1_ref, fold1_ref, bc1_ref, gb1_ref,
                           BH=B * H1, cnt=float(B * H1 * W1))      # (B*32, 128) f32

    # ---- conv block 2: H-pad conv1's pooled output in a VMEM scratch (no HBM trip) ----
    zrow = jnp.zeros((B, 1, LH), jnp.float32)
    x2_ref[:, 0:1, :] = zrow
    x2_ref[:, H2 + 1:H2 + 2, :] = zrow
    x2_ref[:, 1:H2 + 1, :] = p1.reshape(B, H2, LH)
    x2 = x2_ref[...]                                               # (B, 34, 128) f32

    def slab2(dh):
        return x2[:, dh:dh + H2, :].reshape(B * H2, K2).astype(jnp.bfloat16)

    p2 = conv_bn_relu_pool(slab2, w2_ref, fold2_ref, bc2_ref, gb2_ref,
                           BH=B * H2, cnt=float(B * H2 * W2))      # (B*16, 128) f32

    # ---- flatten (B*16, 128) -> (B, 2048) in (h, w, c) order via lane-block stores ----
    for r in range(B * H3):
        b, h = divmod(r, H3)
        flat_ref[b:b + 1, h * LH:(h + 1) * LH] = p2[r:r + 1, :]

    # ---- fc1 + ReLU + fc2 (the (B, 32) intermediate never leaves VMEM) ----
    flat = flat_ref[...].astype(jnp.bfloat16)                      # (B, 2048)
    h = jnp.dot(flat, wf1_ref[...], preferred_element_type=jnp.float32) + bf1_ref[...]
    h = jnp.maximum(h, 0.0)
    o_ref[...] = (jnp.dot(h.astype(jnp.bfloat16), wf2_ref[...],
                          preferred_element_type=jnp.float32) + bf2_ref[...])


def eurosat_forward_call(x1p, pp):
    B = x1p.shape[0]
    kern = functools.partial(eurosat_fwd_kernel, B=B)
    operands = [x1p, pp["w1"], pp["w2"],
                pp["fold1"], pp["bc1"], pp["gb1"],
                pp["fold2"], pp["bc2"], pp["gb2"],
                pp["wf1"], pp["bf1"], pp["wf2"], pp["bf2"]]
    return pl.pallas_call(
        kern,
        out_shape=jax.ShapeDtypeStruct((B, 10), jnp.float32),
        grid=(1,),
        in_specs=[_full_spec(op.shape) for op in operands],
        out_specs=_full_spec((B, 10)),
        scratch_shapes=[
            pltpu.VMEM((B, H2 + 2, LH), jnp.float32),   # conv2 padded input
            pltpu.VMEM((B, H3 * LH), jnp.float32),      # flattened fc1 input
        ],
        compiler_params=pltpu.CompilerParams(dimension_semantics=("arbitrary",)),
    )(*operands)


def eurosat_cnn_forward(x_nchw, pp):
    """Whole model: only XLA glue is one NCHW->fused-NHWC transform + pad + bf16 cast."""
    B = x_nchw.shape[0]
    x = jnp.transpose(x_nchw, (0, 2, 3, 1)).reshape(B, H1, W1 * 3)   # (B, 64, 192)
    x = jnp.pad(x, ((0, 0), (1, 1), (0, K1 - W1 * 3))).astype(jnp.bfloat16)  # (B, 66, 256)
    return eurosat_forward_call(x, pp)


# ---------------------------------------------------------------------------
# Parameters: PyTorch-layout init + one-time packing for the kernel
# ---------------------------------------------------------------------------
def init_params(key):
    """PyTorch-layout parameters (Conv2d: (Cout,Cin,kh,kw); Linear: (out,in))."""
    ks = jax.random.split(key, 8)
    s = 0.05
    return {
        "conv1_w": jax.random.normal(ks[0], (4, 3, 3, 3), jnp.float32) * s,
        "conv1_b": jax.random.normal(ks[1], (4,), jnp.float32) * s,
        "bn1_g": jnp.ones((4,), jnp.float32), "bn1_b": jnp.zeros((4,), jnp.float32),
        "conv2_w": jax.random.normal(ks[2], (8, 4, 3, 3), jnp.float32) * s,
        "conv2_b": jax.random.normal(ks[3], (8,), jnp.float32) * s,
        "bn2_g": jnp.ones((8,), jnp.float32), "bn2_b": jnp.zeros((8,), jnp.float32),
        "fc1_w": jax.random.normal(ks[4], (32, 8 * 16 * 16), jnp.float32) * s,
        "fc1_b": jax.random.normal(ks[5], (32,), jnp.float32) * s,
        "fc2_w": jax.random.normal(ks[6], (10, 32), jnp.float32) * s,
        "fc2_b": jax.random.normal(ks[7], (10,), jnp.float32) * s,
    }


def _conv_taps(w_oihw, win, kpad):
    """Torch (Cout,Cin,3,3) -> (3, kpad, 2*Lhalf) bf16 banded weights.

    Per kernel row dh, columns are [even output cols | odd output cols]; width taps and
    the width zero-padding are folded in, so the conv is 3 matmuls over h-shifted rows.
    """
    w = np.asarray(w_oihw, np.float32)
    cout, cin = w.shape[0], w.shape[1]
    wh = win // 2
    lhalf = wh * cout
    m = np.zeros((3, kpad, 2 * lhalf), np.float32)
    for dh in range(3):
        for dw in range(3):
            blk = w[:, :, dh, dw].T                       # (Cin, Cout)
            for we in range(wh):                          # even output col 2*we
                wi = 2 * we + dw - 1
                if 0 <= wi < win:
                    m[dh, wi * cin:(wi + 1) * cin, we * cout:(we + 1) * cout] = blk
            for wo in range(wh):                          # odd output col 2*wo + 1
                wi = 2 * wo + dw
                if 0 <= wi < win:
                    m[dh, wi * cin:(wi + 1) * cin,
                      lhalf + wo * cout:lhalf + (wo + 1) * cout] = blk
    return jnp.asarray(m, jnp.bfloat16)


def _fold_bcast(L, C):
    """Selector matmuls: fold (L,C) sums fused lanes to channels; bcast = fold.T."""
    f = np.tile(np.eye(C, dtype=np.float32), (L // C, 1))
    return jnp.asarray(f), jnp.asarray(f.T)


def prepare_params(p):
    """One-time weight packing; all layout work happens here at zero runtime cost."""
    fold1, bc1 = _fold_bcast(2 * LH, C1)
    fold2, bc2 = _fold_bcast(2 * LH, C2)
    # fc1: permute columns from PyTorch's (c,h,w) flatten order to the kernel's (h,w,c).
    hh, ww, cc = np.meshgrid(np.arange(H3), np.arange(H3), np.arange(C2), indexing="ij")
    perm = (cc * (H3 * H3) + hh * H3 + ww).reshape(-1)
    wf1 = jnp.transpose(p["fc1_w"][:, perm]).astype(jnp.bfloat16)        # (2048, 32)
    return {
        "w1": _conv_taps(p["conv1_w"], W1, K1),
        "gb1": jnp.stack([p["bn1_g"], p["bn1_b"]]), "fold1": fold1, "bc1": bc1,
        "w2": _conv_taps(p["conv2_w"], W2, K2),
        "gb2": jnp.stack([p["bn2_g"], p["bn2_b"]]), "fold2": fold2, "bc2": bc2,
        "wf1": wf1, "bf1": p["fc1_b"].reshape(1, -1),
        "wf2": jnp.transpose(p["fc2_w"]).astype(jnp.bfloat16),
        "bf2": p["fc2_b"].reshape(1, -1),
    }


# ---------------------------------------------------------------------------
# Plain-JAX f32 reference of the PyTorch module (validation only)
# ---------------------------------------------------------------------------
def reference_forward(x_nchw, p):
    def conv(x, w, b):
        y = jax.lax.conv_general_dilated(x, w, (1, 1), ((1, 1), (1, 1)),
                                         dimension_numbers=("NCHW", "OIHW", "NCHW"))
        return y + b.reshape(1, -1, 1, 1)

    def bn(x, g, b):
        m = jnp.mean(x, axis=(0, 2, 3), keepdims=True)
        v = jnp.mean((x - m) ** 2, axis=(0, 2, 3), keepdims=True)
        return (x - m) * jax.lax.rsqrt(v + EPS) * g.reshape(1, -1, 1, 1) + b.reshape(1, -1, 1, 1)

    def pool(x):
        return jax.lax.reduce_window(x, -jnp.inf, jax.lax.max,
                                     (1, 1, 2, 2), (1, 1, 2, 2), "VALID")

    y = pool(jnp.maximum(bn(conv(x_nchw, p["conv1_w"], p["conv1_b"]),
                            p["bn1_g"], p["bn1_b"]), 0.0))
    y = pool(jnp.maximum(bn(conv(y, p["conv2_w"], p["conv2_b"]),
                            p["bn2_g"], p["bn2_b"]), 0.0))
    flat = y.reshape(x_nchw.shape[0], -1)
    h = jnp.maximum(flat @ p["fc1_w"].T + p["fc1_b"], 0.0)
    return h @ p["fc2_w"].T + p["fc2_b"]


if __name__ == "__main__":
    key = jax.random.PRNGKey(0)
    kx, kp = jax.random.split(key)
    # EuroSAT-style input: 3 channels, 64x64 (two 2x maxpools -> 8*16*16 for fc1).
    x = jax.random.normal(kx, (2, 3, 64, 64), jnp.float32)
    torch_params = init_params(kp)
    packed = prepare_params(torch_params)

    out = jax.block_until_ready(jax.jit(eurosat_cnn_forward)(x, packed))
    assert out.shape == (2, 10) and out.dtype == jnp.float32

    ref = jax.block_until_ready(jax.jit(reference_forward)(x, torch_params))
    err = float(jnp.max(jnp.abs(out - ref)))
    assert err < 0.1, f"kernel/reference mismatch: max abs err = {err}"
    print("KERNEL_OK")
</pallas_src>

<mosaic_0001>
module attributes {stable_mosaic.version = 11 : i64} {
  func.func @eurosat_fwd_kernel(%arg0: i32, %arg1: memref<2x66x256xbf16, #tpu.memory_space<vmem>>, %arg2: memref<3x256x256xbf16, #tpu.memory_space<vmem>>, %arg3: memref<3x128x256xbf16, #tpu.memory_space<vmem>>, %arg4: memref<256x4xf32, #tpu.memory_space<vmem>>, %arg5: memref<4x256xf32, #tpu.memory_space<vmem>>, %arg6: memref<2x4xf32, #tpu.memory_space<vmem>>, %arg7: memref<256x8xf32, #tpu.memory_space<vmem>>, %arg8: memref<8x256xf32, #tpu.memory_space<vmem>>, %arg9: memref<2x8xf32, #tpu.memory_space<vmem>>, %arg10: memref<2048x32xbf16, #tpu.memory_space<vmem>>, %arg11: memref<1x32xf32, #tpu.memory_space<vmem>>, %arg12: memref<32x10xbf16, #tpu.memory_space<vmem>>, %arg13: memref<1x10xf32, #tpu.memory_space<vmem>>, %arg14: memref<2x10xf32, #tpu.memory_space<vmem>>, %arg15: memref<2x34x128xf32, #tpu.memory_space<vmem>>, %arg16: memref<2x2048xf32, #tpu.memory_space<vmem>>) attributes {dimension_semantics = [#tpu.dimension_semantics<arbitrary>], iteration_bounds = array<i64: 1>, scalar_prefetch = 0 : i64, scratch_operands = 2 : i64, tpu.core_type = #tpu.core_type<tc>, window_params = [{pipeline_mode = #tpu.pipeline_mode<synchronous>, transform_indices = @transform_0, window_bounds = array<i64: 2, 66, 256>}, {pipeline_mode = #tpu.pipeline_mode<synchronous>, transform_indices = @transform_1, window_bounds = array<i64: 3, 256, 256>}, {pipeline_mode = #tpu.pipeline_mode<synchronous>, transform_indices = @transform_2, window_bounds = array<i64: 3, 128, 256>}, {pipeline_mode = #tpu.pipeline_mode<synchronous>, transform_indices = @transform_3, window_bounds = array<i64: 256, 4>}, {pipeline_mode = #tpu.pipeline_mode<synchronous>, transform_indices = @transform_4, window_bounds = array<i64: 4, 256>}, {pipeline_mode = #tpu.pipeline_mode<synchronous>, transform_indices = @transform_5, window_bounds = array<i64: 2, 4>}, {pipeline_mode = #tpu.pipeline_mode<synchronous>, transform_indices = @transform_6, window_bounds = array<i64: 256, 8>}, {pipeline_mode = #tpu.pipeline_mode<synchronous>, transform_indices = @transform_7, window_bounds = array<i64: 8, 256>}, {pipeline_mode = #tpu.pipeline_mode<synchronous>, transform_indices = @transform_8, window_bounds = array<i64: 2, 8>}, {pipeline_mode = #tpu.pipeline_mode<synchronous>, transform_indices = @transform_9, window_bounds = array<i64: 2048, 32>}, {pipeline_mode = #tpu.pipeline_mode<synchronous>, transform_indices = @transform_10, window_bounds = array<i64: 1, 32>}, {pipeline_mode = #tpu.pipeline_mode<synchronous>, transform_indices = @transform_11, window_bounds = array<i64: 32, 10>}, {pipeline_mode = #tpu.pipeline_mode<synchronous>, transform_indices = @transform_12, window_bounds = array<i64: 1, 10>}, {pipeline_mode = #tpu.pipeline_mode<synchronous>, transform_indices = @transform_13, window_bounds = array<i64: 2, 10>}]} {
    %c0 = arith.constant 0 : index
    %c0_0 = arith.constant 0 : index
    %c0_1 = arith.constant 0 : index
    %0 = vector.load %arg1[%c0, %c0_0, %c0_1] : memref<2x66x256xbf16, #tpu.memory_space<vmem>>, vector<2x66x256xbf16>
    %1 = vector.extract_strided_slice %0 {offsets = [0, 0, 0], sizes = [2, 64, 256], strides = [1, 1, 1]} : vector<2x66x256xbf16> to vector<2x64x256xbf16>
    %2 = vector.shape_cast %1 : vector<2x64x256xbf16> to vector<128x256xbf16>
    %c0_2 = arith.constant 0 : index
    %c0_3 = arith.constant 0 : index
    %c0_4 = arith.constant 0 : index
    %3 = vector.load %arg2[%c0_2, %c0_3, %c0_4] : memref<3x256x256xbf16, #tpu.memory_space<vmem>>, vector<1x256x256xbf16>
    %4 = vector.shape_cast %3 : vector<1x256x256xbf16> to vector<256x256xbf16>
    %cst = arith.constant dense<0.000000e+00> : vector<128x256xf32>
    %5 = tpu.matmul %2, %4, %cst {dimension_numbers = #tpu.dot_dimension_numbers<[1], [0], [0], [1], [0, 0, 1, 1], [], []>} : vector<128x256xbf16>, vector<256x256xbf16>, vector<128x256xf32> -> vector<128x256xf32>
    %6 = vector.extract_strided_slice %0 {offsets = [0, 1, 0], sizes = [2, 64, 256], strides = [1, 1, 1]} : vector<2x66x256xbf16> to vector<2x64x256xbf16>
    %7 = vector.shape_cast %6 : vector<2x64x256xbf16> to vector<128x256xbf16>
    %c1 = arith.constant 1 : index
    %c0_5 = arith.constant 0 : index
    %c0_6 = arith.constant 0 : index
    %8 = vector.load %arg2[%c1, %c0_5, %c0_6] : memref<3x256x256xbf16, #tpu.memory_space<vmem>>, vector<1x256x256xbf16>
    %9 = vector.shape_cast %8 : vector<1x256x256xbf16> to vector<256x256xbf16>
    %cst_7 = arith.constant dense<0.000000e+00> : vector<128x256xf32>
    %10 = tpu.matmul %7, %9, %cst_7 {dimension_numbers = #tpu.dot_dimension_numbers<[1], [0], [0], [1], [0, 0, 1, 1], [], []>} : vector<128x256xbf16>, vector<256x256xbf16>, vector<128x256xf32> -> vector<128x256xf32>
    %11 = arith.addf %5, %10 : vector<128x256xf32>
    %12 = vector.extract_strided_slice %0 {offsets = [0, 2, 0], sizes = [2, 64, 256], strides = [1, 1, 1]} : vector<2x66x256xbf16> to vector<2x64x256xbf16>
    %13 = vector.shape_cast %12 : vector<2x64x256xbf16> to vector<128x256xbf16>
    %c2 = arith.constant 2 : index
    %c0_8 = arith.constant 0 : index
    %c0_9 = arith.constant 0 : index
    %14 = vector.load %arg2[%c2, %c0_8, %c0_9] : memref<3x256x256xbf16, #tpu.memory_space<vmem>>, vector<1x256x256xbf16>
    %15 = vector.shape_cast %14 : vector<1x256x256xbf16> to vector<256x256xbf16>
    %cst_10 = arith.constant dense<0.000000e+00> : vector<128x256xf32>
    %16 = tpu.matmul %13, %15, %cst_10 {dimension_numbers = #tpu.dot_dimension_numbers<[1], [0], [0], [1], [0, 0, 1, 1], [], []>} : vector<128x256xbf16>, vector<256x256xbf16>, vector<128x256xf32> -> vector<128x256xf32>
    %17 = arith.addf %11, %16 : vector<128x256xf32>
    %cst_11 = arith.constant dense<0.000000e+00> : vector<256xf32>
    %18 = vector.multi_reduction <add>, %17, %cst_11 [0] : vector<128x256xf32> to vector<256xf32>
    %19 = vector.shape_cast %18 : vector<256xf32> to vector<1x256xf32>
    %20 = arith.mulf %17, %17 : vector<128x256xf32>
    %cst_12 = arith.constant dense<0.000000e+00> : vector<256xf32>
    %21 = vector.multi_reduction <add>, %20, %cst_12 [0] : vector<128x256xf32> to vector<256xf32>
    %22 = vector.shape_cast %21 : vector<256xf32> to vector<1x256xf32>
    %23 = tpu.concatenate %19, %22 in 0 : vector<1x256xf32>, vector<1x256xf32> -> vector<2x256xf32>
    %c0_13 = arith.constant 0 : index
    %c0_14 = arith.constant 0 : index
    %24 = vector.load %arg4[%c0_13, %c0_14] : memref<256x4xf32, #tpu.memory_space<vmem>>, vector<256x4xf32>
    %cst_15 = arith.constant dense<0.000000e+00> : vector<2x4xf32>
    %25 = tpu.matmul %23, %24, %cst_15 {dimension_numbers = #tpu.dot_dimension_numbers<[1], [0], [0], [1], [0, 0, 1, 1], [], []>} : vector<2x256xf32>, vector<256x4xf32>, vector<2x4xf32> -> vector<2x4xf32>
    %26 = vector.extract_strided_slice %25 {offsets = [0, 0], sizes = [1, 4], strides = [1, 1]} : vector<2x4xf32> to vector<1x4xf32>
    %cst_16 = arith.constant 8.192000e+03 : f32
    %27 = vector.broadcast %cst_16 : f32 to vector<1x4xf32>
    %28 = arith.divf %26, %27 : vector<1x4xf32>
    %29 = vector.extract_strided_slice %25 {offsets = [1, 0], sizes = [1, 4], strides = [1, 1]} : vector<2x4xf32> to vector<1x4xf32>
    %cst_17 = arith.constant 8.192000e+03 : f32
    %30 = vector.broadcast %cst_17 : f32 to vector<1x4xf32>
    %31 = arith.divf %29, %30 : vector<1x4xf32>
    %32 = arith.mulf %28, %28 : vector<1x4xf32>
    %33 = arith.subf %31, %32 : vector<1x4xf32>
    %c0_18 = arith.constant 0 : index
    %c0_19 = arith.constant 0 : index
    %34 = vector.load %arg6[%c0_18, %c0_19] : memref<2x4xf32, #tpu.memory_space<vmem>>, vector<2x4xf32>
    %35 = vector.extract_strided_slice %34 {offsets = [0, 0], sizes = [1, 4], strides = [1, 1]} : vector<2x4xf32> to vector<1x4xf32>
    %cst_20 = arith.constant 9.99999974E-6 : f32
    %36 = vector.broadcast %cst_20 : f32 to vector<1x4xf32>
    %37 = arith.addf %33, %36 : vector<1x4xf32>
    %38 = math.rsqrt %37 : vector<1x4xf32>
    %39 = arith.mulf %35, %38 : vector<1x4xf32>
    %40 = vector.extract_strided_slice %34 {offsets = [1, 0], sizes = [1, 4], strides = [1, 1]} : vector<2x4xf32> to vector<1x4xf32>
    %41 = arith.mulf %28, %39 : vector<1x4xf32>
    %42 = arith.subf %40, %41 : vector<1x4xf32>
    %43 = tpu.concatenate %39, %42 in 0 : vector<1x4xf32>, vector<1x4xf32> -> vector<2x4xf32>
    %c0_21 = arith.constant 0 : index
    %c0_22 = arith.constant 0 : index
    %44 = vector.load %arg5[%c0_21, %c0_22] : memref<4x256xf32, #tpu.memory_space<vmem>>, vector<4x256xf32>
    %cst_23 = arith.constant dense<0.000000e+00> : vector<2x256xf32>
    %45 = tpu.matmul %43, %44, %cst_23 {dimension_numbers = #tpu.dot_dimension_numbers<[1], [0], [0], [1], [0, 0, 1, 1], [], []>} : vector<2x4xf32>, vector<4x256xf32>, vector<2x256xf32> -> vector<2x256xf32>
    %46 = vector.extract_strided_slice %45 {offsets = [0, 0], sizes = [1, 256], strides = [1, 1]} : vector<2x256xf32> to vector<1x256xf32>
    %47 = vector.broadcast %46 : vector<1x256xf32> to vector<128x256xf32>
    %48 = arith.mulf %17, %47 : vector<128x256xf32>
    %49 = vector.extract_strided_slice %45 {offsets = [1, 0], sizes = [1, 256], strides = [1, 1]} : vector<2x256xf32> to vector<1x256xf32>
    %50 = vector.broadcast %49 : vector<1x256xf32> to vector<128x256xf32>
    %51 = arith.addf %48, %50 : vector<128x256xf32>
    %cst_24 = arith.constant 0.000000e+00 : f32
    %52 = vector.broadcast %cst_24 : f32 to vector<128x256xf32>
    %53 = arith.maximumf %51, %52 : vector<128x256xf32>
    %54 = vector.extract_strided_slice %53 {offsets = [0, 0], sizes = [128, 128], strides = [1, 1]} : vector<128x256xf32> to vector<128x128xf32>
    %55 = vector.extract_strided_slice %53 {offsets = [0, 128], sizes = [128, 128], strides = [1, 1]} : vector<128x256xf32> to vector<128x128xf32>
    %56 = arith.maximumf %54, %55 : vector<128x128xf32>
    %57 = vector.shape_cast %56 : vector<128x128xf32> to vector<64x2x128xf32>
    %cst_25 = arith.constant dense<0xFF800000> : vector<64x128xf32>
    %58 = vector.multi_reduction <maximumf>, %57, %cst_25 [1] : vector<64x2x128xf32> to vector<64x128xf32>
    %cst_26 = arith.constant 0.000000e+00 : f32
    %59 = vector.broadcast %cst_26 : f32 to vector<2x1x128xf32>
    %c0_27 = arith.constant 0 : index
    %c0_28 = arith.constant 0 : index
    %c0_29 = arith.constant 0 : index
    %60 = vector.load %arg15[%c0_27, %c0_28, %c0_29] : memref<2x34x128xf32, #tpu.memory_space<vmem>>, vector<2x1x128xf32>
    tpu.vector_store %arg15[%c0_27, %c0_28, %c0_29], %59 {strides = array<i32>} : memref<2x34x128xf32, #tpu.memory_space<vmem>>, vector<2x1x128xf32>,
    %c0_30 = arith.constant 0 : index
    %c33 = arith.constant 33 : index
    %c0_31 = arith.constant 0 : index
    %61 = vector.load %arg15[%c0_30, %c33, %c0_31] : memref<2x34x128xf32, #tpu.memory_space<vmem>>, vector<2x1x128xf32>
    tpu.vector_store %arg15[%c0_30, %c33, %c0_31], %59 {strides = array<i32>} : memref<2x34x128xf32, #tpu.memory_space<vmem>>, vector<2x1x128xf32>,
    %62 = vector.shape_cast %58 : vector<64x128xf32> to vector<2x32x128xf32>
    %c0_32 = arith.constant 0 : index
    %c1_33 = arith.constant 1 : index
    %c0_34 = arith.constant 0 : index
    %63 = vector.load %arg15[%c0_32, %c1_33, %c0_34] : memref<2x34x128xf32, #tpu.memory_space<vmem>>, vector<2x32x128xf32>
    tpu.vector_store %arg15[%c0_32, %c1_33, %c0_34], %62 {strides = array<i32>} : memref<2x34x128xf32, #tpu.memory_space<vmem>>, vector<2x32x128xf32>,
    %c0_35 = arith.constant 0 : index
    %c0_36 = arith.constant 0 : index
    %c0_37 = arith.constant 0 : index
    %64 = vector.load %arg15[%c0_35, %c0_36, %c0_37] : memref<2x34x128xf32, #tpu.memory_space<vmem>>, vector<2x34x128xf32>
    %65 = vector.extract_strided_slice %64 {offsets = [0, 0, 0], sizes = [2, 32, 128], strides = [1, 1, 1]} : vector<2x34x128xf32> to vector<2x32x128xf32>
    %66 = vector.shape_cast %65 : vector<2x32x128xf32> to vector<64x128xf32>
    %67 = arith.truncf %66 : vector<64x128xf32> to vector<64x128xbf16>
    %c0_38 = arith.constant 0 : index
    %c0_39 = arith.constant 0 : index
    %c0_40 = arith.constant 0 : index
    %68 = vector.load %arg3[%c0_38, %c0_39, %c0_40] : memref<3x128x256xbf16, #tpu.memory_space<vmem>>, vector<1x128x256xbf16>
    %69 = vector.shape_cast %68 : vector<1x128x256xbf16> to vector<128x256xbf16>
    %cst_41 = arith.constant dense<0.000000e+00> : vector<64x256xf32>
    %70 = tpu.matmul %67, %69, %cst_41 {dimension_numbers = #tpu.dot_dimension_numbers<[1], [0], [0], [1], [0, 0, 1, 1], [], []>} : vector<64x128xbf16>, vector<128x256xbf16>, vector<64x256xf32> -> vector<64x256xf32>
    %71 = vector.extract_strided_slice %64 {offsets = [0, 1, 0], sizes = [2, 32, 128], strides = [1, 1, 1]} : vector<2x34x128xf32> to vector<2x32x128xf32>
    %72 = vector.shape_cast %71 : vector<2x32x128xf32> to vector<64x128xf32>
    %73 = arith.truncf %72 : vector<64x128xf32> to vector<64x128xbf16>
    %c1_42 = arith.constant 1 : index
    %c0_43 = arith.constant 0 : index
    %c0_44 = arith.constant 0 : index
    %74 = vector.load %arg3[%c1_42, %c0_43, %c0_44] : memref<3x128x256xbf16, #tpu.memory_space<vmem>>, vector<1x128x256xbf16>
    %75 = vector.shape_cast %74 : vector<1x128x256xbf16> to vector<128x256xbf16>
    %cst_45 = arith.constant dense<0.000000e+00> : vector<64x256xf32>
    %76 = tpu.matmul %73, %75, %cst_45 {dimension_numbers = #tpu.dot_dimension_numbers<[1], [0], [0], [1], [0, 0, 1, 1], [], []>} : vector<64x128xbf16>, vector<128x256xbf16>, vector<64x256xf32> -> vector<64x256xf32>
    %77 = arith.addf %70, %76 : vector<64x256xf32>
    %78 = vector.extract_strided_slice %64 {offsets = [0, 2, 0], sizes = [2, 32, 128], strides = [1, 1, 1]} : vector<2x34x128xf32> to vector<2x32x128xf32>
    %79 = vector.shape_cast %78 : vector<2x32x128xf32> to vector<64x128xf32>
    %80 = arith.truncf %79 : vector<64x128xf32> to vector<64x128xbf16>
    %c2_46 = arith.constant 2 : index
    %c0_47 = arith.constant 0 : index
    %c0_48 = arith.constant 0 : index
    %81 = vector.load %arg3[%c2_46, %c0_47, %c0_48] : memref<3x128x256xbf16, #tpu.memory_space<vmem>>, vector<1x128x256xbf16>
    %82 = vector.shape_cast %81 : vector<1x128x256xbf16> to vector<128x256xbf16>
    %cst_49 = arith.constant dense<0.000000e+00> : vector<64x256xf32>
    %83 = tpu.matmul %80, %82, %cst_49 {dimension_numbers = #tpu.dot_dimension_numbers<[1], [0], [0], [1], [0, 0, 1, 1], [], []>} : vector<64x128xbf16>, vector<128x256xbf16>, vector<64x256xf32> -> vector<64x256xf32>
    %84 = arith.addf %77, %83 : vector<64x256xf32>
    %cst_50 = arith.constant dense<0.000000e+00> : vector<256xf32>
    %85 = vector.multi_reduction <add>, %84, %cst_50 [0] : vector<64x256xf32> to vector<256xf32>
    %86 = vector.shape_cast %85 : vector<256xf32> to vector<1x256xf32>
    %87 = arith.mulf %84, %84 : vector<64x256xf32>
    %cst_51 = arith.constant dense<0.000000e+00> : vector<256xf32>
    %88 = vector.multi_reduction <add>, %87, %cst_51 [0] : vector<64x256xf32> to vector<256xf32>
    %89 = vector.shape_cast %88 : vector<256xf32> to vector<1x256xf32>
    %90 = tpu.concatenate %86, %89 in 0 : vector<1x256xf32>, vector<1x256xf32> -> vector<2x256xf32>
    %c0_52 = arith.constant 0 : index
    %c0_53 = arith.constant 0 : index
    %91 = vector.load %arg7[%c0_52, %c0_53] : memref<256x8xf32, #tpu.memory_space<vmem>>, vector<256x8xf32>
    %cst_54 = arith.constant dense<0.000000e+00> : vector<2x8xf32>
    %92 = tpu.matmul %90, %91, %cst_54 {dimension_numbers = #tpu.dot_dimension_numbers<[1], [0], [0], [1], [0, 0, 1, 1], [], []>} : vector<2x256xf32>, vector<256x8xf32>, vector<2x8xf32> -> vector<2x8xf32>
    %93 = vector.extract_strided_slice %92 {offsets = [0, 0], sizes = [1, 8], strides = [1, 1]} : vector<2x8xf32> to vector<1x8xf32>
    %cst_55 = arith.constant 2.048000e+03 : f32
    %94 = vector.broadcast %cst_55 : f32 to vector<1x8xf32>
    %95 = arith.divf %93, %94 : vector<1x8xf32>
    %96 = vector.extract_strided_slice %92 {offsets = [1, 0], sizes = [1, 8], strides = [1, 1]} : vector<2x8xf32> to vector<1x8xf32>
    %cst_56 = arith.constant 2.048000e+03 : f32
    %97 = vector.broadcast %cst_56 : f32 to vector<1x8xf32>
    %98 = arith.divf %96, %97 : vector<1x8xf32>
    %99 = arith.mulf %95, %95 : vector<1x8xf32>
    %100 = arith.subf %98, %99 : vector<1x8xf32>
    %c0_57 = arith.constant 0 : index
    %c0_58 = arith.constant 0 : index
    %101 = vector.load %arg9[%c0_57, %c0_58] : memref<2x8xf32, #tpu.memory_space<vmem>>, vector<2x8xf32>
    %102 = vector.extract_strided_slice %101 {offsets = [0, 0], sizes = [1, 8], strides = [1, 1]} : vector<2x8xf32> to vector<1x8xf32>
    %cst_59 = arith.constant 9.99999974E-6 : f32
    %103 = vector.broadcast %cst_59 : f32 to vector<1x8xf32>
    %104 = arith.addf %100, %103 : vector<1x8xf32>
    %105 = math.rsqrt %104 : vector<1x8xf32>
    %106 = arith.mulf %102, %105 : vector<1x8xf32>
    %107 = vector.extract_strided_slice %101 {offsets = [1, 0], sizes = [1, 8], strides = [1, 1]} : vector<2x8xf32> to vector<1x8xf32>
    %108 = arith.mulf %95, %106 : vector<1x8xf32>
    %109 = arith.subf %107, %108 : vector<1x8xf32>
    %110 = tpu.concatenate %106, %109 in 0 : vector<1x8xf32>, vector<1x8xf32> -> vector<2x8xf32>
    %c0_60 = arith.constant 0 : index
    %c0_61 = arith.constant 0 : index
    %111 = vector.load %arg8[%c0_60, %c0_61] : memref<8x256xf32, #tpu.memory_space<vmem>>, vector<8x256xf32>
    %cst_62 = arith.constant dense<0.000000e+00> : vector<2x256xf32>
    %112 = tpu.matmul %110, %111, %cst_62 {dimension_numbers = #tpu.dot_dimension_numbers<[1], [0], [0], [1], [0, 0, 1, 1], [], []>} : vector<2x8xf32>, vector<8x256xf32>, vector<2x256xf32> -> vector<2x256xf32>
    %113 = vector.extract_strided_slice %112 {offsets = [0, 0], sizes = [1, 256], strides = [1, 1]} : vector<2x256xf32> to vector<1x256xf32>
    %114 = vector.broadcast %113 : vector<1x256xf32> to vector<64x256xf32>
    %115 = arith.mulf %84, %114 : vector<64x256xf32>
    %116 = vector.extract_strided_slice %112 {offsets = [1, 0], sizes = [1, 256], strides = [1, 1]} : vector<2x256xf32> to vector<1x256xf32>
    %117 = vector.broadcast %116 : vector<1x256xf32> to vector<64x256xf32>
    %118 = arith.addf %115, %117 : vector<64x256xf32>
    %cst_63 = arith.constant 0.000000e+00 : f32
    %119 = vector.broadcast %cst_63 : f32 to vector<64x256xf32>
    %120 = arith.maximumf %118, %119 : vector<64x256xf32>
    %121 = vector.extract_strided_slice %120 {offsets = [0, 0], sizes = [64, 128], strides = [1, 1]} : vector<64x256xf32> to vector<64x128xf32>
    %122 = vector.extract_strided_slice %120 {offsets = [0, 128], sizes = [64, 128], strides = [1, 1]} : vector<64x256xf32> to vector<64x128xf32>
    %123 = arith.maximumf %121, %122 : vector<64x128xf32>
    %124 = vector.shape_cast %123 : vector<64x128xf32> to vector<32x2x128xf32>
    %cst_64 = arith.constant dense<0xFF800000> : vector<32x128xf32>
    %125 = vector.multi_reduction <maximumf>, %124, %cst_64 [1] : vector<32x2x128xf32> to vector<32x128xf32>
    %126 = vector.extract_strided_slice %125 {offsets = [0, 0], sizes = [1, 128], strides = [1, 1]} : vector<32x128xf32> to vector<1x128xf32>
    %c0_65 = arith.constant 0 : index
    %c0_66 = arith.constant 0 : index
    %127 = vector.load %arg16[%c0_65, %c0_66] : memref<2x2048xf32, #tpu.memory_space<vmem>>, vector<1x128xf32>
    tpu.vector_store %arg16[%c0_65, %c0_66], %126 {strides = array<i32>} : memref<2x2048xf32, #tpu.memory_space<vmem>>, vector<1x128xf32>,
    %128 = vector.extract_strided_slice %125 {offsets = [1, 0], sizes = [1, 128], strides = [1, 1]} : vector<32x128xf32> to vector<1x128xf32>
    %c0_67 = arith.constant 0 : index
    %c128 = arith.constant 128 : index
    %129 = vector.load %arg16[%c0_67, %c128] : memref<2x2048xf32, #tpu.memory_space<vmem>>, vector<1x128xf32>
    tpu.vector_store %arg16[%c0_67, %c128], %128 {strides = array<i32>} : memref<2x2048xf32, #tpu.memory_space<vmem>>, vector<1x128xf32>,
    %130 = vector.extract_strided_slice %125 {offsets = [2, 0], sizes = [1, 128], strides = [1, 1]} : vector<32x128xf32> to vector<1x128xf32>
    %c0_68 = arith.constant 0 : index
    %c256 = arith.constant 256 : index
    %131 = vector.load %arg16[%c0_68, %c256] : memref<2x2048xf32, #tpu.memory_space<vmem>>, vector<1x128xf32>
    tpu.vector_store %arg16[%c0_68, %c256], %130 {strides = array<i32>} : memref<2x2048xf32, #tpu.memory_space<vmem>>, vector<1x128xf32>,
    %132 = vector.extract_strided_slice %125 {offsets = [3, 0], sizes = [1, 128], strides = [1, 1]} : vector<32x128xf32> to vector<1x128xf32>
    %c0_69 = arith.constant 0 : index
    %c384 = arith.constant 384 : index
    %133 = vector.load %arg16[%c0_69, %c384] : memref<2x2048xf32, #tpu.memory_space<vmem>>, vector<1x128xf32>
    tpu.vector_store %arg16[%c0_69, %c384], %132 {strides = array<i32>} : memref<2x2048xf32, #tpu.memory_space<vmem>>, vector<1x128xf32>,
    %134 = vector.extract_strided_slice %125 {offsets = [4, 0], sizes = [1, 128], strides = [1, 1]} : vector<32x128xf32> to vector<1x128xf32>
    %c0_70 = arith.constant 0 : index
    %c512 = arith.constant 512 : index
    %135 = vector.load %arg16[%c0_70, %c512] : memref<2x2048xf32, #tpu.memory_space<vmem>>, vector<1x128xf32>
    tpu.vector_store %arg16[%c0_70, %c512], %134 {strides = array<i32>} : memref<2x2048xf32, #tpu.memory_space<vmem>>, vector<1x128xf32>,
    %136 = vector.extract_strided_slice %125 {offsets = [5, 0], sizes = [1, 128], strides = [1, 1]} : vector<32x128xf32> to vector<1x128xf32>
    %c0_71 = arith.constant 0 : index
    %c640 = arith.constant 640 : index
    %137 = vector.load %arg16[%c0_71, %c640] : memref<2x2048xf32, #tpu.memory_space<vmem>>, vector<1x128xf32>
    tpu.vector_store %arg16[%c0_71, %c640], %136 {strides = array<i32>} : memref<2x2048xf32, #tpu.memory_space<vmem>>, vector<1x128xf32>,
    %138 = vector.extract_strided_slice %125 {offsets = [6, 0], sizes = [1, 128], strides = [1, 1]} : vector<32x128xf32> to vector<1x128xf32>
    %c0_72 = arith.constant 0 : index
    %c768 = arith.constant 768 : index
    %139 = vector.load %arg16[%c0_72, %c768] : memref<2x2048xf32, #tpu.memory_space<vmem>>, vector<1x128xf32>
    tpu.vector_store %arg16[%c0_72, %c768], %138 {strides = array<i32>} : memref<2x2048xf32, #tpu.memory_space<vmem>>, vector<1x128xf32>,
    %140 = vector.extract_strided_slice %125 {offsets = [7, 0], sizes = [1, 128], strides = [1, 1]} : vector<32x128xf32> to vector<1x128xf32>
    %c0_73 = arith.constant 0 : index
    %c896 = arith.constant 896 : index
    %141 = vector.load %arg16[%c0_73, %c896] : memref<2x2048xf32, #tpu.memory_space<vmem>>, vector<1x128xf32>
    tpu.vector_store %arg16[%c0_73, %c896], %140 {strides = array<i32>} : memref<2x2048xf32, #tpu.memory_space<vmem>>, vector<1x128xf32>,
    %142 = vector.extract_strided_slice %125 {offsets = [8, 0], sizes = [1, 128], strides = [1, 1]} : vector<32x128xf32> to vector<1x128xf32>
    %c0_74 = arith.constant 0 : index
    %c1024 = arith.constant 1024 : index
    %143 = vector.load %arg16[%c0_74, %c1024] : memref<2x2048xf32, #tpu.memory_space<vmem>>, vector<1x128xf32>
    tpu.vector_store %arg16[%c0_74, %c1024], %142 {strides = array<i32>} : memref<2x2048xf32, #tpu.memory_space<vmem>>, vector<1x128xf32>,
    %144 = vector.extract_strided_slice %125 {offsets = [9, 0], sizes = [1, 128], strides = [1, 1]} : vector<32x128xf32> to vector<1x128xf32>
    %c0_75 = arith.constant 0 : index
    %c1152 = arith.constant 1152 : index
    %145 = vector.load %arg16[%c0_75, %c1152] : memref<2x2048xf32, #tpu.memory_space<vmem>>, vector<1x128xf32>
    tpu.vector_store %arg16[%c0_75, %c1152], %144 {strides = array<i32>} : memref<2x2048xf32, #tpu.memory_space<vmem>>, vector<1x128xf32>,
    %146 = vector.extract_strided_slice %125 {offsets = [10, 0], sizes = [1, 128], strides = [1, 1]} : vector<32x128xf32> to vector<1x128xf32>
    %c0_76 = arith.constant 0 : index
    %c1280 = arith.constant 1280 : index
    %147 = vector.load %arg16[%c0_76, %c1280] : memref<2x2048xf32, #tpu.memory_space<vmem>>, vector<1x128xf32>
    tpu.vector_store %arg16[%c0_76, %c1280], %146 {strides = array<i32>} : memref<2x2048xf32, #tpu.memory_space<vmem>>, vector<1x128xf32>,
    %148 = vector.extract_strided_slice %125 {offsets = [11, 0], sizes = [1, 128], strides = [1, 1]} : vector<32x128xf32> to vector<1x128xf32>
    %c0_77 = arith.constant 0 : index
    %c1408 = arith.constant 1408 : index
    %149 = vector.load %arg16[%c0_77, %c1408] : memref<2x2048xf32, #tpu.memory_space<vmem>>, vector<1x128xf32>
    tpu.vector_store %arg16[%c0_77, %c1408], %148 {strides = array<i32>} : memref<2x2048xf32, #tpu.memory_space<vmem>>, vector<1x128xf32>,
    %150 = vector.extract_strided_slice %125 {offsets = [12, 0], sizes = [1, 128], strides = [1, 1]} : vector<32x128xf32> to vector<1x128xf32>
    %c0_78 = arith.constant 0 : index
    %c1536 = arith.constant 1536 : index
    %151 = vector.load %arg16[%c0_78, %c1536] : memref<2x2048xf32, #tpu.memory_space<vmem>>, vector<1x128xf32>
    tpu.vector_store %arg16[%c0_78, %c1536], %150 {strides = array<i32>} : memref<2x2048xf32, #tpu.memory_space<vmem>>, vector<1x128xf32>,
    %152 = vector.extract_strided_slice %125 {offsets = [13, 0], sizes = [1, 128], strides = [1, 1]} : vector<32x128xf32> to vector<1x128xf32>
    %c0_79 = arith.constant 0 : index
    %c1664 = arith.constant 1664 : index
    %153 = vector.load %arg16[%c0_79, %c1664] : memref<2x2048xf32, #tpu.memory_space<vmem>>, vector<1x128xf32>
    tpu.vector_store %arg16[%c0_79, %c1664], %152 {strides = array<i32>} : memref<2x2048xf32, #tpu.memory_space<vmem>>, vector<1x128xf32>,
    %154 = vector.extract_strided_slice %125 {offsets = [14, 0], sizes = [1, 128], strides = [1, 1]} : vector<32x128xf32> to vector<1x128xf32>
    %c0_80 = arith.constant 0 : index
    %c1792 = arith.constant 1792 : index
    %155 = vector.load %arg16[%c0_80, %c1792] : memref<2x2048xf32, #tpu.memory_space<vmem>>, vector<1x128xf32>
    tpu.vector_store %arg16[%c0_80, %c1792], %154 {strides = array<i32>} : memref<2x2048xf32, #tpu.memory_space<vmem>>, vector<1x128xf32>,
    %156 = vector.extract_strided_slice %125 {offsets = [15, 0], sizes = [1, 128], strides = [1, 1]} : vector<32x128xf32> to vector<1x128xf32>
    %c0_81 = arith.constant 0 : index
    %c1920 = arith.constant 1920 : index
    %157 = vector.load %arg16[%c0_81, %c1920] : memref<2x2048xf32, #tpu.memory_space<vmem>>, vector<1x128xf32>
    tpu.vector_store %arg16[%c0_81, %c1920], %156 {strides = array<i32>} : memref<2x2048xf32, #tpu.memory_space<vmem>>, vector<1x128xf32>,
    %158 = vector.extract_strided_slice %125 {offsets = [16, 0], sizes = [1, 128], strides = [1, 1]} : vector<32x128xf32> to vector<1x128xf32>
    %c1_82 = arith.constant 1 : index
    %c0_83 = arith.constant 0 : index
    %159 = vector.load %arg16[%c1_82, %c0_83] : memref<2x2048xf32, #tpu.memory_space<vmem>>, vector<1x128xf32>
    tpu.vector_store %arg16[%c1_82, %c0_83], %158 {strides = array<i32>} : memref<2x2048xf32, #tpu.memory_space<vmem>>, vector<1x128xf32>,
    %160 = vector.extract_strided_slice %125 {offsets = [17, 0], sizes = [1, 128], strides = [1, 1]} : vector<32x128xf32> to vector<1x128xf32>
    %c1_84 = arith.constant 1 : index
    %c128_85 = arith.constant 128 : index
    %161 = vector.load %arg16[%c1_84, %c128_85] : memref<2x2048xf32, #tpu.memory_space<vmem>>, vector<1x128xf32>
    tpu.vector_store %arg16[%c1_84, %c128_85], %160 {strides = array<i32>} : memref<2x2048xf32, #tpu.memory_space<vmem>>, vector<1x128xf32>,
    %162 = vector.extract_strided_slice %125 {offsets = [18, 0], sizes = [1, 128], strides = [1, 1]} : vector<32x128xf32> to vector<1x128xf32>
    %c1_86 = arith.constant 1 : index
    %c256_87 = arith.constant 256 : index
    %163 = vector.load %arg16[%c1_86, %c256_87] : memref<2x2048xf32, #tpu.memory_space<vmem>>, vector<1x128xf32>
    tpu.vector_store %arg16[%c1_86, %c256_87], %162 {strides = array<i32>} : memref<2x2048xf32, #tpu.memory_space<vmem>>, vector<1x128xf32>,
    %164 = vector.extract_strided_slice %125 {offsets = [19, 0], sizes = [1, 128], strides = [1, 1]} : vector<32x128xf32> to vector<1x128xf32>
    %c1_88 = arith.constant 1 : index
    %c384_89 = arith.constant 384 : index
    %165 = vector.load %arg16[%c1_88, %c384_89] : memref<2x2048xf32, #tpu.memory_space<vmem>>, vector<1x128xf32>
    tpu.vector_store %arg16[%c1_88, %c384_89], %164 {strides = array<i32>} : memref<2x2048xf32, #tpu.memory_space<vmem>>, vector<1x128xf32>,
    %166 = vector.extract_strided_slice %125 {offsets = [20, 0], sizes = [1, 128], strides = [1, 1]} : vector<32x128xf32> to vector<1x128xf32>
    %c1_90 = arith.constant 1 : index
    %c512_91 = arith.constant 512 : index
    %167 = vector.load %arg16[%c1_90, %c512_91] : memref<2x2048xf32, #tpu.memory_space<vmem>>, vector<1x128xf32>
    tpu.vector_store %arg16[%c1_90, %c512_91], %166 {strides = array<i32>} : memref<2x2048xf32, #tpu.memory_space<vmem>>, vector<1x128xf32>,
    %168 = vector.extract_strided_slice %125 {offsets = [21, 0], sizes = [1, 128], strides = [1, 1]} : vector<32x128xf32> to vector<1x128xf32>
    %c1_92 = arith.constant 1 : index
    %c640_93 = arith.constant 640 : index
    %169 = vector.load %arg16[%c1_92, %c640_93] : memref<2x2048xf32, #tpu.memory_space<vmem>>, vector<1x128xf32>
    tpu.vector_store %arg16[%c1_92, %c640_93], %168 {strides = array<i32>} : memref<2x2048xf32, #tpu.memory_space<vmem>>, vector<1x128xf32>,
    %170 = vector.extract_strided_slice %125 {offsets = [22, 0], sizes = [1, 128], strides = [1, 1]} : vector<32x128xf32> to vector<1x128xf32>
    %c1_94 = arith.constant 1 : index
    %c768_95 = arith.constant 768 : index
    %171 = vector.load %arg16[%c1_94, %c768_95] : memref<2x2048xf32, #tpu.memory_space<vmem>>, vector<1x128xf32>
    tpu.vector_store %arg16[%c1_94, %c768_95], %170 {strides = array<i32>} : memref<2x2048xf32, #tpu.memory_space<vmem>>, vector<1x128xf32>,
    %172 = vector.extract_strided_slice %125 {offsets = [23, 0], sizes = [1, 128], strides = [1, 1]} : vector<32x128xf32> to vector<1x128xf32>
    %c1_96 = arith.constant 1 : index
    %c896_97 = arith.constant 896 : index
    %173 = vector.load %arg16[%c1_96, %c896_97] : memref<2x2048xf32, #tpu.memory_space<vmem>>, vector<1x128xf32>
    tpu.vector_store %arg16[%c1_96, %c896_97], %172 {strides = array<i32>} : memref<2x2048xf32, #tpu.memory_space<vmem>>, vector<1x128xf32>,
    %174 = vector.extract_strided_slice %125 {offsets = [24, 0], sizes = [1, 128], strides = [1, 1]} : vector<32x128xf32> to vector<1x128xf32>
    %c1_98 = arith.constant 1 : index
    %c1024_99 = arith.constant 1024 : index
    %175 = vector.load %arg16[%c1_98, %c1024_99] : memref<2x2048xf32, #tpu.memory_space<vmem>>, vector<1x128xf32>
    tpu.vector_store %arg16[%c1_98, %c1024_99], %174 {strides = array<i32>} : memref<2x2048xf32, #tpu.memory_space<vmem>>, vector<1x128xf32>,
    %176 = vector.extract_strided_slice %125 {offsets = [25, 0], sizes = [1, 128], strides = [1, 1]} : vector<32x128xf32> to vector<1x128xf32>
    %c1_100 = arith.constant 1 : index
    %c1152_101 = arith.constant 1152 : index
    %177 = vector.load %arg16[%c1_100, %c1152_101] : memref<2x2048xf32, #tpu.memory_space<vmem>>, vector<1x128xf32>
    tpu.vector_store %arg16[%c1_100, %c1152_101], %176 {strides = array<i32>} : memref<2x2048xf32, #tpu.memory_space<vmem>>, vector<1x128xf32>,
    %178 = vector.extract_strided_slice %125 {offsets = [26, 0], sizes = [1, 128], strides = [1, 1]} : vector<32x128xf32> to vector<1x128xf32>
    %c1_102 = arith.constant 1 : index
    %c1280_103 = arith.constant 1280 : index
    %179 = vector.load %arg16[%c1_102, %c1280_103] : memref<2x2048xf32, #tpu.memory_space<vmem>>, vector<1x128xf32>
    tpu.vector_store %arg16[%c1_102, %c1280_103], %178 {strides = array<i32>} : memref<2x2048xf32, #tpu.memory_space<vmem>>, vector<1x128xf32>,
    %180 = vector.extract_strided_slice %125 {offsets = [27, 0], sizes = [1, 128], strides = [1, 1]} : vector<32x128xf32> to vector<1x128xf32>
    %c1_104 = arith.constant 1 : index
    %c1408_105 = arith.constant 1408 : index
    %181 = vector.load %arg16[%c1_104, %c1408_105] : memref<2x2048xf32, #tpu.memory_space<vmem>>, vector<1x128xf32>
    tpu.vector_store %arg16[%c1_104, %c1408_105], %180 {strides = array<i32>} : memref<2x2048xf32, #tpu.memory_space<vmem>>, vector<1x128xf32>,
    %182 = vector.extract_strided_slice %125 {offsets = [28, 0], sizes = [1, 128], strides = [1, 1]} : vector<32x128xf32> to vector<1x128xf32>
    %c1_106 = arith.constant 1 : index
    %c1536_107 = arith.constant 1536 : index
    %183 = vector.load %arg16[%c1_106, %c1536_107] : memref<2x2048xf32, #tpu.memory_space<vmem>>, vector<1x128xf32>
    tpu.vector_store %arg16[%c1_106, %c1536_107], %182 {strides = array<i32>} : memref<2x2048xf32, #tpu.memory_space<vmem>>, vector<1x128xf32>,
    %184 = vector.extract_strided_slice %125 {offsets = [29, 0], sizes = [1, 128], strides = [1, 1]} : vector<32x128xf32> to vector<1x128xf32>
    %c1_108 = arith.constant 1 : index
    %c1664_109 = arith.constant 1664 : index
    %185 = vector.load %arg16[%c1_108, %c1664_109] : memref<2x2048xf32, #tpu.memory_space<vmem>>, vector<1x128xf32>
    tpu.vector_store %arg16[%c1_108, %c1664_109], %184 {strides = array<i32>} : memref<2x2048xf32, #tpu.memory_space<vmem>>, vector<1x128xf32>,
    %186 = vector.extract_strided_slice %125 {offsets = [30, 0], sizes = [1, 128], strides = [1, 1]} : vector<32x128xf32> to vector<1x128xf32>
    %c1_110 = arith.constant 1 : index
    %c1792_111 = arith.constant 1792 : index
    %187 = vector.load %arg16[%c1_110, %c1792_111] : memref<2x2048xf32, #tpu.memory_space<vmem>>, vector<1x128xf32>
    tpu.vector_store %arg16[%c1_110, %c1792_111], %186 {strides = array<i32>} : memref<2x2048xf32, #tpu.memory_space<vmem>>, vector<1x128xf32>,
    %188 = vector.extract_strided_slice %125 {offsets = [31, 0], sizes = [1, 128], strides = [1, 1]} : vector<32x128xf32> to vector<1x128xf32>
    %c1_112 = arith.constant 1 : index
    %c1920_113 = arith.constant 1920 : index
    %189 = vector.load %arg16[%c1_112, %c1920_113] : memref<2x2048xf32, #tpu.memory_space<vmem>>, vector<1x128xf32>
    tpu.vector_store %arg16[%c1_112, %c1920_113], %188 {strides = array<i32>} : memref<2x2048xf32, #tpu.memory_space<vmem>>, vector<1x128xf32>,
    %c0_114 = arith.constant 0 : index
    %c0_115 = arith.constant 0 : index
    %190 = vector.load %arg16[%c0_114, %c0_115] : memref<2x2048xf32, #tpu.memory_space<vmem>>, vector<2x2048xf32>
    %191 = arith.truncf %190 : vector<2x2048xf32> to vector<2x2048xbf16>
    %c0_116 = arith.constant 0 : index
    %c0_117 = arith.constant 0 : index
    %192 = vector.load %arg10[%c0_116, %c0_117] : memref<2048x32xbf16, #tpu.memory_space<vmem>>, vector<2048x32xbf16>
    %cst_118 = arith.constant dense<0.000000e+00> : vector<2x32xf32>
    %193 = tpu.matmul %191, %192, %cst_118 {dimension_numbers = #tpu.dot_dimension_numbers<[1], [0], [0], [1], [0, 0, 1, 1], [], []>} : vector<2x2048xbf16>, vector<2048x32xbf16>, vector<2x32xf32> -> vector<2x32xf32>
    %c0_119 = arith.constant 0 : index
    %c0_120 = arith.constant 0 : index
    %194 = vector.load %arg11[%c0_119, %c0_120] : memref<1x32xf32, #tpu.memory_space<vmem>>, vector<1x32xf32>
    %195 = vector.broadcast %194 : vector<1x32xf32> to vector<2x32xf32>
    %196 = arith.addf %193, %195 : vector<2x32xf32>
    %cst_121 = arith.constant 0.000000e+00 : f32
    %197 = vector.broadcast %cst_121 : f32 to vector<2x32xf32>
    %198 = arith.maximumf %196, %197 : vector<2x32xf32>
    %199 = arith.truncf %198 : vector<2x32xf32> to vector<2x32xbf16>
    %c0_122 = arith.constant 0 : index
    %c0_123 = arith.constant 0 : index
    %200 = vector.load %arg12[%c0_122, %c0_123] : memref<32x10xbf16, #tpu.memory_space<vmem>>, vector<32x10xbf16>
    %cst_124 = arith.constant dense<0.000000e+00> : vector<2x10xf32>
    %201 = tpu.matmul %199, %200, %cst_124 {dimension_numbers = #tpu.dot_dimension_numbers<[1], [0], [0], [1], [0, 0, 1, 1], [], []>} : vector<2x32xbf16>, vector<32x10xbf16>, vector<2x10xf32> -> vector<2x10xf32>
    %c0_125 = arith.constant 0 : index
    %c0_126 = arith.constant 0 : index
    %202 = vector.load %arg13[%c0_125, %c0_126] : memref<1x10xf32, #tpu.memory_space<vmem>>, vector<1x10xf32>
    %203 = vector.broadcast %202 : vector<1x10xf32> to vector<2x10xf32>
    %204 = arith.addf %201, %203 : vector<2x10xf32>
    %c0_127 = arith.constant 0 : index
    %c0_128 = arith.constant 0 : index
    %205 = vector.load %arg14[%c0_127, %c0_128] : memref<2x10xf32, #tpu.memory_space<vmem>>, vector<2x10xf32>
    tpu.vector_store %arg14[%c0_127, %c0_128], %204 {strides = array<i32>} : memref<2x10xf32, #tpu.memory_space<vmem>>, vector<2x10xf32>,
    return
  }
  func.func @transform_0(%arg0: i32) -> (i32, i32, i32) {
    %c0_i32 = arith.constant 0 : i32
    %c0_i32_0 = arith.constant 0 : i32
    %c0_i32_1 = arith.constant 0 : i32
    %c0_i32_2 = arith.constant 0 : i32
    return %c0_i32, %c0_i32_0, %c0_i32_1 : i32, i32, i32
  }
  func.func @transform_1(%arg0: i32) -> (i32, i32, i32) {
    %c0_i32 = arith.constant 0 : i32
    %c0_i32_0 = arith.constant 0 : i32
    %c0_i32_1 = arith.constant 0 : i32
    %c0_i32_2 = arith.constant 0 : i32
    return %c0_i32, %c0_i32_0, %c0_i32_1 : i32, i32, i32
  }
  func.func @transform_2(%arg0: i32) -> (i32, i32, i32) {
    %c0_i32 = arith.constant 0 : i32
    %c0_i32_0 = arith.constant 0 : i32
    %c0_i32_1 = arith.constant 0 : i32
    %c0_i32_2 = arith.constant 0 : i32
    return %c0_i32, %c0_i32_0, %c0_i32_1 : i32, i32, i32
  }
  func.func @transform_3(%arg0: i32) -> (i32, i32) {
    %c0_i32 = arith.constant 0 : i32
    %c0_i32_0 = arith.constant 0 : i32
    %c0_i32_1 = arith.constant 0 : i32
    return %c0_i32, %c0_i32_0 : i32, i32
  }
  func.func @transform_4(%arg0: i32) -> (i32, i32) {
    %c0_i32 = arith.constant 0 : i32
    %c0_i32_0 = arith.constant 0 : i32
    %c0_i32_1 = arith.constant 0 : i32
    return %c0_i32, %c0_i32_0 : i32, i32
  }
  func.func @transform_5(%arg0: i32) -> (i32, i32) {
    %c0_i32 = arith.constant 0 : i32
    %c0_i32_0 = arith.constant 0 : i32
    %c0_i32_1 = arith.constant 0 : i32
    return %c0_i32, %c0_i32_0 : i32, i32
  }
  func.func @transform_6(%arg0: i32) -> (i32, i32) {
    %c0_i32 = arith.constant 0 : i32
    %c0_i32_0 = arith.constant 0 : i32
    %c0_i32_1 = arith.constant 0 : i32
    return %c0_i32, %c0_i32_0 : i32, i32
  }
  func.func @transform_7(%arg0: i32) -> (i32, i32) {
    %c0_i32 = arith.constant 0 : i32
    %c0_i32_0 = arith.constant 0 : i32
    %c0_i32_1 = arith.constant 0 : i32
    return %c0_i32, %c0_i32_0 : i32, i32
  }
  func.func @transform_8(%arg0: i32) -> (i32, i32) {
    %c0_i32 = arith.constant 0 : i32
    %c0_i32_0 = arith.constant 0 : i32
    %c0_i32_1 = arith.constant 0 : i32
    return %c0_i32, %c0_i32_0 : i32, i32
  }
  func.func @transform_9(%arg0: i32) -> (i32, i32) {
    %c0_i32 = arith.constant 0 : i32
    %c0_i32_0 = arith.constant 0 : i32
    %c0_i32_1 = arith.constant 0 : i32
    return %c0_i32, %c0_i32_0 : i32, i32
  }
  func.func @transform_10(%arg0: i32) -> (i32, i32) {
    %c0_i32 = arith.constant 0 : i32
    %c0_i32_0 = arith.constant 0 : i32
    %c0_i32_1 = arith.constant 0 : i32
    return %c0_i32, %c0_i32_0 : i32, i32
  }
  func.func @transform_11(%arg0: i32) -> (i32, i32) {
    %c0_i32 = arith.constant 0 : i32
    %c0_i32_0 = arith.constant 0 : i32
    %c0_i32_1 = arith.constant 0 : i32
    return %c0_i32, %c0_i32_0 : i32, i32
  }
  func.func @transform_12(%arg0: i32) -> (i32, i32) {
    %c0_i32 = arith.constant 0 : i32
    %c0_i32_0 = arith.constant 0 : i32
    %c0_i32_1 = arith.constant 0 : i32
    return %c0_i32, %c0_i32_0 : i32, i32
  }
  func.func @transform_13(%arg0: i32) -> (i32, i32) {
    %c0_i32 = arith.constant 0 : i32
    %c0_i32_0 = arith.constant 0 : i32
    %c0_i32_1 = arith.constant 0 : i32
    return %c0_i32, %c0_i32_0 : i32, i32
  }
}

</mosaic_0001>

<llo_original>
// kernel: eurosat_cnn_forward.1
$region0: #{eurosat_cnn_forward.1}
  #allocation0 [shape = 'u32[]', space=smem, size = 0x4, offset = 0x4, fixed_abs, tag = 'smem constant byte address 0x4 - core index']
  #allocation1 [shape = 'u32[72,128]{1,0:T(1,128)}', space=vmem, size = 0x9000, scoped, tag = 'internal scratch']
  #allocation2 [shape = 'f32[2,34,128]{2,1,0:T(8,128)}', space=vmem, size = 0xa000, scoped, tag = 'scratch operand']
  #allocation3 [shape = 'f32[2,2048]{1,0:T(2,128)}', space=vmem, size = 0x4000, scoped, tag = 'scratch operand']
  %s0 = inlined_call_operand.vmem [shape: bf16[2,66,256], index: 0, kind: input, shape index: {}]
  %s1 = inlined_call_operand.vmem [shape: bf16[3,256,256], index: 1, kind: input, shape index: {}]
  %s2 = inlined_call_operand.vmem [shape: bf16[3,128,256], index: 2, kind: input, shape index: {}]
  %s3 = inlined_call_operand.vmem [shape: f32[256,4], index: 3, kind: input, shape index: {}]
  %s4 = inlined_call_operand.vmem [shape: f32[4,256], index: 4, kind: input, shape index: {}]
  %s5 = inlined_call_operand.vmem [shape: f32[2,4], index: 5, kind: input, shape index: {}]
  %s6 = inlined_call_operand.vmem [shape: f32[256,8], index: 6, kind: input, shape index: {}]
  %s7 = inlined_call_operand.vmem [shape: f32[8,256], index: 7, kind: input, shape index: {}]
  %s8 = inlined_call_operand.vmem [shape: f32[2,8], index: 8, kind: input, shape index: {}]
  %s9 = inlined_call_operand.vmem [shape: bf16[2048,32], index: 9, kind: input, shape index: {}]
  %s10 = inlined_call_operand.vmem [shape: f32[1,32], index: 10, kind: input, shape index: {}]
  %s11 = inlined_call_operand.vmem [shape: bf16[32,10], index: 11, kind: input, shape index: {}]
  %s12 = inlined_call_operand.vmem [shape: f32[1,10], index: 12, kind: input, shape index: {}]
  %s13 = inlined_call_operand.hbm [shape: f32[2,10], index: 13, kind: output, shape index: {}]
  %s14 = sld [smem:[#allocation0]]
  $region62: #{eurosat_cnn_forward.1} parent=0
    _
  %s16 = ssub.s32 1, %s14
  %s17 = scalar_select 0, %s16, %s14
  $region1: #{eurosat_cnn_forward.1} parent=0
    #allocation4 [shape = 'u8[1024]{0}', space=vmem, size = 0x400, scoped, tag = 'output window, operand 0, single buffered']
    #allocation5 [shape = 's32[1]{0}', space=sflag, size = 0x4, scoped, tag = 'scoped memory for eurosat_cnn_forward.1']
    %18 = vsyncpa [#allocation5], 0
    // Predicated region
    $region2: #{eurosat_cnn_forward.1} parent=1 // pred_check
      _
    $region3: #{eurosat_cnn_forward.1} parent=1 // pred_check_branch
      %20 = sbr.rel (0) target = $region5
    $region4: #{eurosat_cnn_forward.1} parent=1 // pred_region
      _
    $region5: #{eurosat_cnn_forward.1} parent=1 // pred_fallthru
      _
    // Predicated region
    $region6: #{eurosat_cnn_forward.1} parent=1 // pred_check
      _
    $region7: #{eurosat_cnn_forward.1} parent=1 // pred_check_branch
      %22 = sbr.rel (0) target = $region9
    $region8: #{eurosat_cnn_forward.1} parent=1 // pred_region
      _
    $region9: #{eurosat_cnn_forward.1} parent=1 // pred_fallthru
      _
    // Predicated region
    $region10: #{eurosat_cnn_forward.1} parent=1 // pred_check
      _
    $region11: #{eurosat_cnn_forward.1} parent=1 // pred_check_branch
      %24 = sbr.rel (0) target = $region13
    $region12: #{eurosat_cnn_forward.1} parent=1 // pred_region
      _
    $region13: #{eurosat_cnn_forward.1} parent=1 // pred_fallthru
      _
    // Predicated region
    $region14: #{eurosat_cnn_forward.1} parent=1 // pred_check
      _
    $region15: #{eurosat_cnn_forward.1} parent=1 // pred_check_branch
      %26 = sbr.rel (0) target = $region17
    $region16: #{eurosat_cnn_forward.1} parent=1 // pred_region
      _
    $region17: #{eurosat_cnn_forward.1} parent=1 // pred_fallthru
      _
    // Predicated region
    $region18: #{eurosat_cnn_forward.1} parent=1 // pred_check
      _
    $region19: #{eurosat_cnn_forward.1} parent=1 // pred_check_branch
      %28 = sbr.rel (0) target = $region21
    $region20: #{eurosat_cnn_forward.1} parent=1 // pred_region
      _
    $region21: #{eurosat_cnn_forward.1} parent=1 // pred_fallthru
      _
    // Predicated region
    $region22: #{eurosat_cnn_forward.1} parent=1 // pred_check
      _
    $region23: #{eurosat_cnn_forward.1} parent=1 // pred_check_branch
      %30 = sbr.rel (0) target = $region25
    $region24: #{eurosat_cnn_forward.1} parent=1 // pred_region
      _
    $region25: #{eurosat_cnn_forward.1} parent=1 // pred_fallthru
      _
    // Predicated region
    $region26: #{eurosat_cnn_forward.1} parent=1 // pred_check
      _
    $region27: #{eurosat_cnn_forward.1} parent=1 // pred_check_branch
      %32 = sbr.rel (0) target = $region29
    $region28: #{eurosat_cnn_forward.1} parent=1 // pred_region
      _
    $region29: #{eurosat_cnn_forward.1} parent=1 // pred_fallthru
      _
    // Predicated region
    $region30: #{eurosat_cnn_forward.1} parent=1 // pred_check
      _
    $region31: #{eurosat_cnn_forward.1} parent=1 // pred_check_branch
      %34 = sbr.rel (0) target = $region33
    $region32: #{eurosat_cnn_forward.1} parent=1 // pred_region
      _
    $region33: #{eurosat_cnn_forward.1} parent=1 // pred_fallthru
      _
    // Predicated region
    $region34: #{eurosat_cnn_forward.1} parent=1 // pred_check
      _
    $region35: #{eurosat_cnn_forward.1} parent=1 // pred_check_branch
      %36 = sbr.rel (0) target = $region37
    $region36: #{eurosat_cnn_forward.1} parent=1 // pred_region
      _
    $region37: #{eurosat_cnn_forward.1} parent=1 // pred_fallthru
      _
    // Predicated region
    $region38: #{eurosat_cnn_forward.1} parent=1 // pred_check
      _
    $region39: #{eurosat_cnn_forward.1} parent=1 // pred_check_branch
      %38 = sbr.rel (0) target = $region41
    $region40: #{eurosat_cnn_forward.1} parent=1 // pred_region
      _
    $region41: #{eurosat_cnn_forward.1} parent=1 // pred_fallthru
      _
    // Predicated region
    $region42: #{eurosat_cnn_forward.1} parent=1 // pred_check
      _
    $region43: #{eurosat_cnn_forward.1} parent=1 // pred_check_branch
      %40 = sbr.rel (0) target = $region45
    $region44: #{eurosat_cnn_forward.1} parent=1 // pred_region
      _
    $region45: #{eurosat_cnn_forward.1} parent=1 // pred_fallthru
      _
    // Predicated region
    $region46: #{eurosat_cnn_forward.1} parent=1 // pred_check
      _
    $region47: #{eurosat_cnn_forward.1} parent=1 // pred_check_branch
      %42 = sbr.rel (0) target = $region49
    $region48: #{eurosat_cnn_forward.1} parent=1 // pred_region
      _
    $region49: #{eurosat_cnn_forward.1} parent=1 // pred_fallthru
      _
    // Predicated region
    $region50: #{eurosat_cnn_forward.1} parent=1 // pred_check
      _
    $region51: #{eurosat_cnn_forward.1} parent=1 // pred_check_branch
      %44 = sbr.rel (0) target = $region53
    $region52: #{eurosat_cnn_forward.1} parent=1 // pred_region
      _
    $region53: #{eurosat_cnn_forward.1} parent=1 // pred_fallthru
      _
    %v46 = vld [vmem:[%s0] sm:$0xff]
    %v47 = vld [vmem:[%s0 + $0x8] sm:$0xff]
    %v48 = vld [vmem:[%s0 + $0x10] sm:$0xff]
    %v49 = vld [vmem:[%s0 + $0x18] sm:$0xff]
    %v50 = vld [vmem:[%s0 + $0x20] sm:$0xff]
    %v51 = vld [vmem:[%s0 + $0x28] sm:$0xff]
    %v52 = vld [vmem:[%s0 + $0x30] sm:$0xff]
    %v53 = vld [vmem:[%s0 + $0x38] sm:$0xff]
    %v54 = vld [vmem:[%s0 + $0x40] sm:$0x11]
    %v55 = vld [vmem:[%s0 + $0x48] sm:$0xff]
    %v56 = vld [vmem:[%s0 + $0x50] sm:$0xff]
    %v57 = vld [vmem:[%s0 + $0x58] sm:$0xff]
    %v58 = vld [vmem:[%s0 + $0x60] sm:$0xff]
    %v59 = vld [vmem:[%s0 + $0x68] sm:$0xff]
    %v60 = vld [vmem:[%s0 + $0x70] sm:$0xff]
    %v61 = vld [vmem:[%s0 + $0x78] sm:$0xff]
    %v62 = vld [vmem:[%s0 + $0x80] sm:$0xff]
    %v63 = vld [vmem:[%s0 + $0x88] sm:$0x11]
    %v64 = vld [vmem:[%s1] sm:$0xff]
    %v65 = vld [vmem:[%s1 + $0x8] sm:$0xff]
    %v66 = vld [vmem:[%s1 + $0x10] sm:$0xff]
    %v67 = vld [vmem:[%s1 + $0x18] sm:$0xff]
    %v68 = vld [vmem:[%s1 + $0x20] sm:$0xff]
    %v69 = vld [vmem:[%s1 + $0x28] sm:$0xff]
    %v70 = vld [vmem:[%s1 + $0x30] sm:$0xff]
    %v71 = vld [vmem:[%s1 + $0x38] sm:$0xff]
    %v72 = vld [vmem:[%s1 + $0x40] sm:$0xff]
    %v73 = vld [vmem:[%s1 + $0x48] sm:$0xff]
    %v74 = vld [vmem:[%s1 + $0x50] sm:$0xff]
    %v75 = vld [vmem:[%s1 + $0x58] sm:$0xff]
    %v76 = vld [vmem:[%s1 + $0x60] sm:$0xff]
    %v77 = vld [vmem:[%s1 + $0x68] sm:$0xff]
    %v78 = vld [vmem:[%s1 + $0x70] sm:$0xff]
    %v79 = vld [vmem:[%s1 + $0x78] sm:$0xff]
    %v80 = vld [vmem:[%s1 + $0x80] sm:$0xff]
    %v81 = vld [vmem:[%s1 + $0x88] sm:$0xff]
    %v82 = vld [vmem:[%s1 + $0x90] sm:$0xff]
    %v83 = vld [vmem:[%s1 + $0x98] sm:$0xff]
    %v84 = vld [vmem:[%s1 + $0xa0] sm:$0xff]
    %v85 = vld [vmem:[%s1 + $0xa8] sm:$0xff]
    %v86 = vld [vmem:[%s1 + $0xb0] sm:$0xff]
    %v87 = vld [vmem:[%s1 + $0xb8] sm:$0xff]
    %v88 = vld [vmem:[%s1 + $0xc0] sm:$0xff]
    %v89 = vld [vmem:[%s1 + $0xc8] sm:$0xff]
    %v90 = vld [vmem:[%s1 + $0xd0] sm:$0xff]
    %v91 = vld [vmem:[%s1 + $0xd8] sm:$0xff]
    %v92 = vld [vmem:[%s1 + $0xe0] sm:$0xff]
    %v93 = vld [vmem:[%s1 + $0xe8] sm:$0xff]
    %v94 = vld [vmem:[%s1 + $0xf0] sm:$0xff]
    %v95 = vld [vmem:[%s1 + $0xf8] sm:$0xff]
    %vm96 = vsmask.f32 3328
    %vm97 = vsmask.f32 7440
    %vm98 = vmor %vm96, %vm97
    %v100 = vshrl.u32 %v46, 16
    %v102 = vrot.slane %v100, 4
    %v103 = vshll.u32 %v46, 16
    %v105 = vrot.slane %v103, 5
    %v106 = vor.u32 %v102, %v105
    %v107 = vrot.slane %v106, 4
    %v109 = vshll.u32 %v47, 16
    %v111 = vrot.slane %v109, 5
    %v112 = vsel %vm98, %v107, %v111
    %v113 = vshrl.u32 %v47, 16
    %v115 = vrot.slane %v113, 4
    %v116 = vor.u32 %v115, %v111
    %v117 = vrot.slane %v116, 4
    %v119 = vshll.u32 %v48, 16
    %v121 = vrot.slane %v119, 5
    %v122 = vsel %vm98, %v117, %v121
    %v123 = vshrl.u32 %v48, 16
    %v125 = vrot.slane %v123, 4
    %v126 = vor.u32 %v125, %v121
    %v127 = vrot.slane %v126, 4
    %v129 = vshll.u32 %v49, 16
    %v131 = vrot.slane %v129, 5
    %v132 = vsel %vm98, %v127, %v131
    %v133 = vshrl.u32 %v49, 16
    %v135 = vrot.slane %v133, 4
    %v136 = vor.u32 %v135, %v131
    %v137 = vrot.slane %v136, 4
    %v139 = vshll.u32 %v50, 16
    %v141 = vrot.slane %v139, 5
    %v142 = vsel %vm98, %v137, %v141
    %v143 = vshrl.u32 %v50, 16
    %v145 = vrot.slane %v143, 4
    %v146 = vor.u32 %v145, %v141
    %v147 = vrot.slane %v146, 4
    %v149 = vshll.u32 %v51, 16
    %v151 = vrot.slane %v149, 5
    %v152 = vsel %vm98, %v147, %v151
    %v153 = vshrl.u32 %v51, 16
    %v155 = vrot.slane %v153, 4
    %v156 = vor.u32 %v155, %v151
    %v157 = vrot.slane %v156, 4
    %v159 = vshll.u32 %v52, 16
    %v161 = vrot.slane %v159, 5
    %v162 = vsel %vm98, %v157, %v161
    %v163 = vshrl.u32 %v52, 16
    %v165 = vrot.slane %v163, 4
    %v166 = vor.u32 %v165, %v161
    %v167 = vrot.slane %v166, 4
    %v169 = vshll.u32 %v53, 16
    %v171 = vrot.slane %v169, 5
    %v172 = vsel %vm98, %v167, %v171
    %v173 = vshrl.u32 %v53, 16
    %v175 = vrot.slane %v173, 4
    %v176 = vor.u32 %v175, %v171
    %v177 = vrot.slane %v176, 4
    %v179 = vshll.u32 %v54, 16
    %v181 = vrot.slane %v179, 5
    %v182 = vsel %vm98, %v177, %v181
    %v184 = vshrl.u32 %v55, 16
    %v186 = vrot.slane %v184, 4
    %v187 = vshll.u32 %v55, 16
    %v189 = vrot.slane %v187, 5
    %v190 = vor.u32 %v186, %v189
    %v191 = vrot.slane %v190, 4
    %v193 = vshll.u32 %v56, 16
    %v195 = vrot.slane %v193, 5
    %v196 = vsel %vm98, %v191, %v195
    %v197 = vshrl.u32 %v56, 16
    %v199 = vrot.slane %v197, 4
    %v200 = vor.u32 %v199, %v195
    %v201 = vrot.slane %v200, 4
    %v203 = vshll.u32 %v57, 16
    %v205 = vrot.slane %v203, 5
    %v206 = vsel %vm98, %v201, %v205
    %v207 = vshrl.u32 %v57, 16
    %v209 = vrot.slane %v207, 4
    %v210 = vor.u32 %v209, %v205
    %v211 = vrot.slane %v210, 4
    %v213 = vshll.u32 %v58, 16
    %v215 = vrot.slane %v213, 5
    %v216 = vsel %vm98, %v211, %v215
    %v217 = vshrl.u32 %v58, 16
    %v219 = vrot.slane %v217, 4
    %v220 = vor.u32 %v219, %v215
    %v221 = vrot.slane %v220, 4
    %v223 = vshll.u32 %v59, 16
    %v225 = vrot.slane %v223, 5
    %v226 = vsel %vm98, %v221, %v225
    %v227 = vshrl.u32 %v59, 16
    %v229 = vrot.slane %v227, 4
    %v230 = vor.u32 %v229, %v225
    %v231 = vrot.slane %v230, 4
    %v233 = vshll.u32 %v60, 16
    %v235 = vrot.slane %v233, 5
    %v236 = vsel %vm98, %v231, %v235
    %v237 = vshrl.u32 %v60, 16
    %v239 = vrot.slane %v237, 4
    %v240 = vor.u32 %v239, %v235
    %v241 = vrot.slane %v240, 4
    %v243 = vshll.u32 %v61, 16
    %v245 = vrot.slane %v243, 5
    %v246 = vsel %vm98, %v241, %v245
    %v247 = vshrl.u32 %v61, 16
    %v249 = vrot.slane %v247, 4
    %v250 = vor.u32 %v249, %v245
    %v251 = vrot.slane %v250, 4
    %v253 = vshll.u32 %v62, 16
    %v255 = vrot.slane %v253, 5
    %v256 = vsel %vm98, %v251, %v255
    %v257 = vshrl.u32 %v62, 16
    %v259 = vrot.slane %v257, 4
    %v260 = vor.u32 %v259, %v255
    %v261 = vrot.slane %v260, 4
    %v263 = vshll.u32 %v63, 16
    %v265 = vrot.slane %v263, 5
    %v266 = vsel %vm98, %v261, %v265
    %s267 = scalar_lea.vmem %s1, 256
    %v268 = vld [vmem:[%s267] sm:$0xff]
    %v269 = vld [vmem:[%s267 + $0x8] sm:$0xff]
    %v270 = vld [vmem:[%s267 + $0x10] sm:$0xff]
    %v271 = vld [vmem:[%s267 + $0x18] sm:$0xff]
    %v272 = vld [vmem:[%s267 + $0x20] sm:$0xff]
    %v273 = vld [vmem:[%s267 + $0x28] sm:$0xff]
    %v274 = vld [vmem:[%s267 + $0x30] sm:$0xff]
    %v275 = vld [vmem:[%s267 + $0x38] sm:$0xff]
    %v276 = vld [vmem:[%s267 + $0x40] sm:$0xff]
    %v277 = vld [vmem:[%s267 + $0x48] sm:$0xff]
    %v278 = vld [vmem:[%s267 + $0x50] sm:$0xff]
    %v279 = vld [vmem:[%s267 + $0x58] sm:$0xff]
    %v280 = vld [vmem:[%s267 + $0x60] sm:$0xff]
    %v281 = vld [vmem:[%s267 + $0x68] sm:$0xff]
    %v282 = vld [vmem:[%s267 + $0x70] sm:$0xff]
    %v283 = vld [vmem:[%s267 + $0x78] sm:$0xff]
    %v284 = vld [vmem:[%s267 + $0x80] sm:$0xff]
    %v285 = vld [vmem:[%s267 + $0x88] sm:$0xff]
    %v286 = vld [vmem:[%s267 + $0x90] sm:$0xff]
    %v287 = vld [vmem:[%s267 + $0x98] sm:$0xff]
    %v288 = vld [vmem:[%s267 + $0xa0] sm:$0xff]
    %v289 = vld [vmem:[%s267 + $0xa8] sm:$0xff]
    %v290 = vld [vmem:[%s267 + $0xb0] sm:$0xff]
    %v291 = vld [vmem:[%s267 + $0xb8] sm:$0xff]
    %v292 = vld [vmem:[%s267 + $0xc0] sm:$0xff]
    %v293 = vld [vmem:[%s267 + $0xc8] sm:$0xff]
    %v294 = vld [vmem:[%s267 + $0xd0] sm:$0xff]
    %v295 = vld [vmem:[%s267 + $0xd8] sm:$0xff]
    %v296 = vld [vmem:[%s267 + $0xe0] sm:$0xff]
    %v297 = vld [vmem:[%s267 + $0xe8] sm:$0xff]
    %v298 = vld [vmem:[%s267 + $0xf0] sm:$0xff]
    %v299 = vld [vmem:[%s267 + $0xf8] sm:$0xff]
    %v300 = vunpack.c.l.b16 %v112
    %v301 = vunpack.c.h.b16 %v112
    %v302 = vunpack.c.l.b16 %v122
    %v303 = vunpack.c.h.b16 %v122
    %v304 = vunpack.c.l.b16 %v132
    %v305 = vunpack.c.h.b16 %v132
    %v306 = vunpack.c.l.b16 %v142
    %v307 = vunpack.c.h.b16 %v142
    %v308 = vunpack.c.l.b16 %v152
    %v309 = vunpack.c.h.b16 %v152
    %v310 = vunpack.c.l.b16 %v162
    %v311 = vunpack.c.h.b16 %v162
    %v312 = vunpack.c.l.b16 %v172
    %v313 = vunpack.c.h.b16 %v172
    %v314 = vunpack.c.l.b16 %v182
    %v315 = vunpack.c.h.b16 %v182
    %v316 = vunpack.c.l.b16 %v196
    %v317 = vunpack.c.h.b16 %v196
    %v318 = vunpack.c.l.b16 %v206
    %v319 = vunpack.c.h.b16 %v206
    %v320 = vunpack.c.l.b16 %v216
    %v321 = vunpack.c.h.b16 %v216
    %v322 = vunpack.c.l.b16 %v226
    %v323 = vunpack.c.h.b16 %v226
    %v324 = vunpack.c.l.b16 %v236
    %v325 = vunpack.c.h.b16 %v236
    %v326 = vunpack.c.l.b16 %v246
    %v327 = vunpack.c.h.b16 %v246
    %v328 = vunpack.c.l.b16 %v256
    %v329 = vunpack.c.h.b16 %v256
    %v330 = vunpack.c.l.b16 %v266
    %v331 = vunpack.c.h.b16 %v266
    %v332 = vpack.c.b16 %v302, %v300
    %v333 = vpack.c.b16 %v303, %v301
    %v334 = vpack.c.b16 %v306, %v304
    %v335 = vpack.c.b16 %v307, %v305
    %v336 = vpack.c.b16 %v310, %v308
    %v337 = vpack.c.b16 %v311, %v309
    %v338 = vpack.c.b16 %v314, %v312
    %v339 = vpack.c.b16 %v315, %v313
    %v340 = vpack.c.b16 %v318, %v316
    %v341 = vpack.c.b16 %v319, %v317
    %v342 = vpack.c.b16 %v322, %v320
    %v343 = vpack.c.b16 %v323, %v321
    %v344 = vpack.c.b16 %v326, %v324
    %v345 = vpack.c.b16 %v327, %v325
    %v346 = vpack.c.b16 %v330, %v328
    %v347 = vpack.c.b16 %v331, %v329
    %v396 = vunpack.c.l.b16 %v268
    %v397 = vunpack.c.h.b16 %v268
    %v398 = vunpack.c.l.b16 %v269
    %v399 = vunpack.c.h.b16 %v269
    %v400 = vunpack.c.l.b16 %v270
    %v401 = vunpack.c.h.b16 %v270
    %v402 = vunpack.c.l.b16 %v271
    %v403 = vunpack.c.h.b16 %v271
    %v404 = vunpack.c.l.b16 %v272
    %v405 = vunpack.c.h.b16 %v272
    %v406 = vunpack.c.l.b16 %v273
    %v407 = vunpack.c.h.b16 %v273
    %v408 = vunpack.c.l.b16 %v274
    %v409 = vunpack.c.h.b16 %v274
    %v410 = vunpack.c.l.b16 %v275
    %v411 = vunpack.c.h.b16 %v275
    %v412 = vunpack.c.l.b16 %v276
    %v413 = vunpack.c.h.b16 %v276
    %v414 = vunpack.c.l.b16 %v277
    %v415 = vunpack.c.h.b16 %v277
    %v416 = vunpack.c.l.b16 %v278
    %v417 = vunpack.c.h.b16 %v278
    %v418 = vunpack.c.l.b16 %v279
    %v419 = vunpack.c.h.b16 %v279
    %v420 = vunpack.c.l.b16 %v280
    %v421 = vunpack.c.h.b16 %v280
    %v422 = vunpack.c.l.b16 %v281
    %v423 = vunpack.c.h.b16 %v281
    %v424 = vunpack.c.l.b16 %v282
    %v425 = vunpack.c.h.b16 %v282
    %v426 = vunpack.c.l.b16 %v283
    %v427 = vunpack.c.h.b16 %v283
    %v428 = vunpack.c.l.b16 %v284
    %v429 = vunpack.c.h.b16 %v284
    %v430 = vunpack.c.l.b16 %v285
    %v431 = vunpack.c.h.b16 %v285
    %v432 = vunpack.c.l.b16 %v286
    %v433 = vunpack.c.h.b16 %v286
    %v434 = vunpack.c.l.b16 %v287
    %v435 = vunpack.c.h.b16 %v287
    %v436 = vunpack.c.l.b16 %v288
    %v437 = vunpack.c.h.b16 %v288
    %v438 = vunpack.c.l.b16 %v289
    %v439 = vunpack.c.h.b16 %v289
    %v440 = vunpack.c.l.b16 %v290
    %v441 = vunpack.c.h.b16 %v290
    %v442 = vunpack.c.l.b16 %v291
    %v443 = vunpack.c.h.b16 %v291
    %v444 = vunpack.c.l.b16 %v292
    %v445 = vunpack.c.h.b16 %v292
    %v446 = vunpack.c.l.b16 %v293
    %v447 = vunpack.c.h.b16 %v293
    %v448 = vunpack.c.l.b16 %v294
    %v449 = vunpack.c.h.b16 %v294
    %v450 = vunpack.c.l.b16 %v295
    %v451 = vunpack.c.h.b16 %v295
    %v452 = vunpack.c.l.b16 %v296
    %v453 = vunpack.c.h.b16 %v296
    %v454 = vunpack.c.l.b16 %v297
    %v455 = vunpack.c.h.b16 %v297
    %v456 = vunpack.c.l.b16 %v298
    %v457 = vunpack.c.h.b16 %v298
    %v458 = vunpack.c.l.b16 %v299
    %v459 = vunpack.c.h.b16 %v299
    %v460 = vpack.c.b16 %v398, %v396
    %v461 = vpack.c.b16 %v399, %v397
    %v462 = vpack.c.b16 %v402, %v400
    %v463 = vpack.c.b16 %v403, %v401
    %v464 = vpack.c.b16 %v406, %v404
    %v465 = vpack.c.b16 %v407, %v405
    %v466 = vpack.c.b16 %v410, %v408
    %v467 = vpack.c.b16 %v411, %v409
    %v468 = vpack.c.b16 %v414, %v412
    %v469 = vpack.c.b16 %v415, %v413
    %v470 = vpack.c.b16 %v418, %v416
    %v471 = vpack.c.b16 %v419, %v417
    %v472 = vpack.c.b16 %v422, %v420
    %v473 = vpack.c.b16 %v423, %v421
    %v474 = vpack.c.b16 %v426, %v424
    %v475 = vpack.c.b16 %v427, %v425
    %v476 = vpack.c.b16 %v430, %v428
    %v477 = vpack.c.b16 %v431, %v429
    %v478 = vpack.c.b16 %v434, %v432
    %v479 = vpack.c.b16 %v435, %v433
    %v480 = vpack.c.b16 %v438, %v436
    %v481 = vpack.c.b16 %v439, %v437
    %v482 = vpack.c.b16 %v442, %v440
    %v483 = vpack.c.b16 %v443, %v441
    %v484 = vpack.c.b16 %v446, %v444
    %v485 = vpack.c.b16 %v447, %v445
    %v486 = vpack.c.b16 %v450, %v448
    %v487 = vpack.c.b16 %v451, %v449
    %v488 = vpack.c.b16 %v454, %v452
    %v489 = vpack.c.b16 %v455, %v453
    %v490 = vpack.c.b16 %v458, %v456
    %v491 = vpack.c.b16 %v459, %v457
    %524 = vmatpush.bf16.msra.mxu0 %v474
    %525 = vmatpush.bf16.msra.mxu0 %v472
    %526 = vmatpush.bf16.msra.mxu0 %v470
    %527 = vmatpush.bf16.msra.mxu0 %v468
    %528 = vmatpush.bf16.msra.mxu0 %v466
    %529 = vmatpush.bf16.msra.mxu0 %v464
    %530 = vmatpush.bf16.msra.mxu0 %v462
    %531 = vmatpush.bf16.msra.mxu0 %v460
    %532 = vmatmul.bf16.gmra.mxu0 %v332
    %v533 = vpop.f32.mrf.mxu0
    %v534 = vadd.f32 0.0, %v533
    %v535 = vpop.f32.mrf.mxu0
    %v536 = vadd.f32 0.0, %v535
    %537 = vmatmul.bf16.gmra.mxu0 %v334
    %v538 = vpop.f32.mrf.mxu0
    %v539 = vadd.f32 0.0, %v538
    %v540 = vpop.f32.mrf.mxu0
    %v541 = vadd.f32 0.0, %v540
    %542 = vmatmul.bf16.gmra.mxu0 %v336
    %v543 = vpop.f32.mrf.mxu0
    %v544 = vadd.f32 0.0, %v543
    %v545 = vpop.f32.mrf.mxu0
    %v546 = vadd.f32 0.0, %v545
    %547 = vmatmul.bf16.gmra.mxu0 %v338
    %v548 = vpop.f32.mrf.mxu0
    %v549 = vadd.f32 0.0, %v548
    %v550 = vpop.f32.mrf.mxu0
    %v551 = vadd.f32 0.0, %v550
    %552 = vmatmul.bf16.gmra.mxu0 %v340
    %v553 = vpop.f32.mrf.mxu0
    %v554 = vadd.f32 0.0, %v553
    %v555 = vpop.f32.mrf.mxu0
    %v556 = vadd.f32 0.0, %v555
    %557 = vmatmul.bf16.gmra.mxu0 %v342
    %v558 = vpop.f32.mrf.mxu0
    %v559 = vadd.f32 0.0, %v558
    %v560 = vpop.f32.mrf.mxu0
    %v561 = vadd.f32 0.0, %v560
    %562 = vmatmul.bf16.gmra.mxu0 %v344
    %v563 = vpop.f32.mrf.mxu0
    %v564 = vadd.f32 0.0, %v563
    %v565 = vpop.f32.mrf.mxu0
    %v566 = vadd.f32 0.0, %v565
    %567 = vmatmul.bf16.gmra.mxu0 %v346
    %v568 = vpop.f32.mrf.mxu0
    %v569 = vadd.f32 0.0, %v568
    %v570 = vpop.f32.mrf.mxu0
    %v571 = vadd.f32 0.0, %v570
    %572 = vdwg.mxu0
    %573 = vmatpush.bf16.msra.mxu0 %v490
    %574 = vmatpush.bf16.msra.mxu0 %v488
    %575 = vmatpush.bf16.msra.mxu0 %v486
    %576 = vmatpush.bf16.msra.mxu0 %v484
    %577 = vmatpush.bf16.msra.mxu0 %v482
    %578 = vmatpush.bf16.msra.mxu0 %v480
    %579 = vmatpush.bf16.msra.mxu0 %v478
    %580 = vmatpush.bf16.msra.mxu0 %v476
    %581 = vmatmul.bf16.gmra.mxu0 %v333
    %v582 = vpop.f32.mrf.mxu0
    %v583 = vadd.f32 %v534, %v582
    %v584 = vpop.f32.mrf.mxu0
    %v585 = vadd.f32 %v536, %v584
    %586 = vmatmul.bf16.gmra.mxu0 %v335
    %v587 = vpop.f32.mrf.mxu0
    %v588 = vadd.f32 %v539, %v587
    %v589 = vpop.f32.mrf.mxu0
    %v590 = vadd.f32 %v541, %v589
    %591 = vmatmul.bf16.gmra.mxu0 %v337
    %v592 = vpop.f32.mrf.mxu0
    %v593 = vadd.f32 %v544, %v592
    %v594 = vpop.f32.mrf.mxu0
    %v595 = vadd.f32 %v546, %v594
    %596 = vmatmul.bf16.gmra.mxu0 %v339
    %v597 = vpop.f32.mrf.mxu0
    %v598 = vadd.f32 %v549, %v597
    %v599 = vpop.f32.mrf.mxu0
    %v600 = vadd.f32 %v551, %v599
    %601 = vmatmul.bf16.gmra.mxu0 %v341
    %v602 = vpop.f32.mrf.mxu0
    %v603 = vadd.f32 %v554, %v602
    %v604 = vpop.f32.mrf.mxu0
    %v605 = vadd.f32 %v556, %v604
    %606 = vmatmul.bf16.gmra.mxu0 %v343
    %v607 = vpop.f32.mrf.mxu0
    %v608 = vadd.f32 %v559, %v607
    %v609 = vpop.f32.mrf.mxu0
    %v610 = vadd.f32 %v561, %v609
    %611 = vmatmul.bf16.gmra.mxu0 %v345
    %v612 = vpop.f32.mrf.mxu0
    %v613 = vadd.f32 %v564, %v612
    %v614 = vpop.f32.mrf.mxu0
    %v615 = vadd.f32 %v566, %v614
    %616 = vmatmul.bf16.gmra.mxu0 %v347
    %v617 = vpop.f32.mrf.mxu0
    %v618 = vadd.f32 %v569, %v617
    %v619 = vpop.f32.mrf.mxu0
    %v620 = vadd.f32 %v571, %v619
    %621 = vdwg.mxu0
    %622 = vmatpush.bf16.msra.mxu0 %v475
    %623 = vmatpush.bf16.msra.mxu0 %v473
    %624 = vmatpush.bf16.msra.mxu0 %v471
    %625 = vmatpush.bf16.msra.mxu0 %v469
    %626 = vmatpush.bf16.msra.mxu0 %v467
    %627 = vmatpush.bf16.msra.mxu0 %v465
    %628 = vmatpush.bf16.msra.mxu0 %v463
    %629 = vmatpush.bf16.msra.mxu0 %v461
    %630 = vmatmul.bf16.gmra.mxu0 %v332
    %v631 = vpop.f32.mrf.mxu0
    %v632 = vadd.f32 0.0, %v631
    %v633 = vpop.f32.mrf.mxu0
    %v634 = vadd.f32 0.0, %v633
    %635 = vmatmul.bf16.gmra.mxu0 %v334
    %v636 = vpop.f32.mrf.mxu0
    %v637 = vadd.f32 0.0, %v636
    %v638 = vpop.f32.mrf.mxu0
    %v639 = vadd.f32 0.0, %v638
    %640 = vmatmul.bf16.gmra.mxu0 %v336
    %v641 = vpop.f32.mrf.mxu0
    %v642 = vadd.f32 0.0, %v641
    %v643 = vpop.f32.mrf.mxu0
    %v644 = vadd.f32 0.0, %v643
    %645 = vmatmul.bf16.gmra.mxu0 %v338
    %v646 = vpop.f32.mrf.mxu0
    %v647 = vadd.f32 0.0, %v646
    %v648 = vpop.f32.mrf.mxu0
    %v649 = vadd.f32 0.0, %v648
    %650 = vmatmul.bf16.gmra.mxu0 %v340
    %v651 = vpop.f32.mrf.mxu0
    %v652 = vadd.f32 0.0, %v651
    %v653 = vpop.f32.mrf.mxu0
    %v654 = vadd.f32 0.0, %v653
    %655 = vmatmul.bf16.gmra.mxu0 %v342
    %v656 = vpop.f32.mrf.mxu0
    %v657 = vadd.f32 0.0, %v656
    %v658 = vpop.f32.mrf.mxu0
    %v659 = vadd.f32 0.0, %v658
    %660 = vmatmul.bf16.gmra.mxu0 %v344
    %v661 = vpop.f32.mrf.mxu0
    %v662 = vadd.f32 0.0, %v661
    %v663 = vpop.f32.mrf.mxu0
    %v664 = vadd.f32 0.0, %v663
    %665 = vmatmul.bf16.gmra.mxu0 %v346
    %v666 = vpop.f32.mrf.mxu0
    %v667 = vadd.f32 0.0, %v666
    %v668 = vpop.f32.mrf.mxu0
    %v669 = vadd.f32 0.0, %v668
    %670 = vdwg.mxu0
    %671 = vmatpush.bf16.msra.mxu0 %v491
    %672 = vmatpush.bf16.msra.mxu0 %v489
    %673 = vmatpush.bf16.msra.mxu0 %v487
    %674 = vmatpush.bf16.msra.mxu0 %v485
    %675 = vmatpush.bf16.msra.mxu0 %v483
    %676 = vmatpush.bf16.msra.mxu0 %v481
    %677 = vmatpush.bf16.msra.mxu0 %v479
    %678 = vmatpush.bf16.msra.mxu0 %v477
    %679 = vmatmul.bf16.gmra.mxu0 %v333
    %v680 = vpop.f32.mrf.mxu0
    %v681 = vadd.f32 %v632, %v680
    %v682 = vpop.f32.mrf.mxu0
    %v683 = vadd.f32 %v634, %v682
    %684 = vmatmul.bf16.gmra.mxu0 %v335
    %v685 = vpop.f32.mrf.mxu0
    %v686 = vadd.f32 %v637, %v685
    %v687 = vpop.f32.mrf.mxu0
    %v688 = vadd.f32 %v639, %v687
    %689 = vmatmul.bf16.gmra.mxu0 %v337
    %v690 = vpop.f32.mrf.mxu0
    %v691 = vadd.f32 %v642, %v690
    %v692 = vpop.f32.mrf.mxu0
    %v693 = vadd.f32 %v644, %v692
    %694 = vmatmul.bf16.gmra.mxu0 %v339
    %v695 = vpop.f32.mrf.mxu0
    %v696 = vadd.f32 %v647, %v695
    %v697 = vpop.f32.mrf.mxu0
    %v698 = vadd.f32 %v649, %v697
    %699 = vmatmul.bf16.gmra.mxu0 %v341
    %v700 = vpop.f32.mrf.mxu0
    %v701 = vadd.f32 %v652, %v700
    %v702 = vpop.f32.mrf.mxu0
    %v703 = vadd.f32 %v654, %v702
    %704 = vmatmul.bf16.gmra.mxu0 %v343
    %v705 = vpop.f32.mrf.mxu0
    %v706 = vadd.f32 %v657, %v705
    %v707 = vpop.f32.mrf.mxu0
    %v708 = vadd.f32 %v659, %v707
    %709 = vmatmul.bf16.gmra.mxu0 %v345
    %v710 = vpop.f32.mrf.mxu0
    %v711 = vadd.f32 %v662, %v710
    %v712 = vpop.f32.mrf.mxu0
    %v713 = vadd.f32 %v664, %v712
    %714 = vmatmul.bf16.gmra.mxu0 %v347
    %v715 = vpop.f32.mrf.mxu0
    %v716 = vadd.f32 %v667, %v715
    %v717 = vpop.f32.mrf.mxu0
    %v718 = vadd.f32 %v669, %v717
    %719 = vdwg.mxu0
    %v736 = vunpack.c.l.b16 %v46
    %v737 = vunpack.c.h.b16 %v46
    %v738 = vunpack.c.l.b16 %v47
    %v739 = vunpack.c.h.b16 %v47
    %v740 = vunpack.c.l.b16 %v48
    %v741 = vunpack.c.h.b16 %v48
    %v742 = vunpack.c.l.b16 %v49
    %v743 = vunpack.c.h.b16 %v49
    %v744 = vunpack.c.l.b16 %v50
    %v745 = vunpack.c.h.b16 %v50
    %v746 = vunpack.c.l.b16 %v51
    %v747 = vunpack.c.h.b16 %v51
    %v748 = vunpack.c.l.b16 %v52
    %v749 = vunpack.c.h.b16 %v52
    %v750 = vunpack.c.l.b16 %v53
    %v751 = vunpack.c.h.b16 %v53
    %v752 = vunpack.c.l.b16 %v55
    %v753 = vunpack.c.h.b16 %v55
    %v754 = vunpack.c.l.b16 %v56
    %v755 = vunpack.c.h.b16 %v56
    %v756 = vunpack.c.l.b16 %v57
    %v757 = vunpack.c.h.b16 %v57
    %v758 = vunpack.c.l.b16 %v58
    %v759 = vunpack.c.h.b16 %v58
    %v760 = vunpack.c.l.b16 %v59
    %v761 = vunpack.c.h.b16 %v59
    %v762 = vunpack.c.l.b16 %v60
    %v763 = vunpack.c.h.b16 %v60
    %v764 = vunpack.c.l.b16 %v61
    %v765 = vunpack.c.h.b16 %v61
    %v766 = vunpack.c.l.b16 %v62
    %v767 = vunpack.c.h.b16 %v62
    %v768 = vpack.c.b16 %v738, %v736
    %v769 = vpack.c.b16 %v739, %v737
    %v770 = vpack.c.b16 %v742, %v740
    %v771 = vpack.c.b16 %v743, %v741
    %v772 = vpack.c.b16 %v746, %v744
    %v773 = vpack.c.b16 %v747, %v745
    %v774 = vpack.c.b16 %v750, %v748
    %v775 = vpack.c.b16 %v751, %v749
    %v776 = vpack.c.b16 %v754, %v752
    %v777 = vpack.c.b16 %v755, %v753
    %v778 = vpack.c.b16 %v758, %v756
    %v779 = vpack.c.b16 %v759, %v757
    %v780 = vpack.c.b16 %v762, %v760
    %v781 = vpack.c.b16 %v763, %v761
    %v782 = vpack.c.b16 %v766, %v764
    %v783 = vpack.c.b16 %v767, %v765
    %v832 = vunpack.c.l.b16 %v64
    %v833 = vunpack.c.h.b16 %v64
    %v834 = vunpack.c.l.b16 %v65
    %v835 = vunpack.c.h.b16 %v65
    %v836 = vunpack.c.l.b16 %v66
    %v837 = vunpack.c.h.b16 %v66
    %v838 = vunpack.c.l.b16 %v67
    %v839 = vunpack.c.h.b16 %v67
    %v840 = vunpack.c.l.b16 %v68
    %v841 = vunpack.c.h.b16 %v68
    %v842 = vunpack.c.l.b16 %v69
    %v843 = vunpack.c.h.b16 %v69
    %v844 = vunpack.c.l.b16 %v70
    %v845 = vunpack.c.h.b16 %v70
    %v846 = vunpack.c.l.b16 %v71
    %v847 = vunpack.c.h.b16 %v71
    %v848 = vunpack.c.l.b16 %v72
    %v849 = vunpack.c.h.b16 %v72
    %v850 = vunpack.c.l.b16 %v73
    %v851 = vunpack.c.h.b16 %v73
    %v852 = vunpack.c.l.b16 %v74
    %v853 = vunpack.c.h.b16 %v74
    %v854 = vunpack.c.l.b16 %v75
    %v855 = vunpack.c.h.b16 %v75
    %v856 = vunpack.c.l.b16 %v76
    %v857 = vunpack.c.h.b16 %v76
    %v858 = vunpack.c.l.b16 %v77
    %v859 = vunpack.c.h.b16 %v77
    %v860 = vunpack.c.l.b16 %v78
    %v861 = vunpack.c.h.b16 %v78
    %v862 = vunpack.c.l.b16 %v79
    %v863 = vunpack.c.h.b16 %v79
    %v864 = vunpack.c.l.b16 %v80
    %v865 = vunpack.c.h.b16 %v80
    %v866 = vunpack.c.l.b16 %v81
    %v867 = vunpack.c.h.b16 %v81
    %v868 = vunpack.c.l.b16 %v82
    %v869 = vunpack.c.h.b16 %v82
    %v870 = vunpack.c.l.b16 %v83
    %v871 = vunpack.c.h.b16 %v83
    %v872 = vunpack.c.l.b16 %v84
    %v873 = vunpack.c.h.b16 %v84
    %v874 = vunpack.c.l.b16 %v85
    %v875 = vunpack.c.h.b16 %v85
    %v876 = vunpack.c.l.b16 %v86
    %v877 = vunpack.c.h.b16 %v86
    %v878 = vunpack.c.l.b16 %v87
    %v879 = vunpack.c.h.b16 %v87
    %v880 = vunpack.c.l.b16 %v88
    %v881 = vunpack.c.h.b16 %v88
    %v882 = vunpack.c.l.b16 %v89
    %v883 = vunpack.c.h.b16 %v89
    %v884 = vunpack.c.l.b16 %v90
    %v885 = vunpack.c.h.b16 %v90
    %v886 = vunpack.c.l.b16 %v91
    %v887 = vunpack.c.h.b16 %v91
    %v888 = vunpack.c.l.b16 %v92
    %v889 = vunpack.c.h.b16 %v92
    %v890 = vunpack.c.l.b16 %v93
    %v891 = vunpack.c.h.b16 %v93
    %v892 = vunpack.c.l.b16 %v94
    %v893 = vunpack.c.h.b16 %v94
    %v894 = vunpack.c.l.b16 %v95
    %v895 = vunpack.c.h.b16 %v95
    %v896 = vpack.c.b16 %v834, %v832
    %v897 = vpack.c.b16 %v835, %v833
    %v898 = vpack.c.b16 %v838, %v836
    %v899 = vpack.c.b16 %v839, %v837
    %v900 = vpack.c.b16 %v842, %v840
    %v901 = vpack.c.b16 %v843, %v841
    %v902 = vpack.c.b16 %v846, %v844
    %v903 = vpack.c.b16 %v847, %v845
    %v904 = vpack.c.b16 %v850, %v848
    %v905 = vpack.c.b16 %v851, %v849
    %v906 = vpack.c.b16 %v854, %v852
    %v907 = vpack.c.b16 %v855, %v853
    %v908 = vpack.c.b16 %v858, %v856
    %v909 = vpack.c.b16 %v859, %v857
    %v910 = vpack.c.b16 %v862, %v860
    %v911 = vpack.c.b16 %v863, %v861
    %v912 = vpack.c.b16 %v866, %v864
    %v913 = vpack.c.b16 %v867, %v865
    %v914 = vpack.c.b16 %v870, %v868
    %v915 = vpack.c.b16 %v871, %v869
    %v916 = vpack.c.b16 %v874, %v872
    %v917 = vpack.c.b16 %v875, %v873
    %v918 = vpack.c.b16 %v878, %v876
    %v919 = vpack.c.b16 %v879, %v877
    %v920 = vpack.c.b16 %v882, %v880
    %v921 = vpack.c.b16 %v883, %v881
    %v922 = vpack.c.b16 %v886, %v884
    %v923 = vpack.c.b16 %v887, %v885
    %v924 = vpack.c.b16 %v890, %v888
    %v925 = vpack.c.b16 %v891, %v889
    %v926 = vpack.c.b16 %v894, %v892
    %v927 = vpack.c.b16 %v895, %v893
    %960 = vmatpush.bf16.msra.mxu0 %v910
    %961 = vmatpush.bf16.msra.mxu0 %v908
    %962 = vmatpush.bf16.msra.mxu0 %v906
    %963 = vmatpush.bf16.msra.mxu0 %v904
    %964 = vmatpush.bf16.msra.mxu0 %v902
    %965 = vmatpush.bf16.msra.mxu0 %v900
    %966 = vmatpush.bf16.msra.mxu0 %v898
    %967 = vmatpush.bf16.msra.mxu0 %v896
    %968 = vmatmul.bf16.gmra.mxu0 %v768
    %v969 = vpop.f32.mrf.mxu0
    %v970 = vadd.f32 %v583, %v969
    %v971 = vpop.f32.mrf.mxu0
    %v972 = vadd.f32 %v585, %v971
    %973 = vmatmul.bf16.gmra.mxu0 %v770
    %v974 = vpop.f32.mrf.mxu0
    %v975 = vadd.f32 %v588, %v974
    %v976 = vpop.f32.mrf.mxu0
    %v977 = vadd.f32 %v590, %v976
    %978 = vmatmul.bf16.gmra.mxu0 %v772
    %v979 = vpop.f32.mrf.mxu0
    %v980 = vadd.f32 %v593, %v979
    %v981 = vpop.f32.mrf.mxu0
    %v982 = vadd.f32 %v595, %v981
    %983 = vmatmul.bf16.gmra.mxu0 %v774
    %v984 = vpop.f32.mrf.mxu0
    %v985 = vadd.f32 %v598, %v984
    %v986 = vpop.f32.mrf.mxu0
    %v987 = vadd.f32 %v600, %v986
    %988 = vmatmul.bf16.gmra.mxu0 %v776
    %v989 = vpop.f32.mrf.mxu0
    %v990 = vadd.f32 %v603, %v989
    %v991 = vpop.f32.mrf.mxu0
    %v992 = vadd.f32 %v605, %v991
    %993 = vmatmul.bf16.gmra.mxu0 %v778
    %v994 = vpop.f32.mrf.mxu0
    %v995 = vadd.f32 %v608, %v994
    %v996 = vpop.f32.mrf.mxu0
    %v997 = vadd.f32 %v610, %v996
    %998 = vmatmul.bf16.gmra.mxu0 %v780
    %v999 = vpop.f32.mrf.mxu0
    %v1000 = vadd.f32 %v613, %v999
    %v1001 = vpop.f32.mrf.mxu0
    %v1002 = vadd.f32 %v615, %v1001
    %1003 = vmatmul.bf16.gmra.mxu0 %v782
    %v1004 = vpop.f32.mrf.mxu0
    %v1005 = vadd.f32 %v618, %v1004
    %v1006 = vpop.f32.mrf.mxu0
    %v1007 = vadd.f32 %v620, %v1006
    %1008 = vdwg.mxu0
    %1009 = vmatpush.bf16.msra.mxu0 %v926
    %1010 = vmatpush.bf16.msra.mxu0 %v924
    %1011 = vmatpush.bf16.msra.mxu0 %v922
    %1012 = vmatpush.bf16.msra.mxu0 %v920
    %1013 = vmatpush.bf16.msra.mxu0 %v918
    %1014 = vmatpush.bf16.msra.mxu0 %v916
    %1015 = vmatpush.bf16.msra.mxu0 %v914
    %1016 = vmatpush.bf16.msra.mxu0 %v912
    %1017 = vmatmul.bf16.gmra.mxu0 %v769
    %v1018 = vpop.f32.mrf.mxu0
    %v1019 = vadd.f32 %v970, %v1018
    %v1020 = vpop.f32.mrf.mxu0
    %v1021 = vadd.f32 %v972, %v1020
    %1022 = vmatmul.bf16.gmra.mxu0 %v771
    %v1023 = vpop.f32.mrf.mxu0
    %v1024 = vadd.f32 %v975, %v1023
    %v1025 = vpop.f32.mrf.mxu0
    %v1026 = vadd.f32 %v977, %v1025
    %1027 = vmatmul.bf16.gmra.mxu0 %v773
    %v1028 = vpop.f32.mrf.mxu0
    %v1029 = vadd.f32 %v980, %v1028
    %v1030 = vpop.f32.mrf.mxu0
    %v1031 = vadd.f32 %v982, %v1030
    %1032 = vmatmul.bf16.gmra.mxu0 %v775
    %v1033 = vpop.f32.mrf.mxu0
    %v1034 = vadd.f32 %v985, %v1033
    %v1035 = vpop.f32.mrf.mxu0
    %v1036 = vadd.f32 %v987, %v1035
    %1037 = vmatmul.bf16.gmra.mxu0 %v777
    %v1038 = vpop.f32.mrf.mxu0
    %v1039 = vadd.f32 %v990, %v1038
    %v1040 = vpop.f32.mrf.mxu0
    %v1041 = vadd.f32 %v992, %v1040
    %1042 = vmatmul.bf16.gmra.mxu0 %v779
    %v1043 = vpop.f32.mrf.mxu0
    %v1044 = vadd.f32 %v995, %v1043
    %v1045 = vpop.f32.mrf.mxu0
    %v1046 = vadd.f32 %v997, %v1045
    %1047 = vmatmul.bf16.gmra.mxu0 %v781
    %v1048 = vpop.f32.mrf.mxu0
    %v1049 = vadd.f32 %v1000, %v1048
    %v1050 = vpop.f32.mrf.mxu0
    %v1051 = vadd.f32 %v1002, %v1050
    %1052 = vmatmul.bf16.gmra.mxu0 %v783
    %v1053 = vpop.f32.mrf.mxu0
    %v1054 = vadd.f32 %v1005, %v1053
    %v1055 = vpop.f32.mrf.mxu0
    %v1056 = vadd.f32 %v1007, %v1055
    %1057 = vdwg.mxu0
    %1058 = vmatpush.bf16.msra.mxu0 %v911
    %1059 = vmatpush.bf16.msra.mxu0 %v909
    %1060 = vmatpush.bf16.msra.mxu0 %v907
    %1061 = vmatpush.bf16.msra.mxu0 %v905
    %1062 = vmatpush.bf16.msra.mxu0 %v903
    %1063 = vmatpush.bf16.msra.mxu0 %v901
    %1064 = vmatpush.bf16.msra.mxu0 %v899
    %1065 = vmatpush.bf16.msra.mxu0 %v897
    %1066 = vmatmul.bf16.gmra.mxu0 %v768
    %v1067 = vpop.f32.mrf.mxu0
    %v1068 = vadd.f32 %v681, %v1067
    %v1069 = vpop.f32.mrf.mxu0
    %v1070 = vadd.f32 %v683, %v1069
    %1071 = vmatmul.bf16.gmra.mxu0 %v770
    %v1072 = vpop.f32.mrf.mxu0
    %v1073 = vadd.f32 %v686, %v1072
    %v1074 = vpop.f32.mrf.mxu0
    %v1075 = vadd.f32 %v688, %v1074
    %1076 = vmatmul.bf16.gmra.mxu0 %v772
    %v1077 = vpop.f32.mrf.mxu0
    %v1078 = vadd.f32 %v691, %v1077
    %v1079 = vpop.f32.mrf.mxu0
    %v1080 = vadd.f32 %v693, %v1079
    %1081 = vmatmul.bf16.gmra.mxu0 %v774
    %v1082 = vpop.f32.mrf.mxu0
    %v1083 = vadd.f32 %v696, %v1082
    %v1084 = vpop.f32.mrf.mxu0
    %v1085 = vadd.f32 %v698, %v1084
    %1086 = vmatmul.bf16.gmra.mxu0 %v776
    %v1087 = vpop.f32.mrf.mxu0
    %v1088 = vadd.f32 %v701, %v1087
    %v1089 = vpop.f32.mrf.mxu0
    %v1090 = vadd.f32 %v703, %v1089
    %1091 = vmatmul.bf16.gmra.mxu0 %v778
    %v1092 = vpop.f32.mrf.mxu0
    %v1093 = vadd.f32 %v706, %v1092
    %v1094 = vpop.f32.mrf.mxu0
    %v1095 = vadd.f32 %v708, %v1094
    %1096 = vmatmul.bf16.gmra.mxu0 %v780
    %v1097 = vpop.f32.mrf.mxu0
    %v1098 = vadd.f32 %v711, %v1097
    %v1099 = vpop.f32.mrf.mxu0
    %v1100 = vadd.f32 %v713, %v1099
    %1101 = vmatmul.bf16.gmra.mxu0 %v782
    %v1102 = vpop.f32.mrf.mxu0
    %v1103 = vadd.f32 %v716, %v1102
    %v1104 = vpop.f32.mrf.mxu0
    %v1105 = vadd.f32 %v718, %v1104
    %1106 = vdwg.mxu0
    %1107 = vmatpush.bf16.msra.mxu0 %v927
    %1108 = vmatpush.bf16.msra.mxu0 %v925
    %1109 = vmatpush.bf16.msra.mxu0 %v923
    %1110 = vmatpush.bf16.msra.mxu0 %v921
    %1111 = vmatpush.bf16.msra.mxu0 %v919
    %1112 = vmatpush.bf16.msra.mxu0 %v917
    %1113 = vmatpush.bf16.msra.mxu0 %v915
    %1114 = vmatpush.bf16.msra.mxu0 %v913
    %1115 = vmatmul.bf16.gmra.mxu0 %v769
    %v1116 = vpop.f32.mrf.mxu0
    %v1117 = vadd.f32 %v1068, %v1116
    %v1118 = vpop.f32.mrf.mxu0
    %v1119 = vadd.f32 %v1070, %v1118
    %1120 = vmatmul.bf16.gmra.mxu0 %v771
    %v1121 = vpop.f32.mrf.mxu0
    %v1122 = vadd.f32 %v1073, %v1121
    %v1123 = vpop.f32.mrf.mxu0
    %v1124 = vadd.f32 %v1075, %v1123
    %1125 = vmatmul.bf16.gmra.mxu0 %v773
    %v1126 = vpop.f32.mrf.mxu0
    %v1127 = vadd.f32 %v1078, %v1126
    %v1128 = vpop.f32.mrf.mxu0
    %v1129 = vadd.f32 %v1080, %v1128
    %1130 = vmatmul.bf16.gmra.mxu0 %v775
    %v1131 = vpop.f32.mrf.mxu0
    %v1132 = vadd.f32 %v1083, %v1131
    %v1133 = vpop.f32.mrf.mxu0
    %v1134 = vadd.f32 %v1085, %v1133
    %1135 = vmatmul.bf16.gmra.mxu0 %v777
    %v1136 = vpop.f32.mrf.mxu0
    %v1137 = vadd.f32 %v1088, %v1136
    %v1138 = vpop.f32.mrf.mxu0
    %v1139 = vadd.f32 %v1090, %v1138
    %1140 = vmatmul.bf16.gmra.mxu0 %v779
    %v1141 = vpop.f32.mrf.mxu0
    %v1142 = vadd.f32 %v1093, %v1141
    %v1143 = vpop.f32.mrf.mxu0
    %v1144 = vadd.f32 %v1095, %v1143
    %1145 = vmatmul.bf16.gmra.mxu0 %v781
    %v1146 = vpop.f32.mrf.mxu0
    %v1147 = vadd.f32 %v1098, %v1146
    %v1148 = vpop.f32.mrf.mxu0
    %v1149 = vadd.f32 %v1100, %v1148
    %1150 = vmatmul.bf16.gmra.mxu0 %v783
    %v1151 = vpop.f32.mrf.mxu0
    %v1152 = vadd.f32 %v1103, %v1151
    %v1153 = vpop.f32.mrf.mxu0
    %v1154 = vadd.f32 %v1105, %v1153
    %1155 = vdwg.mxu0
    %vm1158 = vcmask 1042432
    %vm1159 = vcmask 1046532
    %vm1160 = vmor %vm1158, %vm1159
    %v1161 = vrot.slane %v46, 5
    %v1162 = vrot.slane %v1161, 4
    %v1163 = vrot.slane %v47, 5
    %v1164 = vsel %vm1160, %v1162, %v1163
    %v1165 = vrot.slane %v1163, 4
    %v1166 = vrot.slane %v48, 5
    %v1167 = vsel %vm1160, %v1165, %v1166
    %v1168 = vrot.slane %v1166, 4
    %v1169 = vrot.slane %v49, 5
    %v1170 = vsel %vm1160, %v1168, %v1169
    %v1171 = vrot.slane %v1169, 4
    %v1172 = vrot.slane %v50, 5
    %v1173 = vsel %vm1160, %v1171, %v1172
    %v1174 = vrot.slane %v1172, 4
    %v1175 = vrot.slane %v51, 5
    %v1176 = vsel %vm1160, %v1174, %v1175
    %v1177 = vrot.slane %v1175, 4
    %v1178 = vrot.slane %v52, 5
    %v1179 = vsel %vm1160, %v1177, %v1178
    %v1180 = vrot.slane %v1178, 4
    %v1181 = vrot.slane %v53, 5
    %v1182 = vsel %vm1160, %v1180, %v1181
    %v1183 = vrot.slane %v1181, 4
    %v1184 = vrot.slane %v54, 5
    %v1185 = vsel %vm1160, %v1183, %v1184
    %v1186 = vrot.slane %v55, 5
    %v1187 = vrot.slane %v1186, 4
    %v1188 = vrot.slane %v56, 5
    %v1189 = vsel %vm1160, %v1187, %v1188
    %v1190 = vrot.slane %v1188, 4
    %v1191 = vrot.slane %v57, 5
    %v1192 = vsel %vm1160, %v1190, %v1191
    %v1193 = vrot.slane %v1191, 4
    %v1194 = vrot.slane %v58, 5
    %v1195 = vsel %vm1160, %v1193, %v1194
    %v1196 = vrot.slane %v1194, 4
    %v1197 = vrot.slane %v59, 5
    %v1198 = vsel %vm1160, %v1196, %v1197
    %v1199 = vrot.slane %v1197, 4
    %v1200 = vrot.slane %v60, 5
    %v1201 = vsel %vm1160, %v1199, %v1200
    %v1202 = vrot.slane %v1200, 4
    %v1203 = vrot.slane %v61, 5
    %v1204 = vsel %vm1160, %v1202, %v1203
    %v1205 = vrot.slane %v1203, 4
    %v1206 = vrot.slane %v62, 5
    %v1207 = vsel %vm1160, %v1205, %v1206
    %v1208 = vrot.slane %v1206, 4
    %v1209 = vrot.slane %v63, 5
    %v1210 = vsel %vm1160, %v1208, %v1209
    %s1211 = scalar_lea.vmem %s1, 512
    %v1212 = vld [vmem:[%s1211] sm:$0xff]
    %v1213 = vld [vmem:[%s1211 + $0x8] sm:$0xff]
    %v1214 = vld [vmem:[%s1211 + $0x10] sm:$0xff]
    %v1215 = vld [vmem:[%s1211 + $0x18] sm:$0xff]
    %v1216 = vld [vmem:[%s1211 + $0x20] sm:$0xff]
    %v1217 = vld [vmem:[%s1211 + $0x28] sm:$0xff]
    %v1218 = vld [vmem:[%s1211 + $0x30] sm:$0xff]
    %v1219 = vld [vmem:[%s1211 + $0x38] sm:$0xff]
    %v1220 = vld [vmem:[%s1211 + $0x40] sm:$0xff]
    %v1221 = vld [vmem:[%s1211 + $0x48] sm:$0xff]
    %v1222 = vld [vmem:[%s1211 + $0x50] sm:$0xff]
    %v1223 = vld [vmem:[%s1211 + $0x58] sm:$0xff]
    %v1224 = vld [vmem:[%s1211 + $0x60] sm:$0xff]
    %v1225 = vld [vmem:[%s1211 + $0x68] sm:$0xff]
    %v1226 = vld [vmem:[%s1211 + $0x70] sm:$0xff]
    %v1227 = vld [vmem:[%s1211 + $0x78] sm:$0xff]
    %v1228 = vld [vmem:[%s1211 + $0x80] sm:$0xff]
    %v1229 = vld [vmem:[%s1211 + $0x88] sm:$0xff]
    %v1230 = vld [vmem:[%s1211 + $0x90] sm:$0xff]
    %v1231 = vld [vmem:[%s1211 + $0x98] sm:$0xff]
    %v1232 = vld [vmem:[%s1211 + $0xa0] sm:$0xff]
    %v1233 = vld [vmem:[%s1211 + $0xa8] sm:$0xff]
    %v1234 = vld [vmem:[%s1211 + $0xb0] sm:$0xff]
    %v1235 = vld [vmem:[%s1211 + $0xb8] sm:$0xff]
    %v1236 = vld [vmem:[%s1211 + $0xc0] sm:$0xff]
    %v1237 = vld [vmem:[%s1211 + $0xc8] sm:$0xff]
    %v1238 = vld [vmem:[%s1211 + $0xd0] sm:$0xff]
    %v1239 = vld [vmem:[%s1211 + $0xd8] sm:$0xff]
    %v1240 = vld [vmem:[%s1211 + $0xe0] sm:$0xff]
    %v1241 = vld [vmem:[%s1211 + $0xe8] sm:$0xff]
    %v1242 = vld [vmem:[%s1211 + $0xf0] sm:$0xff]
    %v1243 = vld [vmem:[%s1211 + $0xf8] sm:$0xff]
    %v1244 = vunpack.c.l.b16 %v1164
    %v1245 = vunpack.c.h.b16 %v1164
    %v1246 = vunpack.c.l.b16 %v1167
    %v1247 = vunpack.c.h.b16 %v1167
    %v1248 = vunpack.c.l.b16 %v1170
    %v1249 = vunpack.c.h.b16 %v1170
    %v1250 = vunpack.c.l.b16 %v1173
    %v1251 = vunpack.c.h.b16 %v1173
    %v1252 = vunpack.c.l.b16 %v1176
    %v1253 = vunpack.c.h.b16 %v1176
    %v1254 = vunpack.c.l.b16 %v1179
    %v1255 = vunpack.c.h.b16 %v1179
    %v1256 = vunpack.c.l.b16 %v1182
    %v1257 = vunpack.c.h.b16 %v1182
    %v1258 = vunpack.c.l.b16 %v1185
    %v1259 = vunpack.c.h.b16 %v1185
    %v1260 = vunpack.c.l.b16 %v1189
    %v1261 = vunpack.c.h.b16 %v1189
    %v1262 = vunpack.c.l.b16 %v1192
    %v1263 = vunpack.c.h.b16 %v1192
    %v1264 = vunpack.c.l.b16 %v1195
    %v1265 = vunpack.c.h.b16 %v1195
    %v1266 = vunpack.c.l.b16 %v1198
    %v1267 = vunpack.c.h.b16 %v1198
    %v1268 = vunpack.c.l.b16 %v1201
    %v1269 = vunpack.c.h.b16 %v1201
    %v1270 = vunpack.c.l.b16 %v1204
    %v1271 = vunpack.c.h.b16 %v1204
    %v1272 = vunpack.c.l.b16 %v1207
    %v1273 = vunpack.c.h.b16 %v1207
    %v1274 = vunpack.c.l.b16 %v1210
    %v1275 = vunpack.c.h.b16 %v1210
    %v1276 = vpack.c.b16 %v1246, %v1244
    %v1277 = vpack.c.b16 %v1247, %v1245
    %v1278 = vpack.c.b16 %v1250, %v1248
    %v1279 = vpack.c.b16 %v1251, %v1249
    %v1280 = vpack.c.b16 %v1254, %v1252
    %v1281 = vpack.c.b16 %v1255, %v1253
    %v1282 = vpack.c.b16 %v1258, %v1256
    %v1283 = vpack.c.b16 %v1259, %v1257
    %v1284 = vpack.c.b16 %v1262, %v1260
    %v1285 = vpack.c.b16 %v1263, %v1261
    %v1286 = vpack.c.b16 %v1266, %v1264
    %v1287 = vpack.c.b16 %v1267, %v1265
    %v1288 = vpack.c.b16 %v1270, %v1268
    %v1289 = vpack.c.b16 %v1271, %v1269
    %v1290 = vpack.c.b16 %v1274, %v1272
    %v1291 = vpack.c.b16 %v1275, %v1273
    %v1340 = vunpack.c.l.b16 %v1212
    %v1341 = vunpack.c.h.b16 %v1212
    %v1342 = vunpack.c.l.b16 %v1213
    %v1343 = vunpack.c.h.b16 %v1213
    %v1344 = vunpack.c.l.b16 %v1214
    %v1345 = vunpack.c.h.b16 %v1214
    %v1346 = vunpack.c.l.b16 %v1215
    %v1347 = vunpack.c.h.b16 %v1215
    %v1348 = vunpack.c.l.b16 %v1216
    %v1349 = vunpack.c.h.b16 %v1216
    %v1350 = vunpack.c.l.b16 %v1217
    %v1351 = vunpack.c.h.b16 %v1217
    %v1352 = vunpack.c.l.b16 %v1218
    %v1353 = vunpack.c.h.b16 %v1218
    %v1354 = vunpack.c.l.b16 %v1219
    %v1355 = vunpack.c.h.b16 %v1219
    %v1356 = vunpack.c.l.b16 %v1220
    %v1357 = vunpack.c.h.b16 %v1220
    %v1358 = vunpack.c.l.b16 %v1221
    %v1359 = vunpack.c.h.b16 %v1221
    %v1360 = vunpack.c.l.b16 %v1222
    %v1361 = vunpack.c.h.b16 %v1222
    %v1362 = vunpack.c.l.b16 %v1223
    %v1363 = vunpack.c.h.b16 %v1223
    %v1364 = vunpack.c.l.b16 %v1224
    %v1365 = vunpack.c.h.b16 %v1224
    %v1366 = vunpack.c.l.b16 %v1225
    %v1367 = vunpack.c.h.b16 %v1225
    %v1368 = vunpack.c.l.b16 %v1226
    %v1369 = vunpack.c.h.b16 %v1226
    %v1370 = vunpack.c.l.b16 %v1227
    %v1371 = vunpack.c.h.b16 %v1227
    %v1372 = vunpack.c.l.b16 %v1228
    %v1373 = vunpack.c.h.b16 %v1228
    %v1374 = vunpack.c.l.b16 %v1229
    %v1375 = vunpack.c.h.b16 %v1229
    %v1376 = vunpack.c.l.b16 %v1230
    %v1377 = vunpack.c.h.b16 %v1230
    %v1378 = vunpack.c.l.b16 %v1231
    %v1379 = vunpack.c.h.b16 %v1231
    %v1380 = vunpack.c.l.b16 %v1232
    %v1381 = vunpack.c.h.b16 %v1232
    %v1382 = vunpack.c.l.b16 %v1233
    %v1383 = vunpack.c.h.b16 %v1233
    %v1384 = vunpack.c.l.b16 %v1234
    %v1385 = vunpack.c.h.b16 %v1234
    %v1386 = vunpack.c.l.b16 %v1235
    %v1387 = vunpack.c.h.b16 %v1235
    %v1388 = vunpack.c.l.b16 %v1236
    %v1389 = vunpack.c.h.b16 %v1236
    %v1390 = vunpack.c.l.b16 %v1237
    %v1391 = vunpack.c.h.b16 %v1237
    %v1392 = vunpack.c.l.b16 %v1238
    %v1393 = vunpack.c.h.b16 %v1238
    %v1394 = vunpack.c.l.b16 %v1239
    %v1395 = vunpack.c.h.b16 %v1239
    %v1396 = vunpack.c.l.b16 %v1240
    %v1397 = vunpack.c.h.b16 %v1240
    %v1398 = vunpack.c.l.b16 %v1241
    %v1399 = vunpack.c.h.b16 %v1241
    %v1400 = vunpack.c.l.b16 %v1242
    %v1401 = vunpack.c.h.b16 %v1242
    %v1402 = vunpack.c.l.b16 %v1243
    %v1403 = vunpack.c.h.b16 %v1243
    %v1404 = vpack.c.b16 %v1342, %v1340
    %v1405 = vpack.c.b16 %v1343, %v1341
    %v1406 = vpack.c.b16 %v1346, %v1344
    %v1407 = vpack.c.b16 %v1347, %v1345
    %v1408 = vpack.c.b16 %v1350, %v1348
    %v1409 = vpack.c.b16 %v1351, %v1349
    %v1410 = vpack.c.b16 %v1354, %v1352
    %v1411 = vpack.c.b16 %v1355, %v1353
    %v1412 = vpack.c.b16 %v1358, %v1356
    %v1413 = vpack.c.b16 %v1359, %v1357
    %v1414 = vpack.c.b16 %v1362, %v1360
    %v1415 = vpack.c.b16 %v1363, %v1361
    %v1416 = vpack.c.b16 %v1366, %v1364
    %v1417 = vpack.c.b16 %v1367, %v1365
    %v1418 = vpack.c.b16 %v1370, %v1368
    %v1419 = vpack.c.b16 %v1371, %v1369
    %v1420 = vpack.c.b16 %v1374, %v1372
    %v1421 = vpack.c.b16 %v1375, %v1373
    %v1422 = vpack.c.b16 %v1378, %v1376
    %v1423 = vpack.c.b16 %v1379, %v1377
    %v1424 = vpack.c.b16 %v1382, %v1380
    %v1425 = vpack.c.b16 %v1383, %v1381
    %v1426 = vpack.c.b16 %v1386, %v1384
    %v1427 = vpack.c.b16 %v1387, %v1385
    %v1428 = vpack.c.b16 %v1390, %v1388
    %v1429 = vpack.c.b16 %v1391, %v1389
    %v1430 = vpack.c.b16 %v1394, %v1392
    %v1431 = vpack.c.b16 %v1395, %v1393
    %v1432 = vpack.c.b16 %v1398, %v1396
    %v1433 = vpack.c.b16 %v1399, %v1397
    %v1434 = vpack.c.b16 %v1402, %v1400
    %v1435 = vpack.c.b16 %v1403, %v1401
    %1468 = vmatpush.bf16.msra.mxu0 %v1418
    %1469 = vmatpush.bf16.msra.mxu0 %v1416
    %1470 = vmatpush.bf16.msra.mxu0 %v1414
    %1471 = vmatpush.bf16.msra.mxu0 %v1412
    %1472 = vmatpush.bf16.msra.mxu0 %v1410
    %1473 = vmatpush.bf16.msra.mxu0 %v1408
    %1474 = vmatpush.bf16.msra.mxu0 %v1406
    %1475 = vmatpush.bf16.msra.mxu0 %v1404
    %1476 = vmatmul.bf16.gmra.mxu0 %v1276
    %v1477 = vpop.f32.mrf.mxu0
    %v1478 = vadd.f32 0.0, %v1477
    %v1479 = vpop.f32.mrf.mxu0
    %v1480 = vadd.f32 0.0, %v1479
    %1481 = vmatmul.bf16.gmra.mxu0 %v1278
    %v1482 = vpop.f32.mrf.mxu0
    %v1483 = vadd.f32 0.0, %v1482
    %v1484 = vpop.f32.mrf.mxu0
    %v1485 = vadd.f32 0.0, %v1484
    %1486 = vmatmul.bf16.gmra.mxu0 %v1280
    %v1487 = vpop.f32.mrf.mxu0
    %v1488 = vadd.f32 0.0, %v1487
    %v1489 = vpop.f32.mrf.mxu0
    %v1490 = vadd.f32 0.0, %v1489
    %1491 = vmatmul.bf16.gmra.mxu0 %v1282
    %v1492 = vpop.f32.mrf.mxu0
    %v1493 = vadd.f32 0.0, %v1492
    %v1494 = vpop.f32.mrf.mxu0
    %v1495 = vadd.f32 0.0, %v1494
    %1496 = vmatmul.bf16.gmra.mxu0 %v1284
    %v1497 = vpop.f32.mrf.mxu0
    %v1498 = vadd.f32 0.0, %v1497
    %v1499 = vpop.f32.mrf.mxu0
    %v1500 = vadd.f32 0.0, %v1499
    %1501 = vmatmul.bf16.gmra.mxu0 %v1286
    %v1502 = vpop.f32.mrf.mxu0
    %v1503 = vadd.f32 0.0, %v1502
    %v1504 = vpop.f32.mrf.mxu0
    %v1505 = vadd.f32 0.0, %v1504
    %1506 = vmatmul.bf16.gmra.mxu0 %v1288
    %v1507 = vpop.f32.mrf.mxu0
    %v1508 = vadd.f32 0.0, %v1507
    %v1509 = vpop.f32.mrf.mxu0
    %v1510 = vadd.f32 0.0, %v1509
    %1511 = vmatmul.bf16.gmra.mxu0 %v1290
    %v1512 = vpop.f32.mrf.mxu0
    %v1513 = vadd.f32 0.0, %v1512
    %v1514 = vpop.f32.mrf.mxu0
    %v1515 = vadd.f32 0.0, %v1514
    %1516 = vdwg.mxu0
    %1517 = vmatpush.bf16.msra.mxu0 %v1434
    %1518 = vmatpush.bf16.msra.mxu0 %v1432
    %1519 = vmatpush.bf16.msra.mxu0 %v1430
    %1520 = vmatpush.bf16.msra.mxu0 %v1428
    %1521 = vmatpush.bf16.msra.mxu0 %v1426
    %1522 = vmatpush.bf16.msra.mxu0 %v1424
    %1523 = vmatpush.bf16.msra.mxu0 %v1422
    %1524 = vmatpush.bf16.msra.mxu0 %v1420
    %1525 = vmatmul.bf16.gmra.mxu0 %v1277
    %v1526 = vpop.f32.mrf.mxu0
    %v1527 = vadd.f32 %v1478, %v1526
    %v1528 = vpop.f32.mrf.mxu0
    %v1529 = vadd.f32 %v1480, %v1528
    %1530 = vmatmul.bf16.gmra.mxu0 %v1279
    %v1531 = vpop.f32.mrf.mxu0
    %v1532 = vadd.f32 %v1483, %v1531
    %v1533 = vpop.f32.mrf.mxu0
    %v1534 = vadd.f32 %v1485, %v1533
    %1535 = vmatmul.bf16.gmra.mxu0 %v1281
    %v1536 = vpop.f32.mrf.mxu0
    %v1537 = vadd.f32 %v1488, %v1536
    %v1538 = vpop.f32.mrf.mxu0
    %v1539 = vadd.f32 %v1490, %v1538
    %1540 = vmatmul.bf16.gmra.mxu0 %v1283
    %v1541 = vpop.f32.mrf.mxu0
    %v1542 = vadd.f32 %v1493, %v1541
    %v1543 = vpop.f32.mrf.mxu0
    %v1544 = vadd.f32 %v1495, %v1543
    %1545 = vmatmul.bf16.gmra.mxu0 %v1285
    %v1546 = vpop.f32.mrf.mxu0
    %v1547 = vadd.f32 %v1498, %v1546
    %v1548 = vpop.f32.mrf.mxu0
    %v1549 = vadd.f32 %v1500, %v1548
    %1550 = vmatmul.bf16.gmra.mxu0 %v1287
    %v1551 = vpop.f32.mrf.mxu0
    %v1552 = vadd.f32 %v1503, %v1551
    %v1553 = vpop.f32.mrf.mxu0
    %v1554 = vadd.f32 %v1505, %v1553
    %1555 = vmatmul.bf16.gmra.mxu0 %v1289
    %v1556 = vpop.f32.mrf.mxu0
    %v1557 = vadd.f32 %v1508, %v1556
    %v1558 = vpop.f32.mrf.mxu0
    %v1559 = vadd.f32 %v1510, %v1558
    %1560 = vmatmul.bf16.gmra.mxu0 %v1291
    %v1561 = vpop.f32.mrf.mxu0
    %v1562 = vadd.f32 %v1513, %v1561
    %v1563 = vpop.f32.mrf.mxu0
    %v1564 = vadd.f32 %v1515, %v1563
    %1565 = vdwg.mxu0
    %1566 = vmatpush.bf16.msra.mxu0 %v1419
    %1567 = vmatpush.bf16.msra.mxu0 %v1417
    %1568 = vmatpush.bf16.msra.mxu0 %v1415
    %1569 = vmatpush.bf16.msra.mxu0 %v1413
    %1570 = vmatpush.bf16.msra.mxu0 %v1411
    %1571 = vmatpush.bf16.msra.mxu0 %v1409
    %1572 = vmatpush.bf16.msra.mxu0 %v1407
    %1573 = vmatpush.bf16.msra.mxu0 %v1405
    %1574 = vmatmul.bf16.gmra.mxu0 %v1276
    %v1575 = vpop.f32.mrf.mxu0
    %v1576 = vadd.f32 0.0, %v1575
    %v1577 = vpop.f32.mrf.mxu0
    %v1578 = vadd.f32 0.0, %v1577
    %1579 = vmatmul.bf16.gmra.mxu0 %v1278
    %v1580 = vpop.f32.mrf.mxu0
    %v1581 = vadd.f32 0.0, %v1580
    %v1582 = vpop.f32.mrf.mxu0
    %v1583 = vadd.f32 0.0, %v1582
    %1584 = vmatmul.bf16.gmra.mxu0 %v1280
    %v1585 = vpop.f32.mrf.mxu0
    %v1586 = vadd.f32 0.0, %v1585
    %v1587 = vpop.f32.mrf.mxu0
    %v1588 = vadd.f32 0.0, %v1587
    %1589 = vmatmul.bf16.gmra.mxu0 %v1282
    %v1590 = vpop.f32.mrf.mxu0
    %v1591 = vadd.f32 0.0, %v1590
    %v1592 = vpop.f32.mrf.mxu0
    %v1593 = vadd.f32 0.0, %v1592
    %1594 = vmatmul.bf16.gmra.mxu0 %v1284
    %v1595 = vpop.f32.mrf.mxu0
    %v1596 = vadd.f32 0.0, %v1595
    %v1597 = vpop.f32.mrf.mxu0
    %v1598 = vadd.f32 0.0, %v1597
    %1599 = vmatmul.bf16.gmra.mxu0 %v1286
    %v1600 = vpop.f32.mrf.mxu0
    %v1601 = vadd.f32 0.0, %v1600
    %v1602 = vpop.f32.mrf.mxu0
    %v1603 = vadd.f32 0.0, %v1602
    %1604 = vmatmul.bf16.gmra.mxu0 %v1288
    %v1605 = vpop.f32.mrf.mxu0
    %v1606 = vadd.f32 0.0, %v1605
    %v1607 = vpop.f32.mrf.mxu0
    %v1608 = vadd.f32 0.0, %v1607
    %1609 = vmatmul.bf16.gmra.mxu0 %v1290
    %v1610 = vpop.f32.mrf.mxu0
    %v1611 = vadd.f32 0.0, %v1610
    %v1612 = vpop.f32.mrf.mxu0
    %v1613 = vadd.f32 0.0, %v1612
    %1614 = vdwg.mxu0
    %1615 = vmatpush.bf16.msra.mxu0 %v1435
    %1616 = vmatpush.bf16.msra.mxu0 %v1433
    %1617 = vmatpush.bf16.msra.mxu0 %v1431
    %1618 = vmatpush.bf16.msra.mxu0 %v1429
    %1619 = vmatpush.bf16.msra.mxu0 %v1427
    %1620 = vmatpush.bf16.msra.mxu0 %v1425
    %1621 = vmatpush.bf16.msra.mxu0 %v1423
    %1622 = vmatpush.bf16.msra.mxu0 %v1421
    %1623 = vmatmul.bf16.gmra.mxu0 %v1277
    %v1624 = vpop.f32.mrf.mxu0
    %v1625 = vadd.f32 %v1576, %v1624
    %v1626 = vpop.f32.mrf.mxu0
    %v1627 = vadd.f32 %v1578, %v1626
    %1628 = vmatmul.bf16.gmra.mxu0 %v1279
    %v1629 = vpop.f32.mrf.mxu0
    %v1630 = vadd.f32 %v1581, %v1629
    %v1631 = vpop.f32.mrf.mxu0
    %v1632 = vadd.f32 %v1583, %v1631
    %1633 = vmatmul.bf16.gmra.mxu0 %v1281
    %v1634 = vpop.f32.mrf.mxu0
    %v1635 = vadd.f32 %v1586, %v1634
    %v1636 = vpop.f32.mrf.mxu0
    %v1637 = vadd.f32 %v1588, %v1636
    %1638 = vmatmul.bf16.gmra.mxu0 %v1283
    %v1639 = vpop.f32.mrf.mxu0
    %v1640 = vadd.f32 %v1591, %v1639
    %v1641 = vpop.f32.mrf.mxu0
    %v1642 = vadd.f32 %v1593, %v1641
    %1643 = vmatmul.bf16.gmra.mxu0 %v1285
    %v1644 = vpop.f32.mrf.mxu0
    %v1645 = vadd.f32 %v1596, %v1644
    %v1646 = vpop.f32.mrf.mxu0
    %v1647 = vadd.f32 %v1598, %v1646
    %1648 = vmatmul.bf16.gmra.mxu0 %v1287
    %v1649 = vpop.f32.mrf.mxu0
    %v1650 = vadd.f32 %v1601, %v1649
    %v1651 = vpop.f32.mrf.mxu0
    %v1652 = vadd.f32 %v1603, %v1651
    %1653 = vmatmul.bf16.gmra.mxu0 %v1289
    %v1654 = vpop.f32.mrf.mxu0
    %v1655 = vadd.f32 %v1606, %v1654
    %v1656 = vpop.f32.mrf.mxu0
    %v1657 = vadd.f32 %v1608, %v1656
    %1658 = vmatmul.bf16.gmra.mxu0 %v1291
    %v1659 = vpop.f32.mrf.mxu0
    %v1660 = vadd.f32 %v1611, %v1659
    %v1661 = vpop.f32.mrf.mxu0
    %v1662 = vadd.f32 %v1613, %v1661
    %1663 = vdwg.mxu0
    %v1664 = vadd.f32 %v1019, %v1527
    %v1665 = vadd.f32 %v1117, %v1625
    %v1666 = vadd.f32 %v1021, %v1529
    %v1667 = vadd.f32 %v1119, %v1627
    %v1668 = vadd.f32 %v1024, %v1532
    %v1669 = vadd.f32 %v1122, %v1630
    %v1670 = vadd.f32 %v1026, %v1534
    %v1671 = vadd.f32 %v1124, %v1632
    %v1672 = vadd.f32 %v1029, %v1537
    %v1673 = vadd.f32 %v1127, %v1635
    %v1674 = vadd.f32 %v1031, %v1539
    %v1675 = vadd.f32 %v1129, %v1637
    %v1676 = vadd.f32 %v1034, %v1542
    %v1677 = vadd.f32 %v1132, %v1640
    %v1678 = vadd.f32 %v1036, %v1544
    %v1679 = vadd.f32 %v1134, %v1642
    %v1680 = vadd.f32 %v1039, %v1547
    %v1681 = vadd.f32 %v1137, %v1645
    %v1682 = vadd.f32 %v1041, %v1549
    %v1683 = vadd.f32 %v1139, %v1647
    %v1684 = vadd.f32 %v1044, %v1552
    %v1685 = vadd.f32 %v1142, %v1650
    %v1686 = vadd.f32 %v1046, %v1554
    %v1687 = vadd.f32 %v1144, %v1652
    %v1688 = vadd.f32 %v1049, %v1557
    %v1689 = vadd.f32 %v1147, %v1655
    %v1690 = vadd.f32 %v1051, %v1559
    %v1691 = vadd.f32 %v1149, %v1657
    %v1692 = vadd.f32 %v1054, %v1562
    %v1693 = vadd.f32 %v1152, %v1660
    %v1694 = vadd.f32 %v1056, %v1564
    %v1695 = vadd.f32 %v1154, %v1662
    %v1696 = vadd.f32 %v1664, %v1666
    %v1697 = vadd.f32 %v1696, %v1668
    %v1698 = vadd.f32 %v1697, %v1670
    %v1699 = vadd.f32 %v1698, %v1672
    %v1700 = vadd.f32 %v1699, %v1674
    %v1701 = vadd.f32 %v1700, %v1676
    %v1702 = vadd.f32 %v1701, %v1678
    %v1703 = vadd.f32 %v1702, %v1680
    %v1704 = vadd.f32 %v1703, %v1682
    %v1705 = vadd.f32 %v1704, %v1684
    %v1706 = vadd.f32 %v1705, %v1686
    %v1707 = vadd.f32 %v1706, %v1688
    %v1708 = vadd.f32 %v1707, %v1690
    %v1709 = vadd.f32 %v1708, %v1692
    %v1710 = vadd.f32 %v1709, %v1694
    %v1711 = vrot.slane %v1710, 4
    %v1712 = vadd.f32 %v1710, %v1711
    %v1713 = vrot.slane %v1712, 2
    %v1714 = vadd.f32 %v1712, %v1713
    %v1715 = vrot.slane %v1714, 1
    %v1716 = vadd.f32 %v1714, %v1715
    %v1717 = vadd.f32 %v1665, %v1667
    %v1718 = vadd.f32 %v1717, %v1669
    %v1719 = vadd.f32 %v1718, %v1671
    %v1720 = vadd.f32 %v1719, %v1673
    %v1721 = vadd.f32 %v1720, %v1675
    %v1722 = vadd.f32 %v1721, %v1677
    %v1723 = vadd.f32 %v1722, %v1679
    %v1724 = vadd.f32 %v1723, %v1681
    %v1725 = vadd.f32 %v1724, %v1683
    %v1726 = vadd.f32 %v1725, %v1685
    %v1727 = vadd.f32 %v1726, %v1687
    %v1728 = vadd.f32 %v1727, %v1689
    %v1729 = vadd.f32 %v1728, %v1691
    %v1730 = vadd.f32 %v1729, %v1693
    %v1731 = vadd.f32 %v1730, %v1695
    %v1732 = vrot.slane %v1731, 4
    %v1733 = vadd.f32 %v1731, %v1732
    %v1734 = vrot.slane %v1733, 2
    %v1735 = vadd.f32 %v1733, %v1734
    %v1736 = vrot.slane %v1735, 1
    %v1737 = vadd.f32 %v1735, %v1736
    %v1738 = vmul.f32 %v1664, %v1664
    %v1739 = vmul.f32 %v1665, %v1665
    %v1740 = vmul.f32 %v1666, %v1666
    %v1741 = vmul.f32 %v1667, %v1667
    %v1742 = vmul.f32 %v1668, %v1668
    %v1743 = vmul.f32 %v1669, %v1669
    %v1744 = vmul.f32 %v1670, %v1670
    %v1745 = vmul.f32 %v1671, %v1671
    %v1746 = vmul.f32 %v1672, %v1672
    %v1747 = vmul.f32 %v1673, %v1673
    %v1748 = vmul.f32 %v1674, %v1674
    %v1749 = vmul.f32 %v1675, %v1675
    %v1750 = vmul.f32 %v1676, %v1676
    %v1751 = vmul.f32 %v1677, %v1677
    %v1752 = vmul.f32 %v1678, %v1678
    %v1753 = vmul.f32 %v1679, %v1679
    %v1754 = vmul.f32 %v1680, %v1680
    %v1755 = vmul.f32 %v1681, %v1681
    %v1756 = vmul.f32 %v1682, %v1682
    %v1757 = vmul.f32 %v1683, %v1683
    %v1758 = vmul.f32 %v1684, %v1684
    %v1759 = vmul.f32 %v1685, %v1685
    %v1760 = vmul.f32 %v1686, %v1686
    %v1761 = vmul.f32 %v1687, %v1687
    %v1762 = vmul.f32 %v1688, %v1688
    %v1763 = vmul.f32 %v1689, %v1689
    %v1764 = vmul.f32 %v1690, %v1690
    %v1765 = vmul.f32 %v1691, %v1691
    %v1766 = vmul.f32 %v1692, %v1692
    %v1767 = vmul.f32 %v1693, %v1693
    %v1768 = vmul.f32 %v1694, %v1694
    %v1769 = vmul.f32 %v1695, %v1695
    %v1770 = vadd.f32 %v1738, %v1740
    %v1771 = vadd.f32 %v1770, %v1742
    %v1772 = vadd.f32 %v1771, %v1744
    %v1773 = vadd.f32 %v1772, %v1746
    %v1774 = vadd.f32 %v1773, %v1748
    %v1775 = vadd.f32 %v1774, %v1750
    %v1776 = vadd.f32 %v1775, %v1752
    %v1777 = vadd.f32 %v1776, %v1754
    %v1778 = vadd.f32 %v1777, %v1756
    %v1779 = vadd.f32 %v1778, %v1758
    %v1780 = vadd.f32 %v1779, %v1760
    %v1781 = vadd.f32 %v1780, %v1762
    %v1782 = vadd.f32 %v1781, %v1764
    %v1783 = vadd.f32 %v1782, %v1766
    %v1784 = vadd.f32 %v1783, %v1768
    %v1785 = vrot.slane %v1784, 4
    %v1786 = vadd.f32 %v1784, %v1785
    %v1787 = vrot.slane %v1786, 2
    %v1788 = vadd.f32 %v1786, %v1787
    %v1789 = vrot.slane %v1788, 1
    %v1790 = vadd.f32 %v1788, %v1789
    %v1791 = vadd.f32 %v1739, %v1741
    %v1792 = vadd.f32 %v1791, %v1743
    %v1793 = vadd.f32 %v1792, %v1745
    %v1794 = vadd.f32 %v1793, %v1747
    %v1795 = vadd.f32 %v1794, %v1749
    %v1796 = vadd.f32 %v1795, %v1751
    %v1797 = vadd.f32 %v1796, %v1753
    %v1798 = vadd.f32 %v1797, %v1755
    %v1799 = vadd.f32 %v1798, %v1757
    %v1800 = vadd.f32 %v1799, %v1759
    %v1801 = vadd.f32 %v1800, %v1761
    %v1802 = vadd.f32 %v1801, %v1763
    %v1803 = vadd.f32 %v1802, %v1765
    %v1804 = vadd.f32 %v1803, %v1767
    %v1805 = vadd.f32 %v1804, %v1769
    %v1806 = vrot.slane %v1805, 4
    %v1807 = vadd.f32 %v1805, %v1806
    %v1808 = vrot.slane %v1807, 2
    %v1809 = vadd.f32 %v1807, %v1808
    %v1810 = vrot.slane %v1809, 1
    %v1811 = vadd.f32 %v1809, %v1810
    %vm1812 = vcmask 1040384
    %v1813 = vsel %vm1812, %v1716, %v1790
    %v1814 = vsel %vm1812, %v1737, %v1811
    %v1815 = vld [vmem:[%s3] sm:$0xff]
    %v1816 = vld [vmem:[%s3 + $0x8] sm:$0xff]
    %v1817 = vld [vmem:[%s3 + $0x10] sm:$0xff]
    %v1818 = vld [vmem:[%s3 + $0x18] sm:$0xff]
    %v1819 = vld [vmem:[%s3 + $0x20] sm:$0xff]
    %v1820 = vld [vmem:[%s3 + $0x28] sm:$0xff]
    %v1821 = vld [vmem:[%s3 + $0x30] sm:$0xff]
    %v1822 = vld [vmem:[%s3 + $0x38] sm:$0xff]
    %v1823 = vld [vmem:[%s3 + $0x40] sm:$0xff]
    %v1824 = vld [vmem:[%s3 + $0x48] sm:$0xff]
    %v1825 = vld [vmem:[%s3 + $0x50] sm:$0xff]
    %v1826 = vld [vmem:[%s3 + $0x58] sm:$0xff]
    %v1827 = vld [vmem:[%s3 + $0x60] sm:$0xff]
    %v1828 = vld [vmem:[%s3 + $0x68] sm:$0xff]
    %v1829 = vld [vmem:[%s3 + $0x70] sm:$0xff]
    %v1830 = vld [vmem:[%s3 + $0x78] sm:$0xff]
    %v1831 = vld [vmem:[%s3 + $0x80] sm:$0xff]
    %v1832 = vld [vmem:[%s3 + $0x88] sm:$0xff]
    %v1833 = vld [vmem:[%s3 + $0x90] sm:$0xff]
    %v1834 = vld [vmem:[%s3 + $0x98] sm:$0xff]
    %v1835 = vld [vmem:[%s3 + $0xa0] sm:$0xff]
    %v1836 = vld [vmem:[%s3 + $0xa8] sm:$0xff]
    %v1837 = vld [vmem:[%s3 + $0xb0] sm:$0xff]
    %v1838 = vld [vmem:[%s3 + $0xb8] sm:$0xff]
    %v1839 = vld [vmem:[%s3 + $0xc0] sm:$0xff]
    %v1840 = vld [vmem:[%s3 + $0xc8] sm:$0xff]
    %v1841 = vld [vmem:[%s3 + $0xd0] sm:$0xff]
    %v1842 = vld [vmem:[%s3 + $0xd8] sm:$0xff]
    %v1843 = vld [vmem:[%s3 + $0xe0] sm:$0xff]
    %v1844 = vld [vmem:[%s3 + $0xe8] sm:$0xff]
    %v1845 = vld [vmem:[%s3 + $0xf0] sm:$0xff]
    %v1846 = vld [vmem:[%s3 + $0xf8] sm:$0xff]
    %1847 = vmatpush.msra.mxu0 %v1830
    %1848 = vmatpush.msra.mxu0 %v1829
    %1849 = vmatpush.msra.mxu0 %v1828
    %1850 = vmatpush.msra.mxu0 %v1827
    %1851 = vmatpush.msra.mxu0 %v1826
    %1852 = vmatpush.msra.mxu0 %v1825
    %1853 = vmatpush.msra.mxu0 %v1824
    %1854 = vmatpush.msra.mxu0 %v1823
    %1855 = vmatpush.msra.mxu0 %v1822
    %1856 = vmatpush.msra.mxu0 %v1821
    %1857 = vmatpush.msra.mxu0 %v1820
    %1858 = vmatpush.msra.mxu0 %v1819
    %1859 = vmatpush.msra.mxu0 %v1818
    %1860 = vmatpush.msra.mxu0 %v1817
    %1861 = vmatpush.msra.mxu0 %v1816
    %1862 = vmatpush.msra.mxu0 %v1815
    %1863 = vmatmul.f32.gmra.mxu0 %v1813
    %v1864 = vpop.f32.mrf.mxu0
    %v1865 = vadd.f32 0.0, %v1864
    %1866 = vdwg.mxu0
    %1867 = vmatpush.msra.mxu0 %v1846
    %1868 = vmatpush.msra.mxu0 %v1845
    %1869 = vmatpush.msra.mxu0 %v1844
    %1870 = vmatpush.msra.mxu0 %v1843
    %1871 = vmatpush.msra.mxu0 %v1842
    %1872 = vmatpush.msra.mxu0 %v1841
    %1873 = vmatpush.msra.mxu0 %v1840
    %1874 = vmatpush.msra.mxu0 %v1839
    %1875 = vmatpush.msra.mxu0 %v1838
    %1876 = vmatpush.msra.mxu0 %v1837
    %1877 = vmatpush.msra.mxu0 %v1836
    %1878 = vmatpush.msra.mxu0 %v1835
    %1879 = vmatpush.msra.mxu0 %v1834
    %1880 = vmatpush.msra.mxu0 %v1833
    %1881 = vmatpush.msra.mxu0 %v1832
    %1882 = vmatpush.msra.mxu0 %v1831
    %1883 = vmatmul.f32.gmra.mxu0 %v1814
    %v1884 = vpop.f32.mrf.mxu0
    %v1885 = vadd.f32 %v1865, %v1884
    %1886 = vdwg.mxu0
    %v1887 = vrcp.pop 8192.0
    %v1888 = vmul.f32 8192.0, %v1887
    %v1889 = vsub.f32 1.0, %v1888
    %v1890 = vmul.f32 %v1887, %v1889
    %v1891 = vadd.f32 %v1887, %v1890
    %vm1892 = vweird.f32 %v1887
    %v1893 = vsel %vm1892, %v1887, %v1891
    %v1894 = vmul.f32 %v1885, %v1893
    %v1895 = vmul.f32 %v1894, %v1894
    %v1897 = vrot.slane %v1895, 7
    %v1899 = vsub.f32 %v1894, %v1897
    %v1900 = vld [vmem:[%s5] sm:$0x3]
    %v1901 = vadd.f32 %v1899, 1e-05
    %v1902 = vrsqrt.pop %v1901
    %v1903 = vmul.f32 %v1902, %v1901
    %v1904 = vmul.f32 %v1903, %v1902
    %v1905 = vmul.f32 0.5, %v1904
    %v1906 = vsub.f32 1.5, %v1905
    %v1907 = vmul.f32 %v1902, %v1906
    %vm1908 = vweird.f32 %v1901
    %vm1909 = vweird.f32 %v1902
    %vm1910 = vmor %vm1908, %vm1909
    %v1911 = vsel %vm1910, %v1902, %v1907
    %v1913 = vrot.slane %v1911, 1
    %v1915 = vmul.f32 %v1900, %v1913
    %v1916 = vmul.f32 %v1894, %v1915
    %v1918 = vrot.slane %v1916, 7
    %v1920 = vsub.f32 %v1900, %v1918
    %v1921 = vsel %vm1812, %v1915, %v1920
    %v1922 = vld [vmem:[%s4] sm:$0xff]
    %1924 = vst [vmem:[#allocation1] ss:$2 sm:$0xff] %v1922
    %v1925 = vld.sshfl [vmem:[#allocation1] sm:$0xff pattern:$0x75316420]
    %v1926 = vld.sshfl [vmem:[#allocation1 + $0x8] sm:$0xff pattern:$0x75316420]
    %vm1927 = vcmask 31744
    %v1929 = vsel %vm1927, %v1921, 0
    %vm1931 = vcmask 1043456
    %v1932 = vsel %vm1931, %v1925, 0
    %v1934 = vsel %vm1931, %v1926, 0
    %1936 = vmatpush.msra.mxu0 0.0
    %1937 = vmatpush.msra.mxu0 0.0
    %1938 = vmatpush.msra.mxu0 0.0
    %1939 = vmatpush.msra.mxu0 0.0
    %1940 = vmatpush.msra.mxu0 0.0
    %1941 = vmatpush.msra.mxu0 0.0
    %1942 = vmatpush.msra.mxu0 0.0
    %1943 = vmatpush.msra.mxu0 0.0
    %1944 = vmatpush.msra.mxu0 0.0
    %1945 = vmatpush.msra.mxu0 0.0
    %1946 = vmatpush.msra.mxu0 0.0
    %1947 = vmatpush.msra.mxu0 0.0
    %1948 = vmatpush.msra.mxu0 0.0
    %1949 = vmatpush.msra.mxu0 0.0
    %1950 = vmatpush.msra.mxu0 0.0
    %1951 = vmatpush.msra.mxu0 %v1932
    %1952 = vmatmul.f32.gmra.mxu0 %v1929
    %v1953 = vpop.f32.mrf.mxu0
    %v1954 = vadd.f32 0.0, %v1953
    %1955 = vdwg.mxu0
    %1956 = vmatpush.msra.mxu0 0.0
    %1957 = vmatpush.msra.mxu0 0.0
    %1958 = vmatpush.msra.mxu0 0.0
    %1959 = vmatpush.msra.mxu0 0.0
    %1960 = vmatpush.msra.mxu0 0.0
    %1961 = vmatpush.msra.mxu0 0.0
    %1962 = vmatpush.msra.mxu0 0.0
    %1963 = vmatpush.msra.mxu0 0.0
    %1964 = vmatpush.msra.mxu0 0.0
    %1965 = vmatpush.msra.mxu0 0.0
    %1966 = vmatpush.msra.mxu0 0.0
    %1967 = vmatpush.msra.mxu0 0.0
    %1968 = vmatpush.msra.mxu0 0.0
    %1969 = vmatpush.msra.mxu0 0.0
    %1970 = vmatpush.msra.mxu0 0.0
    %1971 = vmatpush.msra.mxu0 %v1934
    %1972 = vmatmul.f32.gmra.mxu0 %v1929
    %v1973 = vpop.f32.mrf.mxu0
    %v1974 = vadd.f32 0.0, %v1973
    %1975 = vdwg.mxu0
    %v1976 = vperm.slane %v1954, 0
    %v1977 = vperm.slane %v1974, 0
    %v1978 = vmul.f32 %v1664, %v1976
    %v1979 = vmul.f32 %v1665, %v1977
    %v1980 = vmul.f32 %v1666, %v1976
    %v1981 = vmul.f32 %v1667, %v1977
    %v1982 = vmul.f32 %v1668, %v1976
    %v1983 = vmul.f32 %v1669, %v1977
    %v1984 = vmul.f32 %v1670, %v1976
    %v1985 = vmul.f32 %v1671, %v1977
    %v1986 = vmul.f32 %v1672, %v1976
    %v1987 = vmul.f32 %v1673, %v1977
    %v1988 = vmul.f32 %v1674, %v1976
    %v1989 = vmul.f32 %v1675, %v1977
    %v1990 = vmul.f32 %v1676, %v1976
    %v1991 = vmul.f32 %v1677, %v1977
    %v1992 = vmul.f32 %v1678, %v1976
    %v1993 = vmul.f32 %v1679, %v1977
    %v1994 = vmul.f32 %v1680, %v1976
    %v1995 = vmul.f32 %v1681, %v1977
    %v1996 = vmul.f32 %v1682, %v1976
    %v1997 = vmul.f32 %v1683, %v1977
    %v1998 = vmul.f32 %v1684, %v1976
    %v1999 = vmul.f32 %v1685, %v1977
    %v2000 = vmul.f32 %v1686, %v1976
    %v2001 = vmul.f32 %v1687, %v1977
    %v2002 = vmul.f32 %v1688, %v1976
    %v2003 = vmul.f32 %v1689, %v1977
    %v2004 = vmul.f32 %v1690, %v1976
    %v2005 = vmul.f32 %v1691, %v1977
    %v2006 = vmul.f32 %v1692, %v1976
    %v2007 = vmul.f32 %v1693, %v1977
    %v2008 = vmul.f32 %v1694, %v1976
    %v2009 = vmul.f32 %v1695, %v1977
    %v2010 = vperm.slane %v1954, 1
    %v2011 = vperm.slane %v1974, 1
    %v2012 = vadd.f32 %v1978, %v2010
    %v2013 = vadd.f32 %v1979, %v2011
    %v2014 = vadd.f32 %v1980, %v2010
    %v2015 = vadd.f32 %v1981, %v2011
    %v2016 = vadd.f32 %v1982, %v2010
    %v2017 = vadd.f32 %v1983, %v2011
    %v2018 = vadd.f32 %v1984, %v2010
    %v2019 = vadd.f32 %v1985, %v2011
    %v2020 = vadd.f32 %v1986, %v2010
    %v2021 = vadd.f32 %v1987, %v2011
    %v2022 = vadd.f32 %v1988, %v2010
    %v2023 = vadd.f32 %v1989, %v2011
    %v2024 = vadd.f32 %v1990, %v2010
    %v2025 = vadd.f32 %v1991, %v2011
    %v2026 = vadd.f32 %v1992, %v2010
    %v2027 = vadd.f32 %v1993, %v2011
    %v2028 = vadd.f32 %v1994, %v2010
    %v2029 = vadd.f32 %v1995, %v2011
    %v2030 = vadd.f32 %v1996, %v2010
    %v2031 = vadd.f32 %v1997, %v2011
    %v2032 = vadd.f32 %v1998, %v2010
    %v2033 = vadd.f32 %v1999, %v2011
    %v2034 = vadd.f32 %v2000, %v2010
    %v2035 = vadd.f32 %v2001, %v2011
    %v2036 = vadd.f32 %v2002, %v2010
    %v2037 = vadd.f32 %v2003, %v2011
    %v2038 = vadd.f32 %v2004, %v2010
    %v2039 = vadd.f32 %v2005, %v2011
    %v2040 = vadd.f32 %v2006, %v2010
    %v2041 = vadd.f32 %v2007, %v2011
    %v2042 = vadd.f32 %v2008, %v2010
    %v2043 = vadd.f32 %v2009, %v2011
    %v2044 = vmax.f32 %v2012, 0.0
    %v2045 = vmax.f32 %v2013, 0.0
    %v2046 = vmax.f32 %v2014, 0.0
    %v2047 = vmax.f32 %v2015, 0.0
    %v2048 = vmax.f32 %v2016, 0.0
    %v2049 = vmax.f32 %v2017, 0.0
    %v2050 = vmax.f32 %v2018, 0.0
    %v2051 = vmax.f32 %v2019, 0.0
    %v2052 = vmax.f32 %v2020, 0.0
    %v2053 = vmax.f32 %v2021, 0.0
    %v2054 = vmax.f32 %v2022, 0.0
    %v2055 = vmax.f32 %v2023, 0.0
    %v2056 = vmax.f32 %v2024, 0.0
    %v2057 = vmax.f32 %v2025, 0.0
    %v2058 = vmax.f32 %v2026, 0.0
    %v2059 = vmax.f32 %v2027, 0.0
    %v2060 = vmax.f32 %v2028, 0.0
    %v2061 = vmax.f32 %v2029, 0.0
    %v2062 = vmax.f32 %v2030, 0.0
    %v2063 = vmax.f32 %v2031, 0.0
    %v2064 = vmax.f32 %v2032, 0.0
    %v2065 = vmax.f32 %v2033, 0.0
    %v2066 = vmax.f32 %v2034, 0.0
    %v2067 = vmax.f32 %v2035, 0.0
    %v2068 = vmax.f32 %v2036, 0.0
    %v2069 = vmax.f32 %v2037, 0.0
    %v2070 = vmax.f32 %v2038, 0.0
    %v2071 = vmax.f32 %v2039, 0.0
    %v2072 = vmax.f32 %v2040, 0.0
    %v2073 = vmax.f32 %v2041, 0.0
    %v2074 = vmax.f32 %v2042, 0.0
    %v2075 = vmax.f32 %v2043, 0.0
    %v2076 = vmax.f32 %v2044, %v2045
    %v2077 = vmax.f32 %v2046, %v2047
    %v2078 = vmax.f32 %v2048, %v2049
    %v2079 = vmax.f32 %v2050, %v2051
    %v2080 = vmax.f32 %v2052, %v2053
    %v2081 = vmax.f32 %v2054, %v2055
    %v2082 = vmax.f32 %v2056, %v2057
    %v2083 = vmax.f32 %v2058, %v2059
    %v2084 = vmax.f32 %v2060, %v2061
    %v2085 = vmax.f32 %v2062, %v2063
    %v2086 = vmax.f32 %v2064, %v2065
    %v2087 = vmax.f32 %v2066, %v2067
    %v2088 = vmax.f32 %v2068, %v2069
    %v2089 = vmax.f32 %v2070, %v2071
    %v2090 = vmax.f32 %v2072, %v2073
    %v2091 = vmax.f32 %v2074, %v2075
    %v2108 = vrot.slane %v2076, 2
    %v2109 = vrot.slane %v2076, 4
    %v2110 = vrot.slane %v2076, 6
    %v2111 = vrot.slane %v2077, 2
    %v2112 = vrot.slane %v2077, 4
    %v2113 = vrot.slane %v2077, 6
    %v2114 = vrot.slane %v2078, 2
    %v2115 = vrot.slane %v2078, 4
    %v2116 = vrot.slane %v2078, 6
    %v2117 = vrot.slane %v2079, 2
    %v2118 = vrot.slane %v2079, 4
    %v2119 = vrot.slane %v2079, 6
    %v2120 = vrot.slane %v2080, 2
    %v2121 = vrot.slane %v2080, 4
    %v2122 = vrot.slane %v2080, 6
    %v2123 = vrot.slane %v2081, 2
    %v2124 = vrot.slane %v2081, 4
    %v2125 = vrot.slane %v2081, 6
    %v2126 = vrot.slane %v2082, 2
    %v2127 = vrot.slane %v2082, 4
    %v2128 = vrot.slane %v2082, 6
    %v2129 = vrot.slane %v2083, 2
    %v2130 = vrot.slane %v2083, 4
    %v2131 = vrot.slane %v2083, 6
    %v2132 = vrot.slane %v2084, 2
    %v2133 = vrot.slane %v2084, 4
    %v2134 = vrot.slane %v2084, 6
    %v2135 = vrot.slane %v2085, 2
    %v2136 = vrot.slane %v2085, 4
    %v2137 = vrot.slane %v2085, 6
    %v2138 = vrot.slane %v2086, 2
    %v2139 = vrot.slane %v2086, 4
    %v2140 = vrot.slane %v2086, 6
    %v2141 = vrot.slane %v2087, 2
    %v2142 = vrot.slane %v2087, 4
    %v2143 = vrot.slane %v2087, 6
    %v2144 = vrot.slane %v2088, 2
    %v2145 = vrot.slane %v2088, 4
    %v2146 = vrot.slane %v2088, 6
    %v2147 = vrot.slane %v2089, 2
    %v2148 = vrot.slane %v2089, 4
    %v2149 = vrot.slane %v2089, 6
    %v2150 = vrot.slane %v2090, 2
    %v2151 = vrot.slane %v2090, 4
    %v2152 = vrot.slane %v2090, 6
    %v2153 = vrot.slane %v2091, 2
    %v2154 = vrot.slane %v2091, 4
    %v2155 = vrot.slane %v2091, 6
    %vm2204 = vcmask 1041408
    %v2205 = vsel %vm2204, %v2076, -inf
    %v2206 = vrot.slane %v2205, 4
    %v2207 = vmax.f32 %v2205, %v2206
    %v2208 = vrot.slane %v2207, 2
    %v2209 = vmax.f32 %v2207, %v2208
    %v2210 = vrot.slane %v2209, 1
    %v2211 = vmax.f32 %v2209, %v2210
    %v2212 = vsel %vm2204, %v2108, -inf
    %v2213 = vrot.slane %v2212, 4
    %v2214 = vmax.f32 %v2212, %v2213
    %v2215 = vrot.slane %v2214, 2
    %v2216 = vmax.f32 %v2214, %v2215
    %v2217 = vrot.slane %v2216, 1
    %v2218 = vmax.f32 %v2216, %v2217
    %v2219 = vsel %vm2204, %v2109, -inf
    %v2220 = vrot.slane %v2219, 4
    %v2221 = vmax.f32 %v2219, %v2220
    %v2222 = vrot.slane %v2221, 2
    %v2223 = vmax.f32 %v2221, %v2222
    %v2224 = vrot.slane %v2223, 1
    %v2225 = vmax.f32 %v2223, %v2224
    %v2226 = vsel %vm2204, %v2110, -inf
    %v2227 = vrot.slane %v2226, 4
    %v2228 = vmax.f32 %v2226, %v2227
    %v2229 = vrot.slane %v2228, 2
    %v2230 = vmax.f32 %v2228, %v2229
    %v2231 = vrot.slane %v2230, 1
    %v2232 = vmax.f32 %v2230, %v2231
    %v2233 = vsel %vm2204, %v2077, -inf
    %v2234 = vrot.slane %v2233, 4
    %v2235 = vmax.f32 %v2233, %v2234
    %v2236 = vrot.slane %v2235, 2
    %v2237 = vmax.f32 %v2235, %v2236
    %v2238 = vrot.slane %v2237, 1
    %v2239 = vmax.f32 %v2237, %v2238
    %v2240 = vsel %vm2204, %v2111, -inf
    %v2241 = vrot.slane %v2240, 4
    %v2242 = vmax.f32 %v2240, %v2241
    %v2243 = vrot.slane %v2242, 2
    %v2244 = vmax.f32 %v2242, %v2243
    %v2245 = vrot.slane %v2244, 1
    %v2246 = vmax.f32 %v2244, %v2245
    %v2247 = vsel %vm2204, %v2112, -inf
    %v2248 = vrot.slane %v2247, 4
    %v2249 = vmax.f32 %v2247, %v2248
    %v2250 = vrot.slane %v2249, 2
    %v2251 = vmax.f32 %v2249, %v2250
    %v2252 = vrot.slane %v2251, 1
    %v2253 = vmax.f32 %v2251, %v2252
    %v2254 = vsel %vm2204, %v2113, -inf
    %v2255 = vrot.slane %v2254, 4
    %v2256 = vmax.f32 %v2254, %v2255
    %v2257 = vrot.slane %v2256, 2
    %v2258 = vmax.f32 %v2256, %v2257
    %v2259 = vrot.slane %v2258, 1
    %v2260 = vmax.f32 %v2258, %v2259
    %v2261 = vsel %vm2204, %v2078, -inf
    %v2262 = vrot.slane %v2261, 4
    %v2263 = vmax.f32 %v2261, %v2262
    %v2264 = vrot.slane %v2263, 2
    %v2265 = vmax.f32 %v2263, %v2264
    %v2266 = vrot.slane %v2265, 1
    %v2267 = vmax.f32 %v2265, %v2266
    %v2268 = vsel %vm2204, %v2114, -inf
    %v2269 = vrot.slane %v2268, 4
    %v2270 = vmax.f32 %v2268, %v2269
    %v2271 = vrot.slane %v2270, 2
    %v2272 = vmax.f32 %v2270, %v2271
    %v2273 = vrot.slane %v2272, 1
    %v2274 = vmax.f32 %v2272, %v2273
    %v2275 = vsel %vm2204, %v2115, -inf
    %v2276 = vrot.slane %v2275, 4
    %v2277 = vmax.f32 %v2275, %v2276
    %v2278 = vrot.slane %v2277, 2
    %v2279 = vmax.f32 %v2277, %v2278
    %v2280 = vrot.slane %v2279, 1
    %v2281 = vmax.f32 %v2279, %v2280
    %v2282 = vsel %vm2204, %v2116, -inf
    %v2283 = vrot.slane %v2282, 4
    %v2284 = vmax.f32 %v2282, %v2283
    %v2285 = vrot.slane %v2284, 2
    %v2286 = vmax.f32 %v2284, %v2285
    %v2287 = vrot.slane %v2286, 1
    %v2288 = vmax.f32 %v2286, %v2287
    %v2289 = vsel %vm2204, %v2079, -inf
    %v2290 = vrot.slane %v2289, 4
    %v2291 = vmax.f32 %v2289, %v2290
    %v2292 = vrot.slane %v2291, 2
    %v2293 = vmax.f32 %v2291, %v2292
    %v2294 = vrot.slane %v2293, 1
    %v2295 = vmax.f32 %v2293, %v2294
    %v2296 = vsel %vm2204, %v2117, -inf
    %v2297 = vrot.slane %v2296, 4
    %v2298 = vmax.f32 %v2296, %v2297
    %v2299 = vrot.slane %v2298, 2
    %v2300 = vmax.f32 %v2298, %v2299
    %v2301 = vrot.slane %v2300, 1
    %v2302 = vmax.f32 %v2300, %v2301
    %v2303 = vsel %vm2204, %v2118, -inf
    %v2304 = vrot.slane %v2303, 4
    %v2305 = vmax.f32 %v2303, %v2304
    %v2306 = vrot.slane %v2305, 2
    %v2307 = vmax.f32 %v2305, %v2306
    %v2308 = vrot.slane %v2307, 1
    %v2309 = vmax.f32 %v2307, %v2308
    %v2310 = vsel %vm2204, %v2119, -inf
    %v2311 = vrot.slane %v2310, 4
    %v2312 = vmax.f32 %v2310, %v2311
    %v2313 = vrot.slane %v2312, 2
    %v2314 = vmax.f32 %v2312, %v2313
    %v2315 = vrot.slane %v2314, 1
    %v2316 = vmax.f32 %v2314, %v2315
    %v2317 = vsel %vm2204, %v2080, -inf
    %v2318 = vrot.slane %v2317, 4
    %v2319 = vmax.f32 %v2317, %v2318
    %v2320 = vrot.slane %v2319, 2
    %v2321 = vmax.f32 %v2319, %v2320
    %v2322 = vrot.slane %v2321, 1
    %v2323 = vmax.f32 %v2321, %v2322
    %v2324 = vsel %vm2204, %v2120, -inf
    %v2325 = vrot.slane %v2324, 4
    %v2326 = vmax.f32 %v2324, %v2325
    %v2327 = vrot.slane %v2326, 2
    %v2328 = vmax.f32 %v2326, %v2327
    %v2329 = vrot.slane %v2328, 1
    %v2330 = vmax.f32 %v2328, %v2329
    %v2331 = vsel %vm2204, %v2121, -inf
    %v2332 = vrot.slane %v2331, 4
    %v2333 = vmax.f32 %v2331, %v2332
    %v2334 = vrot.slane %v2333, 2
    %v2335 = vmax.f32 %v2333, %v2334
    %v2336 = vrot.slane %v2335, 1
    %v2337 = vmax.f32 %v2335, %v2336
    %v2338 = vsel %vm2204, %v2122, -inf
    %v2339 = vrot.slane %v2338, 4
    %v2340 = vmax.f32 %v2338, %v2339
    %v2341 = vrot.slane %v2340, 2
    %v2342 = vmax.f32 %v2340, %v2341
    %v2343 = vrot.slane %v2342, 1
    %v2344 = vmax.f32 %v2342, %v2343
    %v2345 = vsel %vm2204, %v2081, -inf
    %v2346 = vrot.slane %v2345, 4
    %v2347 = vmax.f32 %v2345, %v2346
    %v2348 = vrot.slane %v2347, 2
    %v2349 = vmax.f32 %v2347, %v2348
    %v2350 = vrot.slane %v2349, 1
    %v2351 = vmax.f32 %v2349, %v2350
    %v2352 = vsel %vm2204, %v2123, -inf
    %v2353 = vrot.slane %v2352, 4
    %v2354 = vmax.f32 %v2352, %v2353
    %v2355 = vrot.slane %v2354, 2
    %v2356 = vmax.f32 %v2354, %v2355
    %v2357 = vrot.slane %v2356, 1
    %v2358 = vmax.f32 %v2356, %v2357
    %v2359 = vsel %vm2204, %v2124, -inf
    %v2360 = vrot.slane %v2359, 4
    %v2361 = vmax.f32 %v2359, %v2360
    %v2362 = vrot.slane %v2361, 2
    %v2363 = vmax.f32 %v2361, %v2362
    %v2364 = vrot.slane %v2363, 1
    %v2365 = vmax.f32 %v2363, %v2364
    %v2366 = vsel %vm2204, %v2125, -inf
    %v2367 = vrot.slane %v2366, 4
    %v2368 = vmax.f32 %v2366, %v2367
    %v2369 = vrot.slane %v2368, 2
    %v2370 = vmax.f32 %v2368, %v2369
    %v2371 = vrot.slane %v2370, 1
    %v2372 = vmax.f32 %v2370, %v2371
    %v2373 = vsel %vm2204, %v2082, -inf
    %v2374 = vrot.slane %v2373, 4
    %v2375 = vmax.f32 %v2373, %v2374
    %v2376 = vrot.slane %v2375, 2
    %v2377 = vmax.f32 %v2375, %v2376
    %v2378 = vrot.slane %v2377, 1
    %v2379 = vmax.f32 %v2377, %v2378
    %v2380 = vsel %vm2204, %v2126, -inf
    %v2381 = vrot.slane %v2380, 4
    %v2382 = vmax.f32 %v2380, %v2381
    %v2383 = vrot.slane %v2382, 2
    %v2384 = vmax.f32 %v2382, %v2383
    %v2385 = vrot.slane %v2384, 1
    %v2386 = vmax.f32 %v2384, %v2385
    %v2387 = vsel %vm2204, %v2127, -inf
    %v2388 = vrot.slane %v2387, 4
    %v2389 = vmax.f32 %v2387, %v2388
    %v2390 = vrot.slane %v2389, 2
    %v2391 = vmax.f32 %v2389, %v2390
    %v2392 = vrot.slane %v2391, 1
    %v2393 = vmax.f32 %v2391, %v2392
    %v2394 = vsel %vm2204, %v2128, -inf
    %v2395 = vrot.slane %v2394, 4
    %v2396 = vmax.f32 %v2394, %v2395
    %v2397 = vrot.slane %v2396, 2
    %v2398 = vmax.f32 %v2396, %v2397
    %v2399 = vrot.slane %v2398, 1
    %v2400 = vmax.f32 %v2398, %v2399
    %v2401 = vsel %vm2204, %v2083, -inf
    %v2402 = vrot.slane %v2401, 4
    %v2403 = vmax.f32 %v2401, %v2402
    %v2404 = vrot.slane %v2403, 2
    %v2405 = vmax.f32 %v2403, %v2404
    %v2406 = vrot.slane %v2405, 1
    %v2407 = vmax.f32 %v2405, %v2406
    %v2408 = vsel %vm2204, %v2129, -inf
    %v2409 = vrot.slane %v2408, 4
    %v2410 = vmax.f32 %v2408, %v2409
    %v2411 = vrot.slane %v2410, 2
    %v2412 = vmax.f32 %v2410, %v2411
    %v2413 = vrot.slane %v2412, 1
    %v2414 = vmax.f32 %v2412, %v2413
    %v2415 = vsel %vm2204, %v2130, -inf
    %v2416 = vrot.slane %v2415, 4
    %v2417 = vmax.f32 %v2415, %v2416
    %v2418 = vrot.slane %v2417, 2
    %v2419 = vmax.f32 %v2417, %v2418
    %v2420 = vrot.slane %v2419, 1
    %v2421 = vmax.f32 %v2419, %v2420
    %v2422 = vsel %vm2204, %v2131, -inf
    %v2423 = vrot.slane %v2422, 4
    %v2424 = vmax.f32 %v2422, %v2423
    %v2425 = vrot.slane %v2424, 2
    %v2426 = vmax.f32 %v2424, %v2425
    %v2427 = vrot.slane %v2426, 1
    %v2428 = vmax.f32 %v2426, %v2427
    %v2429 = vsel %vm2204, %v2084, -inf
    %v2430 = vrot.slane %v2429, 4
    %v2431 = vmax.f32 %v2429, %v2430
    %v2432 = vrot.slane %v2431, 2
    %v2433 = vmax.f32 %v2431, %v2432
    %v2434 = vrot.slane %v2433, 1
    %v2435 = vmax.f32 %v2433, %v2434
    %v2436 = vsel %vm2204, %v2132, -inf
    %v2437 = vrot.slane %v2436, 4
    %v2438 = vmax.f32 %v2436, %v2437
    %v2439 = vrot.slane %v2438, 2
    %v2440 = vmax.f32 %v2438, %v2439
    %v2441 = vrot.slane %v2440, 1
    %v2442 = vmax.f32 %v2440, %v2441
    %v2443 = vsel %vm2204, %v2133, -inf
    %v2444 = vrot.slane %v2443, 4
    %v2445 = vmax.f32 %v2443, %v2444
    %v2446 = vrot.slane %v2445, 2
    %v2447 = vmax.f32 %v2445, %v2446
    %v2448 = vrot.slane %v2447, 1
    %v2449 = vmax.f32 %v2447, %v2448
    %v2450 = vsel %vm2204, %v2134, -inf
    %v2451 = vrot.slane %v2450, 4
    %v2452 = vmax.f32 %v2450, %v2451
    %v2453 = vrot.slane %v2452, 2
    %v2454 = vmax.f32 %v2452, %v2453
    %v2455 = vrot.slane %v2454, 1
    %v2456 = vmax.f32 %v2454, %v2455
    %v2457 = vsel %vm2204, %v2085, -inf
    %v2458 = vrot.slane %v2457, 4
    %v2459 = vmax.f32 %v2457, %v2458
    %v2460 = vrot.slane %v2459, 2
    %v2461 = vmax.f32 %v2459, %v2460
    %v2462 = vrot.slane %v2461, 1
    %v2463 = vmax.f32 %v2461, %v2462
    %v2464 = vsel %vm2204, %v2135, -inf
    %v2465 = vrot.slane %v2464, 4
    %v2466 = vmax.f32 %v2464, %v2465
    %v2467 = vrot.slane %v2466, 2
    %v2468 = vmax.f32 %v2466, %v2467
    %v2469 = vrot.slane %v2468, 1
    %v2470 = vmax.f32 %v2468, %v2469
    %v2471 = vsel %vm2204, %v2136, -inf
    %v2472 = vrot.slane %v2471, 4
    %v2473 = vmax.f32 %v2471, %v2472
    %v2474 = vrot.slane %v2473, 2
    %v2475 = vmax.f32 %v2473, %v2474
    %v2476 = vrot.slane %v2475, 1
    %v2477 = vmax.f32 %v2475, %v2476
    %v2478 = vsel %vm2204, %v2137, -inf
    %v2479 = vrot.slane %v2478, 4
    %v2480 = vmax.f32 %v2478, %v2479
    %v2481 = vrot.slane %v2480, 2
    %v2482 = vmax.f32 %v2480, %v2481
    %v2483 = vrot.slane %v2482, 1
    %v2484 = vmax.f32 %v2482, %v2483
    %v2485 = vsel %vm2204, %v2086, -inf
    %v2486 = vrot.slane %v2485, 4
    %v2487 = vmax.f32 %v2485, %v2486
    %v2488 = vrot.slane %v2487, 2
    %v2489 = vmax.f32 %v2487, %v2488
    %v2490 = vrot.slane %v2489, 1
    %v2491 = vmax.f32 %v2489, %v2490
    %v2492 = vsel %vm2204, %v2138, -inf
    %v2493 = vrot.slane %v2492, 4
    %v2494 = vmax.f32 %v2492, %v2493
    %v2495 = vrot.slane %v2494, 2
    %v2496 = vmax.f32 %v2494, %v2495
    %v2497 = vrot.slane %v2496, 1
    %v2498 = vmax.f32 %v2496, %v2497
    %v2499 = vsel %vm2204, %v2139, -inf
    %v2500 = vrot.slane %v2499, 4
    %v2501 = vmax.f32 %v2499, %v2500
    %v2502 = vrot.slane %v2501, 2
    %v2503 = vmax.f32 %v2501, %v2502
    %v2504 = vrot.slane %v2503, 1
    %v2505 = vmax.f32 %v2503, %v2504
    %v2506 = vsel %vm2204, %v2140, -inf
    %v2507 = vrot.slane %v2506, 4
    %v2508 = vmax.f32 %v2506, %v2507
    %v2509 = vrot.slane %v2508, 2
    %v2510 = vmax.f32 %v2508, %v2509
    %v2511 = vrot.slane %v2510, 1
    %v2512 = vmax.f32 %v2510, %v2511
    %v2513 = vsel %vm2204, %v2087, -inf
    %v2514 = vrot.slane %v2513, 4
    %v2515 = vmax.f32 %v2513, %v2514
    %v2516 = vrot.slane %v2515, 2
    %v2517 = vmax.f32 %v2515, %v2516
    %v2518 = vrot.slane %v2517, 1
    %v2519 = vmax.f32 %v2517, %v2518
    %v2520 = vsel %vm2204, %v2141, -inf
    %v2521 = vrot.slane %v2520, 4
    %v2522 = vmax.f32 %v2520, %v2521
    %v2523 = vrot.slane %v2522, 2
    %v2524 = vmax.f32 %v2522, %v2523
    %v2525 = vrot.slane %v2524, 1
    %v2526 = vmax.f32 %v2524, %v2525
    %v2527 = vsel %vm2204, %v2142, -inf
    %v2528 = vrot.slane %v2527, 4
    %v2529 = vmax.f32 %v2527, %v2528
    %v2530 = vrot.slane %v2529, 2
    %v2531 = vmax.f32 %v2529, %v2530
    %v2532 = vrot.slane %v2531, 1
    %v2533 = vmax.f32 %v2531, %v2532
    %v2534 = vsel %vm2204, %v2143, -inf
    %v2535 = vrot.slane %v2534, 4
    %v2536 = vmax.f32 %v2534, %v2535
    %v2537 = vrot.slane %v2536, 2
    %v2538 = vmax.f32 %v2536, %v2537
    %v2539 = vrot.slane %v2538, 1
    %v2540 = vmax.f32 %v2538, %v2539
    %v2541 = vsel %vm2204, %v2088, -inf
    %v2542 = vrot.slane %v2541, 4
    %v2543 = vmax.f32 %v2541, %v2542
    %v2544 = vrot.slane %v2543, 2
    %v2545 = vmax.f32 %v2543, %v2544
    %v2546 = vrot.slane %v2545, 1
    %v2547 = vmax.f32 %v2545, %v2546
    %v2548 = vsel %vm2204, %v2144, -inf
    %v2549 = vrot.slane %v2548, 4
    %v2550 = vmax.f32 %v2548, %v2549
    %v2551 = vrot.slane %v2550, 2
    %v2552 = vmax.f32 %v2550, %v2551
    %v2553 = vrot.slane %v2552, 1
    %v2554 = vmax.f32 %v2552, %v2553
    %v2555 = vsel %vm2204, %v2145, -inf
    %v2556 = vrot.slane %v2555, 4
    %v2557 = vmax.f32 %v2555, %v2556
    %v2558 = vrot.slane %v2557, 2
    %v2559 = vmax.f32 %v2557, %v2558
    %v2560 = vrot.slane %v2559, 1
    %v2561 = vmax.f32 %v2559, %v2560
    %v2562 = vsel %vm2204, %v2146, -inf
    %v2563 = vrot.slane %v2562, 4
    %v2564 = vmax.f32 %v2562, %v2563
    %v2565 = vrot.slane %v2564, 2
    %v2566 = vmax.f32 %v2564, %v2565
    %v2567 = vrot.slane %v2566, 1
    %v2568 = vmax.f32 %v2566, %v2567
    %v2569 = vsel %vm2204, %v2089, -inf
    %v2570 = vrot.slane %v2569, 4
    %v2571 = vmax.f32 %v2569, %v2570
    %v2572 = vrot.slane %v2571, 2
    %v2573 = vmax.f32 %v2571, %v2572
    %v2574 = vrot.slane %v2573, 1
    %v2575 = vmax.f32 %v2573, %v2574
    %v2576 = vsel %vm2204, %v2147, -inf
    %v2577 = vrot.slane %v2576, 4
    %v2578 = vmax.f32 %v2576, %v2577
    %v2579 = vrot.slane %v2578, 2
    %v2580 = vmax.f32 %v2578, %v2579
    %v2581 = vrot.slane %v2580, 1
    %v2582 = vmax.f32 %v2580, %v2581
    %v2583 = vsel %vm2204, %v2148, -inf
    %v2584 = vrot.slane %v2583, 4
    %v2585 = vmax.f32 %v2583, %v2584
    %v2586 = vrot.slane %v2585, 2
    %v2587 = vmax.f32 %v2585, %v2586
    %v2588 = vrot.slane %v2587, 1
    %v2589 = vmax.f32 %v2587, %v2588
    %v2590 = vsel %vm2204, %v2149, -inf
    %v2591 = vrot.slane %v2590, 4
    %v2592 = vmax.f32 %v2590, %v2591
    %v2593 = vrot.slane %v2592, 2
    %v2594 = vmax.f32 %v2592, %v2593
    %v2595 = vrot.slane %v2594, 1
    %v2596 = vmax.f32 %v2594, %v2595
    %v2597 = vsel %vm2204, %v2090, -inf
    %v2598 = vrot.slane %v2597, 4
    %v2599 = vmax.f32 %v2597, %v2598
    %v2600 = vrot.slane %v2599, 2
    %v2601 = vmax.f32 %v2599, %v2600
    %v2602 = vrot.slane %v2601, 1
    %v2603 = vmax.f32 %v2601, %v2602
    %v2604 = vsel %vm2204, %v2150, -inf
    %v2605 = vrot.slane %v2604, 4
    %v2606 = vmax.f32 %v2604, %v2605
    %v2607 = vrot.slane %v2606, 2
    %v2608 = vmax.f32 %v2606, %v2607
    %v2609 = vrot.slane %v2608, 1
    %v2610 = vmax.f32 %v2608, %v2609
    %v2611 = vsel %vm2204, %v2151, -inf
    %v2612 = vrot.slane %v2611, 4
    %v2613 = vmax.f32 %v2611, %v2612
    %v2614 = vrot.slane %v2613, 2
    %v2615 = vmax.f32 %v2613, %v2614
    %v2616 = vrot.slane %v2615, 1
    %v2617 = vmax.f32 %v2615, %v2616
    %v2618 = vsel %vm2204, %v2152, -inf
    %v2619 = vrot.slane %v2618, 4
    %v2620 = vmax.f32 %v2618, %v2619
    %v2621 = vrot.slane %v2620, 2
    %v2622 = vmax.f32 %v2620, %v2621
    %v2623 = vrot.slane %v2622, 1
    %v2624 = vmax.f32 %v2622, %v2623
    %v2625 = vsel %vm2204, %v2091, -inf
    %v2626 = vrot.slane %v2625, 4
    %v2627 = vmax.f32 %v2625, %v2626
    %v2628 = vrot.slane %v2627, 2
    %v2629 = vmax.f32 %v2627, %v2628
    %v2630 = vrot.slane %v2629, 1
    %v2631 = vmax.f32 %v2629, %v2630
    %v2632 = vsel %vm2204, %v2153, -inf
    %v2633 = vrot.slane %v2632, 4
    %v2634 = vmax.f32 %v2632, %v2633
    %v2635 = vrot.slane %v2634, 2
    %v2636 = vmax.f32 %v2634, %v2635
    %v2637 = vrot.slane %v2636, 1
    %v2638 = vmax.f32 %v2636, %v2637
    %v2639 = vsel %vm2204, %v2154, -inf
    %v2640 = vrot.slane %v2639, 4
    %v2641 = vmax.f32 %v2639, %v2640
    %v2642 = vrot.slane %v2641, 2
    %v2643 = vmax.f32 %v2641, %v2642
    %v2644 = vrot.slane %v2643, 1
    %v2645 = vmax.f32 %v2643, %v2644
    %v2646 = vsel %vm2204, %v2155, -inf
    %v2647 = vrot.slane %v2646, 4
    %v2648 = vmax.f32 %v2646, %v2647
    %v2649 = vrot.slane %v2648, 2
    %v2650 = vmax.f32 %v2648, %v2649
    %v2651 = vrot.slane %v2650, 1
    %v2652 = vmax.f32 %v2650, %v2651
    %2653 = vst [vmem:[#allocation2] sm:$0x1] 0.0
    %2654 = vst [vmem:[#allocation2 + $0x28] sm:$0x1] 0.0
    %2655 = vst [vmem:[#allocation2 + $0x21] sm:$0x1] 0.0
    %2656 = vst [vmem:[#allocation2 + $0x49] sm:$0x1] 0.0
    %vm2721 = vcmask 1041409
    %v2722 = vsel %vm2721, %v2218, %v2211
    %vm2723 = vcmask 1042434
    %v2724 = vsel %vm2723, %v2225, %v2722
    %vm2725 = vcmask 1043459
    %v2726 = vsel %vm2725, %v2232, %v2724
    %vm2727 = vcmask 1044484
    %v2728 = vsel %vm2727, %v2239, %v2726
    %vm2729 = vcmask 1045509
    %v2730 = vsel %vm2729, %v2246, %v2728
    %vm2731 = vcmask 1046534
    %v2732 = vsel %vm2731, %v2253, %v2730
    %vm2733 = vcmask 1047559
    %v2734 = vsel %vm2733, %v2260, %v2732
    %v2735 = vsel %vm2721, %v2274, %v2267
    %v2736 = vsel %vm2723, %v2281, %v2735
    %v2737 = vsel %vm2725, %v2288, %v2736
    %v2738 = vsel %vm2727, %v2295, %v2737
    %v2739 = vsel %vm2729, %v2302, %v2738
    %v2740 = vsel %vm2731, %v2309, %v2739
    %v2741 = vsel %vm2733, %v2316, %v2740
    %v2742 = vsel %vm2721, %v2330, %v2323
    %v2743 = vsel %vm2723, %v2337, %v2742
    %v2744 = vsel %vm2725, %v2344, %v2743
    %v2745 = vsel %vm2727, %v2351, %v2744
    %v2746 = vsel %vm2729, %v2358, %v2745
    %v2747 = vsel %vm2731, %v2365, %v2746
    %v2748 = vsel %vm2733, %v2372, %v2747
    %v2749 = vsel %vm2721, %v2386, %v2379
    %v2750 = vsel %vm2723, %v2393, %v2749
    %v2751 = vsel %vm2725, %v2400, %v2750
    %v2752 = vsel %vm2727, %v2407, %v2751
    %v2753 = vsel %vm2729, %v2414, %v2752
    %v2754 = vsel %vm2731, %v2421, %v2753
    %v2755 = vsel %vm2733, %v2428, %v2754
    %v2756 = vsel %vm2721, %v2442, %v2435
    %v2757 = vsel %vm2723, %v2449, %v2756
    %v2758 = vsel %vm2725, %v2456, %v2757
    %v2759 = vsel %vm2727, %v2463, %v2758
    %v2760 = vsel %vm2729, %v2470, %v2759
    %v2761 = vsel %vm2731, %v2477, %v2760
    %v2762 = vsel %vm2733, %v2484, %v2761
    %v2763 = vsel %vm2721, %v2498, %v2491
    %v2764 = vsel %vm2723, %v2505, %v2763
    %v2765 = vsel %vm2725, %v2512, %v2764
    %v2766 = vsel %vm2727, %v2519, %v2765
    %v2767 = vsel %vm2729, %v2526, %v2766
    %v2768 = vsel %vm2731, %v2533, %v2767
    %v2769 = vsel %vm2733, %v2540, %v2768
    %v2770 = vsel %vm2721, %v2554, %v2547
    %v2771 = vsel %vm2723, %v2561, %v2770
    %v2772 = vsel %vm2725, %v2568, %v2771
    %v2773 = vsel %vm2727, %v2575, %v2772
    %v2774 = vsel %vm2729, %v2582, %v2773
    %v2775 = vsel %vm2731, %v2589, %v2774
    %v2776 = vsel %vm2733, %v2596, %v2775
    %v2777 = vsel %vm2721, %v2610, %v2603
    %v2778 = vsel %vm2723, %v2617, %v2777
    %v2779 = vsel %vm2725, %v2624, %v2778
    %v2780 = vsel %vm2727, %v2631, %v2779
    %v2781 = vsel %vm2729, %v2638, %v2780
    %v2782 = vsel %vm2731, %v2645, %v2781
    %v2783 = vsel %vm2733, %v2652, %v2782
    %2792 = vst [vmem:[#allocation2 + $0x1] sm:$0xff] %v2734
    %2793 = vst [vmem:[#allocation2 + $0x9] sm:$0xff] %v2741
    %2794 = vst [vmem:[#allocation2 + $0x11] sm:$0xff] %v2748
    %2795 = vst [vmem:[#allocation2 + $0x19] sm:$0xff] %v2755
    %2796 = vst [vmem:[#allocation2 + $0x29] sm:$0xff] %v2762
    %2797 = vst [vmem:[#allocation2 + $0x31] sm:$0xff] %v2769
    %2798 = vst [vmem:[#allocation2 + $0x39] sm:$0xff] %v2776
    %2799 = vst [vmem:[#allocation2 + $0x41] sm:$0xff] %v2783
    %v2800 = vld [vmem:[#allocation2] sm:$0xff]
    %v2801 = vld [vmem:[#allocation2 + $0x8] sm:$0xff]
    %v2802 = vld [vmem:[#allocation2 + $0x10] sm:$0xff]
    %v2803 = vld [vmem:[#allocation2 + $0x18] sm:$0xff]
    %v2804 = vld [vmem:[#allocation2 + $0x20] sm:$0x3]
    %v2805 = vld [vmem:[#allocation2 + $0x28] sm:$0xff]
    %v2806 = vld [vmem:[#allocation2 + $0x30] sm:$0xff]
    %v2807 = vld [vmem:[#allocation2 + $0x38] sm:$0xff]
    %v2808 = vld [vmem:[#allocation2 + $0x40] sm:$0xff]
    %v2809 = vld [vmem:[#allocation2 + $0x48] sm:$0x3]
    %v2810 = vpack.c.bf16 %v2801, %v2800
    %v2811 = vpack.c.bf16 %v2803, %v2802
    %v2812 = vpack.c.bf16 %v2806, %v2805
    %v2813 = vpack.c.bf16 %v2808, %v2807
    %v2814 = vld [vmem:[%s2] sm:$0xff]
    %v2815 = vld [vmem:[%s2 + $0x8] sm:$0xff]
    %v2816 = vld [vmem:[%s2 + $0x10] sm:$0xff]
    %v2817 = vld [vmem:[%s2 + $0x18] sm:$0xff]
    %v2818 = vld [vmem:[%s2 + $0x20] sm:$0xff]
    %v2819 = vld [vmem:[%s2 + $0x28] sm:$0xff]
    %v2820 = vld [vmem:[%s2 + $0x30] sm:$0xff]
    %v2821 = vld [vmem:[%s2 + $0x38] sm:$0xff]
    %v2822 = vld [vmem:[%s2 + $0x40] sm:$0xff]
    %v2823 = vld [vmem:[%s2 + $0x48] sm:$0xff]
    %v2824 = vld [vmem:[%s2 + $0x50] sm:$0xff]
    %v2825 = vld [vmem:[%s2 + $0x58] sm:$0xff]
    %v2826 = vld [vmem:[%s2 + $0x60] sm:$0xff]
    %v2827 = vld [vmem:[%s2 + $0x68] sm:$0xff]
    %v2828 = vld [vmem:[%s2 + $0x70] sm:$0xff]
    %v2829 = vld [vmem:[%s2 + $0x78] sm:$0xff]
    %vm2840 = vcmask 1046528
    %v2841 = vrot.slane %v2800, 1
    %v2842 = vrot.slane %v2801, 1
    %v2843 = vsel %vm2840, %v2841, %v2842
    %v2844 = vrot.slane %v2802, 1
    %v2845 = vsel %vm2840, %v2842, %v2844
    %v2846 = vrot.slane %v2803, 1
    %v2847 = vsel %vm2840, %v2844, %v2846
    %v2848 = vrot.slane %v2804, 1
    %v2849 = vsel %vm2840, %v2846, %v2848
    %v2850 = vrot.slane %v2805, 1
    %v2851 = vrot.slane %v2806, 1
    %v2852 = vsel %vm2840, %v2850, %v2851
    %v2853 = vrot.slane %v2807, 1
    %v2854 = vsel %vm2840, %v2851, %v2853
    %v2855 = vrot.slane %v2808, 1
    %v2856 = vsel %vm2840, %v2853, %v2855
    %v2857 = vrot.slane %v2809, 1
    %v2858 = vsel %vm2840, %v2855, %v2857
    %v2867 = vpack.c.bf16 %v2845, %v2843
    %v2868 = vpack.c.bf16 %v2849, %v2847
    %v2869 = vpack.c.bf16 %v2854, %v2852
    %v2870 = vpack.c.bf16 %v2858, %v2856
    %s2871 = scalar_lea.vmem %s2, 128
    %v2872 = vld [vmem:[%s2871] sm:$0xff]
    %v2873 = vld [vmem:[%s2871 + $0x8] sm:$0xff]
    %v2874 = vld [vmem:[%s2871 + $0x10] sm:$0xff]
    %v2875 = vld [vmem:[%s2871 + $0x18] sm:$0xff]
    %v2876 = vld [vmem:[%s2871 + $0x20] sm:$0xff]
    %v2877 = vld [vmem:[%s2871 + $0x28] sm:$0xff]
    %v2878 = vld [vmem:[%s2871 + $0x30] sm:$0xff]
    %v2879 = vld [vmem:[%s2871 + $0x38] sm:$0xff]
    %v2880 = vld [vmem:[%s2871 + $0x40] sm:$0xff]
    %v2881 = vld [vmem:[%s2871 + $0x48] sm:$0xff]
    %v2882 = vld [vmem:[%s2871 + $0x50] sm:$0xff]
    %v2883 = vld [vmem:[%s2871 + $0x58] sm:$0xff]
    %v2884 = vld [vmem:[%s2871 + $0x60] sm:$0xff]
    %v2885 = vld [vmem:[%s2871 + $0x68] sm:$0xff]
    %v2886 = vld [vmem:[%s2871 + $0x70] sm:$0xff]
    %v2887 = vld [vmem:[%s2871 + $0x78] sm:$0xff]
    %v2904 = vunpack.c.l.b16 %v2872
    %v2905 = vunpack.c.h.b16 %v2872
    %v2906 = vunpack.c.l.b16 %v2873
    %v2907 = vunpack.c.h.b16 %v2873
    %v2908 = vunpack.c.l.b16 %v2874
    %v2909 = vunpack.c.h.b16 %v2874
    %v2910 = vunpack.c.l.b16 %v2875
    %v2911 = vunpack.c.h.b16 %v2875
    %v2912 = vunpack.c.l.b16 %v2876
    %v2913 = vunpack.c.h.b16 %v2876
    %v2914 = vunpack.c.l.b16 %v2877
    %v2915 = vunpack.c.h.b16 %v2877
    %v2916 = vunpack.c.l.b16 %v2878
    %v2917 = vunpack.c.h.b16 %v2878
    %v2918 = vunpack.c.l.b16 %v2879
    %v2919 = vunpack.c.h.b16 %v2879
    %v2920 = vunpack.c.l.b16 %v2880
    %v2921 = vunpack.c.h.b16 %v2880
    %v2922 = vunpack.c.l.b16 %v2881
    %v2923 = vunpack.c.h.b16 %v2881
    %v2924 = vunpack.c.l.b16 %v2882
    %v2925 = vunpack.c.h.b16 %v2882
    %v2926 = vunpack.c.l.b16 %v2883
    %v2927 = vunpack.c.h.b16 %v2883
    %v2928 = vunpack.c.l.b16 %v2884
    %v2929 = vunpack.c.h.b16 %v2884
    %v2930 = vunpack.c.l.b16 %v2885
    %v2931 = vunpack.c.h.b16 %v2885
    %v2932 = vunpack.c.l.b16 %v2886
    %v2933 = vunpack.c.h.b16 %v2886
    %v2934 = vunpack.c.l.b16 %v2887
    %v2935 = vunpack.c.h.b16 %v2887
    %v2936 = vpack.c.b16 %v2906, %v2904
    %v2937 = vpack.c.b16 %v2907, %v2905
    %v2938 = vpack.c.b16 %v2910, %v2908
    %v2939 = vpack.c.b16 %v2911, %v2909
    %v2940 = vpack.c.b16 %v2914, %v2912
    %v2941 = vpack.c.b16 %v2915, %v2913
    %v2942 = vpack.c.b16 %v2918, %v2916
    %v2943 = vpack.c.b16 %v2919, %v2917
    %v2944 = vpack.c.b16 %v2922, %v2920
    %v2945 = vpack.c.b16 %v2923, %v2921
    %v2946 = vpack.c.b16 %v2926, %v2924
    %v2947 = vpack.c.b16 %v2927, %v2925
    %v2948 = vpack.c.b16 %v2930, %v2928
    %v2949 = vpack.c.b16 %v2931, %v2929
    %v2950 = vpack.c.b16 %v2934, %v2932
    %v2951 = vpack.c.b16 %v2935, %v2933
    %2968 = vmatpush.bf16.msra.mxu0 %v2950
    %2969 = vmatpush.bf16.msra.mxu0 %v2948
    %2970 = vmatpush.bf16.msra.mxu0 %v2946
    %2971 = vmatpush.bf16.msra.mxu0 %v2944
    %2972 = vmatpush.bf16.msra.mxu0 %v2942
    %2973 = vmatpush.bf16.msra.mxu0 %v2940
    %2974 = vmatpush.bf16.msra.mxu0 %v2938
    %2975 = vmatpush.bf16.msra.mxu0 %v2936
    %2976 = vmatmul.bf16.gmra.mxu0 %v2867
    %v2977 = vpop.f32.mrf.mxu0
    %v2978 = vadd.f32 0.0, %v2977
    %v2979 = vpop.f32.mrf.mxu0
    %v2980 = vadd.f32 0.0, %v2979
    %2981 = vmatmul.bf16.gmra.mxu0 %v2868
    %v2982 = vpop.f32.mrf.mxu0
    %v2983 = vadd.f32 0.0, %v2982
    %v2984 = vpop.f32.mrf.mxu0
    %v2985 = vadd.f32 0.0, %v2984
    %2986 = vmatmul.bf16.gmra.mxu0 %v2869
    %v2987 = vpop.f32.mrf.mxu0
    %v2988 = vadd.f32 0.0, %v2987
    %v2989 = vpop.f32.mrf.mxu0
    %v2990 = vadd.f32 0.0, %v2989
    %2991 = vmatmul.bf16.gmra.mxu0 %v2870
    %v2992 = vpop.f32.mrf.mxu0
    %v2993 = vadd.f32 0.0, %v2992
    %v2994 = vpop.f32.mrf.mxu0
    %v2995 = vadd.f32 0.0, %v2994
    %2996 = vdwg.mxu0
    %2997 = vmatpush.bf16.msra.mxu0 %v2951
    %2998 = vmatpush.bf16.msra.mxu0 %v2949
    %2999 = vmatpush.bf16.msra.mxu0 %v2947
    %3000 = vmatpush.bf16.msra.mxu0 %v2945
    %3001 = vmatpush.bf16.msra.mxu0 %v2943
    %3002 = vmatpush.bf16.msra.mxu0 %v2941
    %3003 = vmatpush.bf16.msra.mxu0 %v2939
    %3004 = vmatpush.bf16.msra.mxu0 %v2937
    %3005 = vmatmul.bf16.gmra.mxu0 %v2867
    %v3006 = vpop.f32.mrf.mxu0
    %v3007 = vadd.f32 0.0, %v3006
    %v3008 = vpop.f32.mrf.mxu0
    %v3009 = vadd.f32 0.0, %v3008
    %3010 = vmatmul.bf16.gmra.mxu0 %v2868
    %v3011 = vpop.f32.mrf.mxu0
    %v3012 = vadd.f32 0.0, %v3011
    %v3013 = vpop.f32.mrf.mxu0
    %v3014 = vadd.f32 0.0, %v3013
    %3015 = vmatmul.bf16.gmra.mxu0 %v2869
    %v3016 = vpop.f32.mrf.mxu0
    %v3017 = vadd.f32 0.0, %v3016
    %v3018 = vpop.f32.mrf.mxu0
    %v3019 = vadd.f32 0.0, %v3018
    %3020 = vmatmul.bf16.gmra.mxu0 %v2870
    %v3021 = vpop.f32.mrf.mxu0
    %v3022 = vadd.f32 0.0, %v3021
    %v3023 = vpop.f32.mrf.mxu0
    %v3024 = vadd.f32 0.0, %v3023
    %3025 = vdwg.mxu0
    %v3042 = vunpack.c.l.b16 %v2814
    %v3043 = vunpack.c.h.b16 %v2814
    %v3044 = vunpack.c.l.b16 %v2815
    %v3045 = vunpack.c.h.b16 %v2815
    %v3046 = vunpack.c.l.b16 %v2816
    %v3047 = vunpack.c.h.b16 %v2816
    %v3048 = vunpack.c.l.b16 %v2817
    %v3049 = vunpack.c.h.b16 %v2817
    %v3050 = vunpack.c.l.b16 %v2818
    %v3051 = vunpack.c.h.b16 %v2818
    %v3052 = vunpack.c.l.b16 %v2819
    %v3053 = vunpack.c.h.b16 %v2819
    %v3054 = vunpack.c.l.b16 %v2820
    %v3055 = vunpack.c.h.b16 %v2820
    %v3056 = vunpack.c.l.b16 %v2821
    %v3057 = vunpack.c.h.b16 %v2821
    %v3058 = vunpack.c.l.b16 %v2822
    %v3059 = vunpack.c.h.b16 %v2822
    %v3060 = vunpack.c.l.b16 %v2823
    %v3061 = vunpack.c.h.b16 %v2823
    %v3062 = vunpack.c.l.b16 %v2824
    %v3063 = vunpack.c.h.b16 %v2824
    %v3064 = vunpack.c.l.b16 %v2825
    %v3065 = vunpack.c.h.b16 %v2825
    %v3066 = vunpack.c.l.b16 %v2826
    %v3067 = vunpack.c.h.b16 %v2826
    %v3068 = vunpack.c.l.b16 %v2827
    %v3069 = vunpack.c.h.b16 %v2827
    %v3070 = vunpack.c.l.b16 %v2828
    %v3071 = vunpack.c.h.b16 %v2828
    %v3072 = vunpack.c.l.b16 %v2829
    %v3073 = vunpack.c.h.b16 %v2829
    %v3074 = vpack.c.b16 %v3044, %v3042
    %v3075 = vpack.c.b16 %v3045, %v3043
    %v3076 = vpack.c.b16 %v3048, %v3046
    %v3077 = vpack.c.b16 %v3049, %v3047
    %v3078 = vpack.c.b16 %v3052, %v3050
    %v3079 = vpack.c.b16 %v3053, %v3051
    %v3080 = vpack.c.b16 %v3056, %v3054
    %v3081 = vpack.c.b16 %v3057, %v3055
    %v3082 = vpack.c.b16 %v3060, %v3058
    %v3083 = vpack.c.b16 %v3061, %v3059
    %v3084 = vpack.c.b16 %v3064, %v3062
    %v3085 = vpack.c.b16 %v3065, %v3063
    %v3086 = vpack.c.b16 %v3068, %v3066
    %v3087 = vpack.c.b16 %v3069, %v3067
    %v3088 = vpack.c.b16 %v3072, %v3070
    %v3089 = vpack.c.b16 %v3073, %v3071
    %3106 = vmatpush.bf16.msra.mxu0 %v3088
    %3107 = vmatpush.bf16.msra.mxu0 %v3086
    %3108 = vmatpush.bf16.msra.mxu0 %v3084
    %3109 = vmatpush.bf16.msra.mxu0 %v3082
    %3110 = vmatpush.bf16.msra.mxu0 %v3080
    %3111 = vmatpush.bf16.msra.mxu0 %v3078
    %3112 = vmatpush.bf16.msra.mxu0 %v3076
    %3113 = vmatpush.bf16.msra.mxu0 %v3074
    %3114 = vmatmul.bf16.gmra.mxu0 %v2810
    %v3115 = vpop.f32.mrf.mxu0
    %v3116 = vadd.f32 %v2978, %v3115
    %v3117 = vpop.f32.mrf.mxu0
    %v3118 = vadd.f32 %v2980, %v3117
    %3119 = vmatmul.bf16.gmra.mxu0 %v2811
    %v3120 = vpop.f32.mrf.mxu0
    %v3121 = vadd.f32 %v2983, %v3120
    %v3122 = vpop.f32.mrf.mxu0
    %v3123 = vadd.f32 %v2985, %v3122
    %3124 = vmatmul.bf16.gmra.mxu0 %v2812
    %v3125 = vpop.f32.mrf.mxu0
    %v3126 = vadd.f32 %v2988, %v3125
    %v3127 = vpop.f32.mrf.mxu0
    %v3128 = vadd.f32 %v2990, %v3127
    %3129 = vmatmul.bf16.gmra.mxu0 %v2813
    %v3130 = vpop.f32.mrf.mxu0
    %v3131 = vadd.f32 %v2993, %v3130
    %v3132 = vpop.f32.mrf.mxu0
    %v3133 = vadd.f32 %v2995, %v3132
    %3134 = vdwg.mxu0
    %3135 = vmatpush.bf16.msra.mxu0 %v3089
    %3136 = vmatpush.bf16.msra.mxu0 %v3087
    %3137 = vmatpush.bf16.msra.mxu0 %v3085
    %3138 = vmatpush.bf16.msra.mxu0 %v3083
    %3139 = vmatpush.bf16.msra.mxu0 %v3081
    %3140 = vmatpush.bf16.msra.mxu0 %v3079
    %3141 = vmatpush.bf16.msra.mxu0 %v3077
    %3142 = vmatpush.bf16.msra.mxu0 %v3075
    %3143 = vmatmul.bf16.gmra.mxu0 %v2810
    %v3144 = vpop.f32.mrf.mxu0
    %v3145 = vadd.f32 %v3007, %v3144
    %v3146 = vpop.f32.mrf.mxu0
    %v3147 = vadd.f32 %v3009, %v3146
    %3148 = vmatmul.bf16.gmra.mxu0 %v2811
    %v3149 = vpop.f32.mrf.mxu0
    %v3150 = vadd.f32 %v3012, %v3149
    %v3151 = vpop.f32.mrf.mxu0
    %v3152 = vadd.f32 %v3014, %v3151
    %3153 = vmatmul.bf16.gmra.mxu0 %v2812
    %v3154 = vpop.f32.mrf.mxu0
    %v3155 = vadd.f32 %v3017, %v3154
    %v3156 = vpop.f32.mrf.mxu0
    %v3157 = vadd.f32 %v3019, %v3156
    %3158 = vmatmul.bf16.gmra.mxu0 %v2813
    %v3159 = vpop.f32.mrf.mxu0
    %v3160 = vadd.f32 %v3022, %v3159
    %v3161 = vpop.f32.mrf.mxu0
    %v3162 = vadd.f32 %v3024, %v3161
    %3163 = vdwg.mxu0
    %vm3164 = vcmask 1045504
    %v3165 = vrot.slane %v2800, 2
    %v3166 = vrot.slane %v2801, 2
    %v3167 = vsel %vm3164, %v3165, %v3166
    %v3168 = vrot.slane %v2802, 2
    %v3169 = vsel %vm3164, %v3166, %v3168
    %v3170 = vrot.slane %v2803, 2
    %v3171 = vsel %vm3164, %v3168, %v3170
    %v3172 = vrot.slane %v2804, 2
    %v3173 = vsel %vm3164, %v3170, %v3172
    %v3174 = vrot.slane %v2805, 2
    %v3175 = vrot.slane %v2806, 2
    %v3176 = vsel %vm3164, %v3174, %v3175
    %v3177 = vrot.slane %v2807, 2
    %v3178 = vsel %vm3164, %v3175, %v3177
    %v3179 = vrot.slane %v2808, 2
    %v3180 = vsel %vm3164, %v3177, %v3179
    %v3181 = vrot.slane %v2809, 2
    %v3182 = vsel %vm3164, %v3179, %v3181
    %v3191 = vpack.c.bf16 %v3169, %v3167
    %v3192 = vpack.c.bf16 %v3173, %v3171
    %v3193 = vpack.c.bf16 %v3178, %v3176
    %v3194 = vpack.c.bf16 %v3182, %v3180
    %s3195 = scalar_lea.vmem %s2, 256
    %v3196 = vld [vmem:[%s3195] sm:$0xff]
    %v3197 = vld [vmem:[%s3195 + $0x8] sm:$0xff]
    %v3198 = vld [vmem:[%s3195 + $0x10] sm:$0xff]
    %v3199 = vld [vmem:[%s3195 + $0x18] sm:$0xff]
    %v3200 = vld [vmem:[%s3195 + $0x20] sm:$0xff]
    %v3201 = vld [vmem:[%s3195 + $0x28] sm:$0xff]
    %v3202 = vld [vmem:[%s3195 + $0x30] sm:$0xff]
    %v3203 = vld [vmem:[%s3195 + $0x38] sm:$0xff]
    %v3204 = vld [vmem:[%s3195 + $0x40] sm:$0xff]
    %v3205 = vld [vmem:[%s3195 + $0x48] sm:$0xff]
    %v3206 = vld [vmem:[%s3195 + $0x50] sm:$0xff]
    %v3207 = vld [vmem:[%s3195 + $0x58] sm:$0xff]
    %v3208 = vld [vmem:[%s3195 + $0x60] sm:$0xff]
    %v3209 = vld [vmem:[%s3195 + $0x68] sm:$0xff]
    %v3210 = vld [vmem:[%s3195 + $0x70] sm:$0xff]
    %v3211 = vld [vmem:[%s3195 + $0x78] sm:$0xff]
    %v3228 = vunpack.c.l.b16 %v3196
    %v3229 = vunpack.c.h.b16 %v3196
    %v3230 = vunpack.c.l.b16 %v3197
    %v3231 = vunpack.c.h.b16 %v3197
    %v3232 = vunpack.c.l.b16 %v3198
    %v3233 = vunpack.c.h.b16 %v3198
    %v3234 = vunpack.c.l.b16 %v3199
    %v3235 = vunpack.c.h.b16 %v3199
    %v3236 = vunpack.c.l.b16 %v3200
    %v3237 = vunpack.c.h.b16 %v3200
    %v3238 = vunpack.c.l.b16 %v3201
    %v3239 = vunpack.c.h.b16 %v3201
    %v3240 = vunpack.c.l.b16 %v3202
    %v3241 = vunpack.c.h.b16 %v3202
    %v3242 = vunpack.c.l.b16 %v3203
    %v3243 = vunpack.c.h.b16 %v3203
    %v3244 = vunpack.c.l.b16 %v3204
    %v3245 = vunpack.c.h.b16 %v3204
    %v3246 = vunpack.c.l.b16 %v3205
    %v3247 = vunpack.c.h.b16 %v3205
    %v3248 = vunpack.c.l.b16 %v3206
    %v3249 = vunpack.c.h.b16 %v3206
    %v3250 = vunpack.c.l.b16 %v3207
    %v3251 = vunpack.c.h.b16 %v3207
    %v3252 = vunpack.c.l.b16 %v3208
    %v3253 = vunpack.c.h.b16 %v3208
    %v3254 = vunpack.c.l.b16 %v3209
    %v3255 = vunpack.c.h.b16 %v3209
    %v3256 = vunpack.c.l.b16 %v3210
    %v3257 = vunpack.c.h.b16 %v3210
    %v3258 = vunpack.c.l.b16 %v3211
    %v3259 = vunpack.c.h.b16 %v3211
    %v3260 = vpack.c.b16 %v3230, %v3228
    %v3261 = vpack.c.b16 %v3231, %v3229
    %v3262 = vpack.c.b16 %v3234, %v3232
    %v3263 = vpack.c.b16 %v3235, %v3233
    %v3264 = vpack.c.b16 %v3238, %v3236
    %v3265 = vpack.c.b16 %v3239, %v3237
    %v3266 = vpack.c.b16 %v3242, %v3240
    %v3267 = vpack.c.b16 %v3243, %v3241
    %v3268 = vpack.c.b16 %v3246, %v3244
    %v3269 = vpack.c.b16 %v3247, %v3245
    %v3270 = vpack.c.b16 %v3250, %v3248
    %v3271 = vpack.c.b16 %v3251, %v3249
    %v3272 = vpack.c.b16 %v3254, %v3252
    %v3273 = vpack.c.b16 %v3255, %v3253
    %v3274 = vpack.c.b16 %v3258, %v3256
    %v3275 = vpack.c.b16 %v3259, %v3257
    %3292 = vmatpush.bf16.msra.mxu0 %v3274
    %3293 = vmatpush.bf16.msra.mxu0 %v3272
    %3294 = vmatpush.bf16.msra.mxu0 %v3270
    %3295 = vmatpush.bf16.msra.mxu0 %v3268
    %3296 = vmatpush.bf16.msra.mxu0 %v3266
    %3297 = vmatpush.bf16.msra.mxu0 %v3264
    %3298 = vmatpush.bf16.msra.mxu0 %v3262
    %3299 = vmatpush.bf16.msra.mxu0 %v3260
    %3300 = vmatmul.bf16.gmra.mxu0 %v3191
    %v3301 = vpop.f32.mrf.mxu0
    %v3302 = vadd.f32 0.0, %v3301
    %v3303 = vpop.f32.mrf.mxu0
    %v3304 = vadd.f32 0.0, %v3303
    %3305 = vmatmul.bf16.gmra.mxu0 %v3192
    %v3306 = vpop.f32.mrf.mxu0
    %v3307 = vadd.f32 0.0, %v3306
    %v3308 = vpop.f32.mrf.mxu0
    %v3309 = vadd.f32 0.0, %v3308
    %3310 = vmatmul.bf16.gmra.mxu0 %v3193
    %v3311 = vpop.f32.mrf.mxu0
    %v3312 = vadd.f32 0.0, %v3311
    %v3313 = vpop.f32.mrf.mxu0
    %v3314 = vadd.f32 0.0, %v3313
    %3315 = vmatmul.bf16.gmra.mxu0 %v3194
    %v3316 = vpop.f32.mrf.mxu0
    %v3317 = vadd.f32 0.0, %v3316
    %v3318 = vpop.f32.mrf.mxu0
    %v3319 = vadd.f32 0.0, %v3318
    %3320 = vdwg.mxu0
    %3321 = vmatpush.bf16.msra.mxu0 %v3275
    %3322 = vmatpush.bf16.msra.mxu0 %v3273
    %3323 = vmatpush.bf16.msra.mxu0 %v3271
    %3324 = vmatpush.bf16.msra.mxu0 %v3269
    %3325 = vmatpush.bf16.msra.mxu0 %v3267
    %3326 = vmatpush.bf16.msra.mxu0 %v3265
    %3327 = vmatpush.bf16.msra.mxu0 %v3263
    %3328 = vmatpush.bf16.msra.mxu0 %v3261
    %3329 = vmatmul.bf16.gmra.mxu0 %v3191
    %v3330 = vpop.f32.mrf.mxu0
    %v3331 = vadd.f32 0.0, %v3330
    %v3332 = vpop.f32.mrf.mxu0
    %v3333 = vadd.f32 0.0, %v3332
    %3334 = vmatmul.bf16.gmra.mxu0 %v3192
    %v3335 = vpop.f32.mrf.mxu0
    %v3336 = vadd.f32 0.0, %v3335
    %v3337 = vpop.f32.mrf.mxu0
    %v3338 = vadd.f32 0.0, %v3337
    %3339 = vmatmul.bf16.gmra.mxu0 %v3193
    %v3340 = vpop.f32.mrf.mxu0
    %v3341 = vadd.f32 0.0, %v3340
    %v3342 = vpop.f32.mrf.mxu0
    %v3343 = vadd.f32 0.0, %v3342
    %3344 = vmatmul.bf16.gmra.mxu0 %v3194
    %v3345 = vpop.f32.mrf.mxu0
    %v3346 = vadd.f32 0.0, %v3345
    %v3347 = vpop.f32.mrf.mxu0
    %v3348 = vadd.f32 0.0, %v3347
    %3349 = vdwg.mxu0
    %v3350 = vadd.f32 %v3116, %v3302
    %v3351 = vadd.f32 %v3145, %v3331
    %v3352 = vadd.f32 %v3118, %v3304
    %v3353 = vadd.f32 %v3147, %v3333
    %v3354 = vadd.f32 %v3121, %v3307
    %v3355 = vadd.f32 %v3150, %v3336
    %v3356 = vadd.f32 %v3123, %v3309
    %v3357 = vadd.f32 %v3152, %v3338
    %v3358 = vadd.f32 %v3126, %v3312
    %v3359 = vadd.f32 %v3155, %v3341
    %v3360 = vadd.f32 %v3128, %v3314
    %v3361 = vadd.f32 %v3157, %v3343
    %v3362 = vadd.f32 %v3131, %v3317
    %v3363 = vadd.f32 %v3160, %v3346
    %v3364 = vadd.f32 %v3133, %v3319
    %v3365 = vadd.f32 %v3162, %v3348
    %v3366 = vadd.f32 %v3350, %v3352
    %v3367 = vadd.f32 %v3366, %v3354
    %v3368 = vadd.f32 %v3367, %v3356
    %v3369 = vadd.f32 %v3368, %v3358
    %v3370 = vadd.f32 %v3369, %v3360
    %v3371 = vadd.f32 %v3370, %v3362
    %v3372 = vadd.f32 %v3371, %v3364
    %v3373 = vrot.slane %v3372, 4
    %v3374 = vadd.f32 %v3372, %v3373
    %v3375 = vrot.slane %v3374, 2
    %v3376 = vadd.f32 %v3374, %v3375
    %v3377 = vrot.slane %v3376, 1
    %v3378 = vadd.f32 %v3376, %v3377
    %v3379 = vadd.f32 %v3351, %v3353
    %v3380 = vadd.f32 %v3379, %v3355
    %v3381 = vadd.f32 %v3380, %v3357
    %v3382 = vadd.f32 %v3381, %v3359
    %v3383 = vadd.f32 %v3382, %v3361
    %v3384 = vadd.f32 %v3383, %v3363
    %v3385 = vadd.f32 %v3384, %v3365
    %v3386 = vrot.slane %v3385, 4
    %v3387 = vadd.f32 %v3385, %v3386
    %v3388 = vrot.slane %v3387, 2
    %v3389 = vadd.f32 %v3387, %v3388
    %v3390 = vrot.slane %v3389, 1
    %v3391 = vadd.f32 %v3389, %v3390
    %v3392 = vmul.f32 %v3350, %v3350
    %v3393 = vmul.f32 %v3351, %v3351
    %v3394 = vmul.f32 %v3352, %v3352
    %v3395 = vmul.f32 %v3353, %v3353
    %v3396 = vmul.f32 %v3354, %v3354
    %v3397 = vmul.f32 %v3355, %v3355
    %v3398 = vmul.f32 %v3356, %v3356
    %v3399 = vmul.f32 %v3357, %v3357
    %v3400 = vmul.f32 %v3358, %v3358
    %v3401 = vmul.f32 %v3359, %v3359
    %v3402 = vmul.f32 %v3360, %v3360
    %v3403 = vmul.f32 %v3361, %v3361
    %v3404 = vmul.f32 %v3362, %v3362
    %v3405 = vmul.f32 %v3363, %v3363
    %v3406 = vmul.f32 %v3364, %v3364
    %v3407 = vmul.f32 %v3365, %v3365
    %v3408 = vadd.f32 %v3392, %v3394
    %v3409 = vadd.f32 %v3408, %v3396
    %v3410 = vadd.f32 %v3409, %v3398
    %v3411 = vadd.f32 %v3410, %v3400
    %v3412 = vadd.f32 %v3411, %v3402
    %v3413 = vadd.f32 %v3412, %v3404
    %v3414 = vadd.f32 %v3413, %v3406
    %v3415 = vrot.slane %v3414, 4
    %v3416 = vadd.f32 %v3414, %v3415
    %v3417 = vrot.slane %v3416, 2
    %v3418 = vadd.f32 %v3416, %v3417
    %v3419 = vrot.slane %v3418, 1
    %v3420 = vadd.f32 %v3418, %v3419
    %v3421 = vadd.f32 %v3393, %v3395
    %v3422 = vadd.f32 %v3421, %v3397
    %v3423 = vadd.f32 %v3422, %v3399
    %v3424 = vadd.f32 %v3423, %v3401
    %v3425 = vadd.f32 %v3424, %v3403
    %v3426 = vadd.f32 %v3425, %v3405
    %v3427 = vadd.f32 %v3426, %v3407
    %v3428 = vrot.slane %v3427, 4
    %v3429 = vadd.f32 %v3427, %v3428
    %v3430 = vrot.slane %v3429, 2
    %v3431 = vadd.f32 %v3429, %v3430
    %v3432 = vrot.slane %v3431, 1
    %v3433 = vadd.f32 %v3431, %v3432
    %v3434 = vsel %vm1812, %v3378, %v3420
    %v3435 = vsel %vm1812, %v3391, %v3433
    %v3436 = vld [vmem:[%s6] sm:$0xff]
    %v3437 = vld [vmem:[%s6 + $0x8] sm:$0xff]
    %v3438 = vld [vmem:[%s6 + $0x10] sm:$0xff]
    %v3439 = vld [vmem:[%s6 + $0x18] sm:$0xff]
    %v3440 = vld [vmem:[%s6 + $0x20] sm:$0xff]
    %v3441 = vld [vmem:[%s6 + $0x28] sm:$0xff]
    %v3442 = vld [vmem:[%s6 + $0x30] sm:$0xff]
    %v3443 = vld [vmem:[%s6 + $0x38] sm:$0xff]
    %v3444 = vld [vmem:[%s6 + $0x40] sm:$0xff]
    %v3445 = vld [vmem:[%s6 + $0x48] sm:$0xff]
    %v3446 = vld [vmem:[%s6 + $0x50] sm:$0xff]
    %v3447 = vld [vmem:[%s6 + $0x58] sm:$0xff]
    %v3448 = vld [vmem:[%s6 + $0x60] sm:$0xff]
    %v3449 = vld [vmem:[%s6 + $0x68] sm:$0xff]
    %v3450 = vld [vmem:[%s6 + $0x70] sm:$0xff]
    %v3451 = vld [vmem:[%s6 + $0x78] sm:$0xff]
    %v3452 = vld [vmem:[%s6 + $0x80] sm:$0xff]
    %v3453 = vld [vmem:[%s6 + $0x88] sm:$0xff]
    %v3454 = vld [vmem:[%s6 + $0x90] sm:$0xff]
    %v3455 = vld [vmem:[%s6 + $0x98] sm:$0xff]
    %v3456 = vld [vmem:[%s6 + $0xa0] sm:$0xff]
    %v3457 = vld [vmem:[%s6 + $0xa8] sm:$0xff]
    %v3458 = vld [vmem:[%s6 + $0xb0] sm:$0xff]
    %v3459 = vld [vmem:[%s6 + $0xb8] sm:$0xff]
    %v3460 = vld [vmem:[%s6 + $0xc0] sm:$0xff]
    %v3461 = vld [vmem:[%s6 + $0xc8] sm:$0xff]
    %v3462 = vld [vmem:[%s6 + $0xd0] sm:$0xff]
    %v3463 = vld [vmem:[%s6 + $0xd8] sm:$0xff]
    %v3464 = vld [vmem:[%s6 + $0xe0] sm:$0xff]
    %v3465 = vld [vmem:[%s6 + $0xe8] sm:$0xff]
    %v3466 = vld [vmem:[%s6 + $0xf0] sm:$0xff]
    %v3467 = vld [vmem:[%s6 + $0xf8] sm:$0xff]
    %3468 = vmatpush.msra.mxu0 %v3451
    %3469 = vmatpush.msra.mxu0 %v3450
    %3470 = vmatpush.msra.mxu0 %v3449
    %3471 = vmatpush.msra.mxu0 %v3448
    %3472 = vmatpush.msra.mxu0 %v3447
    %3473 = vmatpush.msra.mxu0 %v3446
    %3474 = vmatpush.msra.mxu0 %v3445
    %3475 = vmatpush.msra.mxu0 %v3444
    %3476 = vmatpush.msra.mxu0 %v3443
    %3477 = vmatpush.msra.mxu0 %v3442
    %3478 = vmatpush.msra.mxu0 %v3441
    %3479 = vmatpush.msra.mxu0 %v3440
    %3480 = vmatpush.msra.mxu0 %v3439
    %3481 = vmatpush.msra.mxu0 %v3438
    %3482 = vmatpush.msra.mxu0 %v3437
    %3483 = vmatpush.msra.mxu0 %v3436
    %3484 = vmatmul.f32.gmra.mxu0 %v3434
    %v3485 = vpop.f32.mrf.mxu0
    %v3486 = vadd.f32 0.0, %v3485
    %3487 = vdwg.mxu0
    %3488 = vmatpush.msra.mxu0 %v3467
    %3489 = vmatpush.msra.mxu0 %v3466
    %3490 = vmatpush.msra.mxu0 %v3465
    %3491 = vmatpush.msra.mxu0 %v3464
    %3492 = vmatpush.msra.mxu0 %v3463
    %3493 = vmatpush.msra.mxu0 %v3462
    %3494 = vmatpush.msra.mxu0 %v3461
    %3495 = vmatpush.msra.mxu0 %v3460
    %3496 = vmatpush.msra.mxu0 %v3459
    %3497 = vmatpush.msra.mxu0 %v3458
    %3498 = vmatpush.msra.mxu0 %v3457
    %3499 = vmatpush.msra.mxu0 %v3456
    %3500 = vmatpush.msra.mxu0 %v3455
    %3501 = vmatpush.msra.mxu0 %v3454
    %3502 = vmatpush.msra.mxu0 %v3453
    %3503 = vmatpush.msra.mxu0 %v3452
    %3504 = vmatmul.f32.gmra.mxu0 %v3435
    %v3505 = vpop.f32.mrf.mxu0
    %v3506 = vadd.f32 %v3486, %v3505
    %3507 = vdwg.mxu0
    %v3508 = vrcp.pop 2048.0
    %v3509 = vmul.f32 2048.0, %v3508
    %v3510 = vsub.f32 1.0, %v3509
    %v3511 = vmul.f32 %v3508, %v3510
    %v3512 = vadd.f32 %v3508, %v3511
    %vm3513 = vweird.f32 %v3508
    %v3514 = vsel %vm3513, %v3508, %v3512
    %v3515 = vmul.f32 %v3506, %v3514
    %v3516 = vmul.f32 %v3515, %v3515
    %v3518 = vrot.slane %v3516, 7
    %v3520 = vsub.f32 %v3515, %v3518
    %v3521 = vld [vmem:[%s8] sm:$0x3]
    %v3522 = vadd.f32 %v3520, 1e-05
    %v3523 = vrsqrt.pop %v3522
    %v3524 = vmul.f32 %v3523, %v3522
    %v3525 = vmul.f32 %v3524, %v3523
    %v3526 = vmul.f32 0.5, %v3525
    %v3527 = vsub.f32 1.5, %v3526
    %v3528 = vmul.f32 %v3523, %v3527
    %vm3529 = vweird.f32 %v3522
    %vm3530 = vweird.f32 %v3523
    %vm3531 = vmor %vm3529, %vm3530
    %v3532 = vsel %vm3531, %v3523, %v3528
    %v3534 = vrot.slane %v3532, 1
    %v3536 = vmul.f32 %v3521, %v3534
    %v3537 = vmul.f32 %v3515, %v3536
    %v3539 = vrot.slane %v3537, 7
    %v3541 = vsub.f32 %v3521, %v3539
    %v3542 = vsel %vm1812, %v3536, %v3541
    %v3543 = vld [vmem:[%s7] sm:$0xff]
    %v3544 = vld [vmem:[%s7 + $0x8] sm:$0xff]
    %vm3545 = vcmask 64512
    %v3547 = vsel %vm3545, %v3542, 0
    %3549 = vmatpush.msra.mxu0 0.0
    %3550 = vmatpush.msra.mxu0 0.0
    %3551 = vmatpush.msra.mxu0 0.0
    %3552 = vmatpush.msra.mxu0 0.0
    %3553 = vmatpush.msra.mxu0 0.0
    %3554 = vmatpush.msra.mxu0 0.0
    %3555 = vmatpush.msra.mxu0 0.0
    %3556 = vmatpush.msra.mxu0 0.0
    %3557 = vmatpush.msra.mxu0 0.0
    %3558 = vmatpush.msra.mxu0 0.0
    %3559 = vmatpush.msra.mxu0 0.0
    %3560 = vmatpush.msra.mxu0 0.0
    %3561 = vmatpush.msra.mxu0 0.0
    %3562 = vmatpush.msra.mxu0 0.0
    %3563 = vmatpush.msra.mxu0 0.0
    %3564 = vmatpush.msra.mxu0 %v3543
    %3565 = vmatmul.f32.gmra.mxu0 %v3547
    %v3566 = vpop.f32.mrf.mxu0
    %v3567 = vadd.f32 0.0, %v3566
    %3568 = vdwg.mxu0
    %3569 = vmatpush.msra.mxu0 0.0
    %3570 = vmatpush.msra.mxu0 0.0
    %3571 = vmatpush.msra.mxu0 0.0
    %3572 = vmatpush.msra.mxu0 0.0
    %3573 = vmatpush.msra.mxu0 0.0
    %3574 = vmatpush.msra.mxu0 0.0
    %3575 = vmatpush.msra.mxu0 0.0
    %3576 = vmatpush.msra.mxu0 0.0
    %3577 = vmatpush.msra.mxu0 0.0
    %3578 = vmatpush.msra.mxu0 0.0
    %3579 = vmatpush.msra.mxu0 0.0
    %3580 = vmatpush.msra.mxu0 0.0
    %3581 = vmatpush.msra.mxu0 0.0
    %3582 = vmatpush.msra.mxu0 0.0
    %3583 = vmatpush.msra.mxu0 0.0
    %3584 = vmatpush.msra.mxu0 %v3544
    %3585 = vmatmul.f32.gmra.mxu0 %v3547
    %v3586 = vpop.f32.mrf.mxu0
    %v3587 = vadd.f32 0.0, %v3586
    %3588 = vdwg.mxu0
    %v3589 = vperm.slane %v3567, 0
    %v3590 = vperm.slane %v3587, 0
    %v3591 = vmul.f32 %v3350, %v3589
    %v3592 = vmul.f32 %v3351, %v3590
    %v3593 = vmul.f32 %v3352, %v3589
    %v3594 = vmul.f32 %v3353, %v3590
    %v3595 = vmul.f32 %v3354, %v3589
    %v3596 = vmul.f32 %v3355, %v3590
    %v3597 = vmul.f32 %v3356, %v3589
    %v3598 = vmul.f32 %v3357, %v3590
    %v3599 = vmul.f32 %v3358, %v3589
    %v3600 = vmul.f32 %v3359, %v3590
    %v3601 = vmul.f32 %v3360, %v3589
    %v3602 = vmul.f32 %v3361, %v3590
    %v3603 = vmul.f32 %v3362, %v3589
    %v3604 = vmul.f32 %v3363, %v3590
    %v3605 = vmul.f32 %v3364, %v3589
    %v3606 = vmul.f32 %v3365, %v3590
    %v3607 = vperm.slane %v3567, 1
    %v3608 = vperm.slane %v3587, 1
    %v3609 = vadd.f32 %v3591, %v3607
    %v3610 = vadd.f32 %v3592, %v3608
    %v3611 = vadd.f32 %v3593, %v3607
    %v3612 = vadd.f32 %v3594, %v3608
    %v3613 = vadd.f32 %v3595, %v3607
    %v3614 = vadd.f32 %v3596, %v3608
    %v3615 = vadd.f32 %v3597, %v3607
    %v3616 = vadd.f32 %v3598, %v3608
    %v3617 = vadd.f32 %v3599, %v3607
    %v3618 = vadd.f32 %v3600, %v3608
    %v3619 = vadd.f32 %v3601, %v3607
    %v3620 = vadd.f32 %v3602, %v3608
    %v3621 = vadd.f32 %v3603, %v3607
    %v3622 = vadd.f32 %v3604, %v3608
    %v3623 = vadd.f32 %v3605, %v3607
    %v3624 = vadd.f32 %v3606, %v3608
    %v3625 = vmax.f32 %v3609, 0.0
    %v3626 = vmax.f32 %v3610, 0.0
    %v3627 = vmax.f32 %v3611, 0.0
    %v3628 = vmax.f32 %v3612, 0.0
    %v3629 = vmax.f32 %v3613, 0.0
    %v3630 = vmax.f32 %v3614, 0.0
    %v3631 = vmax.f32 %v3615, 0.0
    %v3632 = vmax.f32 %v3616, 0.0
    %v3633 = vmax.f32 %v3617, 0.0
    %v3634 = vmax.f32 %v3618, 0.0
    %v3635 = vmax.f32 %v3619, 0.0
    %v3636 = vmax.f32 %v3620, 0.0
    %v3637 = vmax.f32 %v3621, 0.0
    %v3638 = vmax.f32 %v3622, 0.0
    %v3639 = vmax.f32 %v3623, 0.0
    %v3640 = vmax.f32 %v3624, 0.0
    %v3641 = vmax.f32 %v3625, %v3626
    %v3642 = vmax.f32 %v3627, %v3628
    %v3643 = vmax.f32 %v3629, %v3630
    %v3644 = vmax.f32 %v3631, %v3632
    %v3645 = vmax.f32 %v3633, %v3634
    %v3646 = vmax.f32 %v3635, %v3636
    %v3647 = vmax.f32 %v3637, %v3638
    %v3648 = vmax.f32 %v3639, %v3640
    %v3657 = vrot.slane %v3641, 2
    %v3658 = vrot.slane %v3641, 4
    %v3659 = vrot.slane %v3641, 6
    %v3660 = vrot.slane %v3642, 2
    %v3661 = vrot.slane %v3642, 4
    %v3662 = vrot.slane %v3642, 6
    %v3663 = vrot.slane %v3643, 2
    %v3664 = vrot.slane %v3643, 4
    %v3665 = vrot.slane %v3643, 6
    %v3666 = vrot.slane %v3644, 2
    %v3667 = vrot.slane %v3644, 4
    %v3668 = vrot.slane %v3644, 6
    %v3669 = vrot.slane %v3645, 2
    %v3670 = vrot.slane %v3645, 4
    %v3671 = vrot.slane %v3645, 6
    %v3672 = vrot.slane %v3646, 2
    %v3673 = vrot.slane %v3646, 4
    %v3674 = vrot.slane %v3646, 6
    %v3675 = vrot.slane %v3647, 2
    %v3676 = vrot.slane %v3647, 4
    %v3677 = vrot.slane %v3647, 6
    %v3678 = vrot.slane %v3648, 2
    %v3679 = vrot.slane %v3648, 4
    %v3680 = vrot.slane %v3648, 6
    %v3705 = vsel %vm2204, %v3641, -inf
    %v3706 = vrot.slane %v3705, 4
    %v3707 = vmax.f32 %v3705, %v3706
    %v3708 = vrot.slane %v3707, 2
    %v3709 = vmax.f32 %v3707, %v3708
    %v3710 = vrot.slane %v3709, 1
    %v3711 = vmax.f32 %v3709, %v3710
    %v3712 = vsel %vm2204, %v3657, -inf
    %v3713 = vrot.slane %v3712, 4
    %v3714 = vmax.f32 %v3712, %v3713
    %v3715 = vrot.slane %v3714, 2
    %v3716 = vmax.f32 %v3714, %v3715
    %v3717 = vrot.slane %v3716, 1
    %v3718 = vmax.f32 %v3716, %v3717
    %v3719 = vsel %vm2204, %v3658, -inf
    %v3720 = vrot.slane %v3719, 4
    %v3721 = vmax.f32 %v3719, %v3720
    %v3722 = vrot.slane %v3721, 2
    %v3723 = vmax.f32 %v3721, %v3722
    %v3724 = vrot.slane %v3723, 1
    %v3725 = vmax.f32 %v3723, %v3724
    %v3726 = vsel %vm2204, %v3659, -inf
    %v3727 = vrot.slane %v3726, 4
    %v3728 = vmax.f32 %v3726, %v3727
    %v3729 = vrot.slane %v3728, 2
    %v3730 = vmax.f32 %v3728, %v3729
    %v3731 = vrot.slane %v3730, 1
    %v3732 = vmax.f32 %v3730, %v3731
    %v3733 = vsel %vm2204, %v3642, -inf
    %v3734 = vrot.slane %v3733, 4
    %v3735 = vmax.f32 %v3733, %v3734
    %v3736 = vrot.slane %v3735, 2
    %v3737 = vmax.f32 %v3735, %v3736
    %v3738 = vrot.slane %v3737, 1
    %v3739 = vmax.f32 %v3737, %v3738
    %v3740 = vsel %vm2204, %v3660, -inf
    %v3741 = vrot.slane %v3740, 4
    %v3742 = vmax.f32 %v3740, %v3741
    %v3743 = vrot.slane %v3742, 2
    %v3744 = vmax.f32 %v3742, %v3743
    %v3745 = vrot.slane %v3744, 1
    %v3746 = vmax.f32 %v3744, %v3745
    %v3747 = vsel %vm2204, %v3661, -inf
    %v3748 = vrot.slane %v3747, 4
    %v3749 = vmax.f32 %v3747, %v3748
    %v3750 = vrot.slane %v3749, 2
    %v3751 = vmax.f32 %v3749, %v3750
    %v3752 = vrot.slane %v3751, 1
    %v3753 = vmax.f32 %v3751, %v3752
    %v3754 = vsel %vm2204, %v3662, -inf
    %v3755 = vrot.slane %v3754, 4
    %v3756 = vmax.f32 %v3754, %v3755
    %v3757 = vrot.slane %v3756, 2
    %v3758 = vmax.f32 %v3756, %v3757
    %v3759 = vrot.slane %v3758, 1
    %v3760 = vmax.f32 %v3758, %v3759
    %v3761 = vsel %vm2204, %v3643, -inf
    %v3762 = vrot.slane %v3761, 4
    %v3763 = vmax.f32 %v3761, %v3762
    %v3764 = vrot.slane %v3763, 2
    %v3765 = vmax.f32 %v3763, %v3764
    %v3766 = vrot.slane %v3765, 1
    %v3767 = vmax.f32 %v3765, %v3766
    %v3768 = vsel %vm2204, %v3663, -inf
    %v3769 = vrot.slane %v3768, 4
    %v3770 = vmax.f32 %v3768, %v3769
    %v3771 = vrot.slane %v3770, 2
    %v3772 = vmax.f32 %v3770, %v3771
    %v3773 = vrot.slane %v3772, 1
    %v3774 = vmax.f32 %v3772, %v3773
    %v3775 = vsel %vm2204, %v3664, -inf
    %v3776 = vrot.slane %v3775, 4
    %v3777 = vmax.f32 %v3775, %v3776
    %v3778 = vrot.slane %v3777, 2
    %v3779 = vmax.f32 %v3777, %v3778
    %v3780 = vrot.slane %v3779, 1
    %v3781 = vmax.f32 %v3779, %v3780
    %v3782 = vsel %vm2204, %v3665, -inf
    %v3783 = vrot.slane %v3782, 4
    %v3784 = vmax.f32 %v3782, %v3783
    %v3785 = vrot.slane %v3784, 2
    %v3786 = vmax.f32 %v3784, %v3785
    %v3787 = vrot.slane %v3786, 1
    %v3788 = vmax.f32 %v3786, %v3787
    %v3789 = vsel %vm2204, %v3644, -inf
    %v3790 = vrot.slane %v3789, 4
    %v3791 = vmax.f32 %v3789, %v3790
    %v3792 = vrot.slane %v3791, 2
    %v3793 = vmax.f32 %v3791, %v3792
    %v3794 = vrot.slane %v3793, 1
    %v3795 = vmax.f32 %v3793, %v3794
    %v3796 = vsel %vm2204, %v3666, -inf
    %v3797 = vrot.slane %v3796, 4
    %v3798 = vmax.f32 %v3796, %v3797
    %v3799 = vrot.slane %v3798, 2
    %v3800 = vmax.f32 %v3798, %v3799
    %v3801 = vrot.slane %v3800, 1
    %v3802 = vmax.f32 %v3800, %v3801
    %v3803 = vsel %vm2204, %v3667, -inf
    %v3804 = vrot.slane %v3803, 4
    %v3805 = vmax.f32 %v3803, %v3804
    %v3806 = vrot.slane %v3805, 2
    %v3807 = vmax.f32 %v3805, %v3806
    %v3808 = vrot.slane %v3807, 1
    %v3809 = vmax.f32 %v3807, %v3808
    %v3810 = vsel %vm2204, %v3668, -inf
    %v3811 = vrot.slane %v3810, 4
    %v3812 = vmax.f32 %v3810, %v3811
    %v3813 = vrot.slane %v3812, 2
    %v3814 = vmax.f32 %v3812, %v3813
    %v3815 = vrot.slane %v3814, 1
    %v3816 = vmax.f32 %v3814, %v3815
    %v3817 = vsel %vm2204, %v3645, -inf
    %v3818 = vrot.slane %v3817, 4
    %v3819 = vmax.f32 %v3817, %v3818
    %v3820 = vrot.slane %v3819, 2
    %v3821 = vmax.f32 %v3819, %v3820
    %v3822 = vrot.slane %v3821, 1
    %v3823 = vmax.f32 %v3821, %v3822
    %v3824 = vsel %vm2204, %v3669, -inf
    %v3825 = vrot.slane %v3824, 4
    %v3826 = vmax.f32 %v3824, %v3825
    %v3827 = vrot.slane %v3826, 2
    %v3828 = vmax.f32 %v3826, %v3827
    %v3829 = vrot.slane %v3828, 1
    %v3830 = vmax.f32 %v3828, %v3829
    %v3831 = vsel %vm2204, %v3670, -inf
    %v3832 = vrot.slane %v3831, 4
    %v3833 = vmax.f32 %v3831, %v3832
    %v3834 = vrot.slane %v3833, 2
    %v3835 = vmax.f32 %v3833, %v3834
    %v3836 = vrot.slane %v3835, 1
    %v3837 = vmax.f32 %v3835, %v3836
    %v3838 = vsel %vm2204, %v3671, -inf
    %v3839 = vrot.slane %v3838, 4
    %v3840 = vmax.f32 %v3838, %v3839
    %v3841 = vrot.slane %v3840, 2
    %v3842 = vmax.f32 %v3840, %v3841
    %v3843 = vrot.slane %v3842, 1
    %v3844 = vmax.f32 %v3842, %v3843
    %v3845 = vsel %vm2204, %v3646, -inf
    %v3846 = vrot.slane %v3845, 4
    %v3847 = vmax.f32 %v3845, %v3846
    %v3848 = vrot.slane %v3847, 2
    %v3849 = vmax.f32 %v3847, %v3848
    %v3850 = vrot.slane %v3849, 1
    %v3851 = vmax.f32 %v3849, %v3850
    %v3852 = vsel %vm2204, %v3672, -inf
    %v3853 = vrot.slane %v3852, 4
    %v3854 = vmax.f32 %v3852, %v3853
    %v3855 = vrot.slane %v3854, 2
    %v3856 = vmax.f32 %v3854, %v3855
    %v3857 = vrot.slane %v3856, 1
    %v3858 = vmax.f32 %v3856, %v3857
    %v3859 = vsel %vm2204, %v3673, -inf
    %v3860 = vrot.slane %v3859, 4
    %v3861 = vmax.f32 %v3859, %v3860
    %v3862 = vrot.slane %v3861, 2
    %v3863 = vmax.f32 %v3861, %v3862
    %v3864 = vrot.slane %v3863, 1
    %v3865 = vmax.f32 %v3863, %v3864
    %v3866 = vsel %vm2204, %v3674, -inf
    %v3867 = vrot.slane %v3866, 4
    %v3868 = vmax.f32 %v3866, %v3867
    %v3869 = vrot.slane %v3868, 2
    %v3870 = vmax.f32 %v3868, %v3869
    %v3871 = vrot.slane %v3870, 1
    %v3872 = vmax.f32 %v3870, %v3871
    %v3873 = vsel %vm2204, %v3647, -inf
    %v3874 = vrot.slane %v3873, 4
    %v3875 = vmax.f32 %v3873, %v3874
    %v3876 = vrot.slane %v3875, 2
    %v3877 = vmax.f32 %v3875, %v3876
    %v3878 = vrot.slane %v3877, 1
    %v3879 = vmax.f32 %v3877, %v3878
    %v3880 = vsel %vm2204, %v3675, -inf
    %v3881 = vrot.slane %v3880, 4
    %v3882 = vmax.f32 %v3880, %v3881
    %v3883 = vrot.slane %v3882, 2
    %v3884 = vmax.f32 %v3882, %v3883
    %v3885 = vrot.slane %v3884, 1
    %v3886 = vmax.f32 %v3884, %v3885
    %v3887 = vsel %vm2204, %v3676, -inf
    %v3888 = vrot.slane %v3887, 4
    %v3889 = vmax.f32 %v3887, %v3888
    %v3890 = vrot.slane %v3889, 2
    %v3891 = vmax.f32 %v3889, %v3890
    %v3892 = vrot.slane %v3891, 1
    %v3893 = vmax.f32 %v3891, %v3892
    %v3894 = vsel %vm2204, %v3677, -inf
    %v3895 = vrot.slane %v3894, 4
    %v3896 = vmax.f32 %v3894, %v3895
    %v3897 = vrot.slane %v3896, 2
    %v3898 = vmax.f32 %v3896, %v3897
    %v3899 = vrot.slane %v3898, 1
    %v3900 = vmax.f32 %v3898, %v3899
    %v3901 = vsel %vm2204, %v3648, -inf
    %v3902 = vrot.slane %v3901, 4
    %v3903 = vmax.f32 %v3901, %v3902
    %v3904 = vrot.slane %v3903, 2
    %v3905 = vmax.f32 %v3903, %v3904
    %v3906 = vrot.slane %v3905, 1
    %v3907 = vmax.f32 %v3905, %v3906
    %v3908 = vsel %vm2204, %v3678, -inf
    %v3909 = vrot.slane %v3908, 4
    %v3910 = vmax.f32 %v3908, %v3909
    %v3911 = vrot.slane %v3910, 2
    %v3912 = vmax.f32 %v3910, %v3911
    %v3913 = vrot.slane %v3912, 1
    %v3914 = vmax.f32 %v3912, %v3913
    %v3915 = vsel %vm2204, %v3679, -inf
    %v3916 = vrot.slane %v3915, 4
    %v3917 = vmax.f32 %v3915, %v3916
    %v3918 = vrot.slane %v3917, 2
    %v3919 = vmax.f32 %v3917, %v3918
    %v3920 = vrot.slane %v3919, 1
    %v3921 = vmax.f32 %v3919, %v3920
    %v3922 = vsel %vm2204, %v3680, -inf
    %v3923 = vrot.slane %v3922, 4
    %v3924 = vmax.f32 %v3922, %v3923
    %v3925 = vrot.slane %v3924, 2
    %v3926 = vmax.f32 %v3924, %v3925
    %v3927 = vrot.slane %v3926, 1
    %v3928 = vmax.f32 %v3926, %v3927
    %3929 = vst [vmem:[#allocation3] sm:$0x1] %v3711
    %3930 = vst [vmem:[#allocation3 + $0x2] sm:$0x1] %v3718
    %3931 = vst [vmem:[#allocation3 + $0x4] sm:$0x1] %v3725
    %3932 = vst [vmem:[#allocation3 + $0x6] sm:$0x1] %v3732
    %3933 = vst [vmem:[#allocation3 + $0x8] sm:$0x1] %v3739
    %3934 = vst [vmem:[#allocation3 + $0xa] sm:$0x1] %v3746
    %3935 = vst [vmem:[#allocation3 + $0xc] sm:$0x1] %v3753
    %3936 = vst [vmem:[#allocation3 + $0xe] sm:$0x1] %v3760
    %3937 = vst [vmem:[#allocation3 + $0x10] sm:$0x1] %v3767
    %3938 = vst [vmem:[#allocation3 + $0x12] sm:$0x1] %v3774
    %3939 = vst [vmem:[#allocation3 + $0x14] sm:$0x1] %v3781
    %3940 = vst [vmem:[#allocation3 + $0x16] sm:$0x1] %v3788
    %3941 = vst [vmem:[#allocation3 + $0x18] sm:$0x1] %v3795
    %3942 = vst [vmem:[#allocation3 + $0x1a] sm:$0x1] %v3802
    %3943 = vst [vmem:[#allocation3 + $0x1c] sm:$0x1] %v3809
    %3944 = vst [vmem:[#allocation3 + $0x1e] sm:$0x1] %v3816
    %3945 = vst [vmem:[#allocation3 + $0x1] sm:$0x1] %v3823
    %3946 = vst [vmem:[#allocation3 + $0x3] sm:$0x1] %v3830
    %3947 = vst [vmem:[#allocation3 + $0x5] sm:$0x1] %v3837
    %3948 = vst [vmem:[#allocation3 + $0x7] sm:$0x1] %v3844
    %3949 = vst [vmem:[#allocation3 + $0x9] sm:$0x1] %v3851
    %3950 = vst [vmem:[#allocation3 + $0xb] sm:$0x1] %v3858
    %3951 = vst [vmem:[#allocation3 + $0xd] sm:$0x1] %v3865
    %3952 = vst [vmem:[#allocation3 + $0xf] sm:$0x1] %v3872
    %3953 = vst [vmem:[#allocation3 + $0x11] sm:$0x1] %v3879
    %3954 = vst [vmem:[#allocation3 + $0x13] sm:$0x1] %v3886
    %3955 = vst [vmem:[#allocation3 + $0x15] sm:$0x1] %v3893
    %3956 = vst [vmem:[#allocation3 + $0x17] sm:$0x1] %v3900
    %3957 = vst [vmem:[#allocation3 + $0x19] sm:$0x1] %v3907
    %3958 = vst [vmem:[#allocation3 + $0x1b] sm:$0x1] %v3914
    %3959 = vst [vmem:[#allocation3 + $0x1d] sm:$0x1] %v3921
    %3960 = vst [vmem:[#allocation3 + $0x1f] sm:$0x1] %v3928
    %v3961 = vld [vmem:[#allocation3] sm:$0xff]
    %v3962 = vld [vmem:[#allocation3 + $0x8] sm:$0xff]
    %v3963 = vld [vmem:[#allocation3 + $0x10] sm:$0xff]
    %v3964 = vld [vmem:[#allocation3 + $0x18] sm:$0xff]
    %3969 = vst [vmem:[#allocation1] ss:$4 sm:$0xff] %v3961
    %s3970 = scalar_lea.vmem [#allocation1], 32
    %3971 = vst [vmem:[%s3970] ss:$4 sm:$0xff] %v3962
    %v3972 = vld.sshfl [vmem:[#allocation1] sm:$0xff pattern:$0x73625140]
    %v3973 = vld.sshfl [vmem:[#allocation1 + $0x8] sm:$0xff pattern:$0x73625140]
    %v3974 = vld.sshfl [vmem:[#allocation1 + $0x10] sm:$0xff pattern:$0x73625140]
    %v3975 = vld.sshfl [vmem:[#allocation1 + $0x18] sm:$0xff pattern:$0x73625140]
    %v3976 = vld.sshfl [vmem:[#allocation1 + $0x20] sm:$0xff pattern:$0x73625140]
    %v3977 = vld.sshfl [vmem:[#allocation1 + $0x28] sm:$0xff pattern:$0x73625140]
    %v3978 = vld.sshfl [vmem:[#allocation1 + $0x30] sm:$0xff pattern:$0x73625140]
    %v3979 = vld.sshfl [vmem:[#allocation1 + $0x38] sm:$0xff pattern:$0x73625140]
    %3980 = vst [vmem:[#allocation1] ss:$4 sm:$0xff] %v3963
    %3981 = vst [vmem:[%s3970] ss:$4 sm:$0xff] %v3964
    %v3982 = vld.sshfl [vmem:[#allocation1] sm:$0xff pattern:$0x73625140]
    %v3983 = vld.sshfl [vmem:[#allocation1 + $0x8] sm:$0xff pattern:$0x73625140]
    %v3984 = vld.sshfl [vmem:[#allocation1 + $0x10] sm:$0xff pattern:$0x73625140]
    %v3985 = vld.sshfl [vmem:[#allocation1 + $0x18] sm:$0xff pattern:$0x73625140]
    %v3986 = vld.sshfl [vmem:[#allocation1 + $0x20] sm:$0xff pattern:$0x73625140]
    %v3987 = vld.sshfl [vmem:[#allocation1 + $0x28] sm:$0xff pattern:$0x73625140]
    %v3988 = vld.sshfl [vmem:[#allocation1 + $0x30] sm:$0xff pattern:$0x73625140]
    %v3989 = vld.sshfl [vmem:[#allocation1 + $0x38] sm:$0xff pattern:$0x73625140]
    %v4006 = vpack.c.bf16 %v3972, %v3972
    %v4007 = vpack.c.bf16 %v3973, %v3973
    %v4008 = vpack.c.bf16 %v3974, %v3974
    %v4009 = vpack.c.bf16 %v3975, %v3975
    %v4010 = vpack.c.bf16 %v3976, %v3976
    %v4011 = vpack.c.bf16 %v3977, %v3977
    %v4012 = vpack.c.bf16 %v3978, %v3978
    %v4013 = vpack.c.bf16 %v3979, %v3979
    %v4014 = vpack.c.bf16 %v3982, %v3982
    %v4015 = vpack.c.bf16 %v3983, %v3983
    %v4016 = vpack.c.bf16 %v3984, %v3984
    %v4017 = vpack.c.bf16 %v3985, %v3985
    %v4018 = vpack.c.bf16 %v3986, %v3986
    %v4019 = vpack.c.bf16 %v3987, %v3987
    %v4020 = vpack.c.bf16 %v3988, %v3988
    %v4021 = vpack.c.bf16 %v3989, %v3989
    %v4022 = vld [vmem:[%s9] sm:$0xf]
    %v4023 = vld [vmem:[%s9 + $0x4] sm:$0xf]
    %v4024 = vld [vmem:[%s9 + $0x8] sm:$0xf]
    %v4025 = vld [vmem:[%s9 + $0xc] sm:$0xf]
    %v4026 = vld [vmem:[%s9 + $0x10] sm:$0xf]
    %v4027 = vld [vmem:[%s9 + $0x14] sm:$0xf]
    %v4028 = vld [vmem:[%s9 + $0x18] sm:$0xf]
    %v4029 = vld [vmem:[%s9 + $0x1c] sm:$0xf]
    %v4030 = vld [vmem:[%s9 + $0x20] sm:$0xf]
    %v4031 = vld [vmem:[%s9 + $0x24] sm:$0xf]
    %v4032 = vld [vmem:[%s9 + $0x28] sm:$0xf]
    %v4033 = vld [vmem:[%s9 + $0x2c] sm:$0xf]
    %v4034 = vld [vmem:[%s9 + $0x30] sm:$0xf]
    %v4035 = vld [vmem:[%s9 + $0x34] sm:$0xf]
    %v4036 = vld [vmem:[%s9 + $0x38] sm:$0xf]
    %v4037 = vld [vmem:[%s9 + $0x3c] sm:$0xf]
    %v4038 = vld [vmem:[%s9 + $0x40] sm:$0xf]
    %v4039 = vld [vmem:[%s9 + $0x44] sm:$0xf]
    %v4040 = vld [vmem:[%s9 + $0x48] sm:$0xf]
    %v4041 = vld [vmem:[%s9 + $0x4c] sm:$0xf]
    %v4042 = vld [vmem:[%s9 + $0x50] sm:$0xf]
    %v4043 = vld [vmem:[%s9 + $0x54] sm:$0xf]
    %v4044 = vld [vmem:[%s9 + $0x58] sm:$0xf]
    %v4045 = vld [vmem:[%s9 + $0x5c] sm:$0xf]
    %v4046 = vld [vmem:[%s9 + $0x60] sm:$0xf]
    %v4047 = vld [vmem:[%s9 + $0x64] sm:$0xf]
    %v4048 = vld [vmem:[%s9 + $0x68] sm:$0xf]
    %v4049 = vld [vmem:[%s9 + $0x6c] sm:$0xf]
    %v4050 = vld [vmem:[%s9 + $0x70] sm:$0xf]
    %v4051 = vld [vmem:[%s9 + $0x74] sm:$0xf]
    %v4052 = vld [vmem:[%s9 + $0x78] sm:$0xf]
    %v4053 = vld [vmem:[%s9 + $0x7c] sm:$0xf]
    %v4054 = vld [vmem:[%s9 + $0x80] sm:$0xf]
    %v4055 = vld [vmem:[%s9 + $0x84] sm:$0xf]
    %v4056 = vld [vmem:[%s9 + $0x88] sm:$0xf]
    %v4057 = vld [vmem:[%s9 + $0x8c] sm:$0xf]
    %v4058 = vld [vmem:[%s9 + $0x90] sm:$0xf]
    %v4059 = vld [vmem:[%s9 + $0x94] sm:$0xf]
    %v4060 = vld [vmem:[%s9 + $0x98] sm:$0xf]
    %v4061 = vld [vmem:[%s9 + $0x9c] sm:$0xf]
    %v4062 = vld [vmem:[%s9 + $0xa0] sm:$0xf]
    %v4063 = vld [vmem:[%s9 + $0xa4] sm:$0xf]
    %v4064 = vld [vmem:[%s9 + $0xa8] sm:$0xf]
    %v4065 = vld [vmem:[%s9 + $0xac] sm:$0xf]
    %v4066 = vld [vmem:[%s9 + $0xb0] sm:$0xf]
    %v4067 = vld [vmem:[%s9 + $0xb4] sm:$0xf]
    %v4068 = vld [vmem:[%s9 + $0xb8] sm:$0xf]
    %v4069 = vld [vmem:[%s9 + $0xbc] sm:$0xf]
    %v4070 = vld [vmem:[%s9 + $0xc0] sm:$0xf]
    %v4071 = vld [vmem:[%s9 + $0xc4] sm:$0xf]
    %v4072 = vld [vmem:[%s9 + $0xc8] sm:$0xf]
    %v4073 = vld [vmem:[%s9 + $0xcc] sm:$0xf]
    %v4074 = vld [vmem:[%s9 + $0xd0] sm:$0xf]
    %v4075 = vld [vmem:[%s9 + $0xd4] sm:$0xf]
    %v4076 = vld [vmem:[%s9 + $0xd8] sm:$0xf]
    %v4077 = vld [vmem:[%s9 + $0xdc] sm:$0xf]
    %v4078 = vld [vmem:[%s9 + $0xe0] sm:$0xf]
    %v4079 = vld [vmem:[%s9 + $0xe4] sm:$0xf]
    %v4080 = vld [vmem:[%s9 + $0xe8] sm:$0xf]
    %v4081 = vld [vmem:[%s9 + $0xec] sm:$0xf]
    %v4082 = vld [vmem:[%s9 + $0xf0] sm:$0xf]
    %v4083 = vld [vmem:[%s9 + $0xf4] sm:$0xf]
    %v4084 = vld [vmem:[%s9 + $0xf8] sm:$0xf]
    %v4085 = vld [vmem:[%s9 + $0xfc] sm:$0xf]
    %v4086 = vld [vmem:[%s9 + $0x100] sm:$0xf]
    %v4087 = vld [vmem:[%s9 + $0x104] sm:$0xf]
    %v4088 = vld [vmem:[%s9 + $0x108] sm:$0xf]
    %v4089 = vld [vmem:[%s9 + $0x10c] sm:$0xf]
    %v4090 = vld [vmem:[%s9 + $0x110] sm:$0xf]
    %v4091 = vld [vmem:[%s9 + $0x114] sm:$0xf]
    %v4092 = vld [vmem:[%s9 + $0x118] sm:$0xf]
    %v4093 = vld [vmem:[%s9 + $0x11c] sm:$0xf]
    %v4094 = vld [vmem:[%s9 + $0x120] sm:$0xf]
    %v4095 = vld [vmem:[%s9 + $0x124] sm:$0xf]
    %v4096 = vld [vmem:[%s9 + $0x128] sm:$0xf]
    %v4097 = vld [vmem:[%s9 + $0x12c] sm:$0xf]
    %v4098 = vld [vmem:[%s9 + $0x130] sm:$0xf]
    %v4099 = vld [vmem:[%s9 + $0x134] sm:$0xf]
    %v4100 = vld [vmem:[%s9 + $0x138] sm:$0xf]
    %v4101 = vld [vmem:[%s9 + $0x13c] sm:$0xf]
    %v4102 = vld [vmem:[%s9 + $0x140] sm:$0xf]
    %v4103 = vld [vmem:[%s9 + $0x144] sm:$0xf]
    %v4104 = vld [vmem:[%s9 + $0x148] sm:$0xf]
    %v4105 = vld [vmem:[%s9 + $0x14c] sm:$0xf]
    %v4106 = vld [vmem:[%s9 + $0x150] sm:$0xf]
    %v4107 = vld [vmem:[%s9 + $0x154] sm:$0xf]
    %v4108 = vld [vmem:[%s9 + $0x158] sm:$0xf]
    %v4109 = vld [vmem:[%s9 + $0x15c] sm:$0xf]
    %v4110 = vld [vmem:[%s9 + $0x160] sm:$0xf]
    %v4111 = vld [vmem:[%s9 + $0x164] sm:$0xf]
    %v4112 = vld [vmem:[%s9 + $0x168] sm:$0xf]
    %v4113 = vld [vmem:[%s9 + $0x16c] sm:$0xf]
    %v4114 = vld [vmem:[%s9 + $0x170] sm:$0xf]
    %v4115 = vld [vmem:[%s9 + $0x174] sm:$0xf]
    %v4116 = vld [vmem:[%s9 + $0x178] sm:$0xf]
    %v4117 = vld [vmem:[%s9 + $0x17c] sm:$0xf]
    %v4118 = vld [vmem:[%s9 + $0x180] sm:$0xf]
    %v4119 = vld [vmem:[%s9 + $0x184] sm:$0xf]
    %v4120 = vld [vmem:[%s9 + $0x188] sm:$0xf]
    %v4121 = vld [vmem:[%s9 + $0x18c] sm:$0xf]
    %v4122 = vld [vmem:[%s9 + $0x190] sm:$0xf]
    %v4123 = vld [vmem:[%s9 + $0x194] sm:$0xf]
    %v4124 = vld [vmem:[%s9 + $0x198] sm:$0xf]
    %v4125 = vld [vmem:[%s9 + $0x19c] sm:$0xf]
    %v4126 = vld [vmem:[%s9 + $0x1a0] sm:$0xf]
    %v4127 = vld [vmem:[%s9 + $0x1a4] sm:$0xf]
    %v4128 = vld [vmem:[%s9 + $0x1a8] sm:$0xf]
    %v4129 = vld [vmem:[%s9 + $0x1ac] sm:$0xf]
    %v4130 = vld [vmem:[%s9 + $0x1b0] sm:$0xf]
    %v4131 = vld [vmem:[%s9 + $0x1b4] sm:$0xf]
    %v4132 = vld [vmem:[%s9 + $0x1b8] sm:$0xf]
    %v4133 = vld [vmem:[%s9 + $0x1bc] sm:$0xf]
    %v4134 = vld [vmem:[%s9 + $0x1c0] sm:$0xf]
    %v4135 = vld [vmem:[%s9 + $0x1c4] sm:$0xf]
    %v4136 = vld [vmem:[%s9 + $0x1c8] sm:$0xf]
    %v4137 = vld [vmem:[%s9 + $0x1cc] sm:$0xf]
    %v4138 = vld [vmem:[%s9 + $0x1d0] sm:$0xf]
    %v4139 = vld [vmem:[%s9 + $0x1d4] sm:$0xf]
    %v4140 = vld [vmem:[%s9 + $0x1d8] sm:$0xf]
    %v4141 = vld [vmem:[%s9 + $0x1dc] sm:$0xf]
    %v4142 = vld [vmem:[%s9 + $0x1e0] sm:$0xf]
    %v4143 = vld [vmem:[%s9 + $0x1e4] sm:$0xf]
    %v4144 = vld [vmem:[%s9 + $0x1e8] sm:$0xf]
    %v4145 = vld [vmem:[%s9 + $0x1ec] sm:$0xf]
    %v4146 = vld [vmem:[%s9 + $0x1f0] sm:$0xf]
    %v4147 = vld [vmem:[%s9 + $0x1f4] sm:$0xf]
    %v4148 = vld [vmem:[%s9 + $0x1f8] sm:$0xf]
    %v4149 = vld [vmem:[%s9 + $0x1fc] sm:$0xf]
    %v4150 = vld [vmem:[%s9 + $0x200] sm:$0xf]
    %v4151 = vld [vmem:[%s9 + $0x204] sm:$0xf]
    %v4152 = vld [vmem:[%s9 + $0x208] sm:$0xf]
    %v4153 = vld [vmem:[%s9 + $0x20c] sm:$0xf]
    %v4154 = vld [vmem:[%s9 + $0x210] sm:$0xf]
    %v4155 = vld [vmem:[%s9 + $0x214] sm:$0xf]
    %v4156 = vld [vmem:[%s9 + $0x218] sm:$0xf]
    %v4157 = vld [vmem:[%s9 + $0x21c] sm:$0xf]
    %v4158 = vld [vmem:[%s9 + $0x220] sm:$0xf]
    %v4159 = vld [vmem:[%s9 + $0x224] sm:$0xf]
    %v4160 = vld [vmem:[%s9 + $0x228] sm:$0xf]
    %v4161 = vld [vmem:[%s9 + $0x22c] sm:$0xf]
    %v4162 = vld [vmem:[%s9 + $0x230] sm:$0xf]
    %v4163 = vld [vmem:[%s9 + $0x234] sm:$0xf]
    %v4164 = vld [vmem:[%s9 + $0x238] sm:$0xf]
    %v4165 = vld [vmem:[%s9 + $0x23c] sm:$0xf]
    %v4166 = vld [vmem:[%s9 + $0x240] sm:$0xf]
    %v4167 = vld [vmem:[%s9 + $0x244] sm:$0xf]
    %v4168 = vld [vmem:[%s9 + $0x248] sm:$0xf]
    %v4169 = vld [vmem:[%s9 + $0x24c] sm:$0xf]
    %v4170 = vld [vmem:[%s9 + $0x250] sm:$0xf]
    %v4171 = vld [vmem:[%s9 + $0x254] sm:$0xf]
    %v4172 = vld [vmem:[%s9 + $0x258] sm:$0xf]
    %v4173 = vld [vmem:[%s9 + $0x25c] sm:$0xf]
    %v4174 = vld [vmem:[%s9 + $0x260] sm:$0xf]
    %v4175 = vld [vmem:[%s9 + $0x264] sm:$0xf]
    %v4176 = vld [vmem:[%s9 + $0x268] sm:$0xf]
    %v4177 = vld [vmem:[%s9 + $0x26c] sm:$0xf]
    %v4178 = vld [vmem:[%s9 + $0x270] sm:$0xf]
    %v4179 = vld [vmem:[%s9 + $0x274] sm:$0xf]
    %v4180 = vld [vmem:[%s9 + $0x278] sm:$0xf]
    %v4181 = vld [vmem:[%s9 + $0x27c] sm:$0xf]
    %v4182 = vld [vmem:[%s9 + $0x280] sm:$0xf]
    %v4183 = vld [vmem:[%s9 + $0x284] sm:$0xf]
    %v4184 = vld [vmem:[%s9 + $0x288] sm:$0xf]
    %v4185 = vld [vmem:[%s9 + $0x28c] sm:$0xf]
    %v4186 = vld [vmem:[%s9 + $0x290] sm:$0xf]
    %v4187 = vld [vmem:[%s9 + $0x294] sm:$0xf]
    %v4188 = vld [vmem:[%s9 + $0x298] sm:$0xf]
    %v4189 = vld [vmem:[%s9 + $0x29c] sm:$0xf]
    %v4190 = vld [vmem:[%s9 + $0x2a0] sm:$0xf]
    %v4191 = vld [vmem:[%s9 + $0x2a4] sm:$0xf]
    %v4192 = vld [vmem:[%s9 + $0x2a8] sm:$0xf]
    %v4193 = vld [vmem:[%s9 + $0x2ac] sm:$0xf]
    %v4194 = vld [vmem:[%s9 + $0x2b0] sm:$0xf]
    %v4195 = vld [vmem:[%s9 + $0x2b4] sm:$0xf]
    %v4196 = vld [vmem:[%s9 + $0x2b8] sm:$0xf]
    %v4197 = vld [vmem:[%s9 + $0x2bc] sm:$0xf]
    %v4198 = vld [vmem:[%s9 + $0x2c0] sm:$0xf]
    %v4199 = vld [vmem:[%s9 + $0x2c4] sm:$0xf]
    %v4200 = vld [vmem:[%s9 + $0x2c8] sm:$0xf]
    %v4201 = vld [vmem:[%s9 + $0x2cc] sm:$0xf]
    %v4202 = vld [vmem:[%s9 + $0x2d0] sm:$0xf]
    %v4203 = vld [vmem:[%s9 + $0x2d4] sm:$0xf]
    %v4204 = vld [vmem:[%s9 + $0x2d8] sm:$0xf]
    %v4205 = vld [vmem:[%s9 + $0x2dc] sm:$0xf]
    %v4206 = vld [vmem:[%s9 + $0x2e0] sm:$0xf]
    %v4207 = vld [vmem:[%s9 + $0x2e4] sm:$0xf]
    %v4208 = vld [vmem:[%s9 + $0x2e8] sm:$0xf]
    %v4209 = vld [vmem:[%s9 + $0x2ec] sm:$0xf]
    %v4210 = vld [vmem:[%s9 + $0x2f0] sm:$0xf]
    %v4211 = vld [vmem:[%s9 + $0x2f4] sm:$0xf]
    %v4212 = vld [vmem:[%s9 + $0x2f8] sm:$0xf]
    %v4213 = vld [vmem:[%s9 + $0x2fc] sm:$0xf]
    %v4214 = vld [vmem:[%s9 + $0x300] sm:$0xf]
    %v4215 = vld [vmem:[%s9 + $0x304] sm:$0xf]
    %v4216 = vld [vmem:[%s9 + $0x308] sm:$0xf]
    %v4217 = vld [vmem:[%s9 + $0x30c] sm:$0xf]
    %v4218 = vld [vmem:[%s9 + $0x310] sm:$0xf]
    %v4219 = vld [vmem:[%s9 + $0x314] sm:$0xf]
    %v4220 = vld [vmem:[%s9 + $0x318] sm:$0xf]
    %v4221 = vld [vmem:[%s9 + $0x31c] sm:$0xf]
    %v4222 = vld [vmem:[%s9 + $0x320] sm:$0xf]
    %v4223 = vld [vmem:[%s9 + $0x324] sm:$0xf]
    %v4224 = vld [vmem:[%s9 + $0x328] sm:$0xf]
    %v4225 = vld [vmem:[%s9 + $0x32c] sm:$0xf]
    %v4226 = vld [vmem:[%s9 + $0x330] sm:$0xf]
    %v4227 = vld [vmem:[%s9 + $0x334] sm:$0xf]
    %v4228 = vld [vmem:[%s9 + $0x338] sm:$0xf]
    %v4229 = vld [vmem:[%s9 + $0x33c] sm:$0xf]
    %v4230 = vld [vmem:[%s9 + $0x340] sm:$0xf]
    %v4231 = vld [vmem:[%s9 + $0x344] sm:$0xf]
    %v4232 = vld [vmem:[%s9 + $0x348] sm:$0xf]
    %v4233 = vld [vmem:[%s9 + $0x34c] sm:$0xf]
    %v4234 = vld [vmem:[%s9 + $0x350] sm:$0xf]
    %v4235 = vld [vmem:[%s9 + $0x354] sm:$0xf]
    %v4236 = vld [vmem:[%s9 + $0x358] sm:$0xf]
    %v4237 = vld [vmem:[%s9 + $0x35c] sm:$0xf]
    %v4238 = vld [vmem:[%s9 + $0x360] sm:$0xf]
    %v4239 = vld [vmem:[%s9 + $0x364] sm:$0xf]
    %v4240 = vld [vmem:[%s9 + $0x368] sm:$0xf]
    %v4241 = vld [vmem:[%s9 + $0x36c] sm:$0xf]
    %v4242 = vld [vmem:[%s9 + $0x370] sm:$0xf]
    %v4243 = vld [vmem:[%s9 + $0x374] sm:$0xf]
    %v4244 = vld [vmem:[%s9 + $0x378] sm:$0xf]
    %v4245 = vld [vmem:[%s9 + $0x37c] sm:$0xf]
    %v4246 = vld [vmem:[%s9 + $0x380] sm:$0xf]
    %v4247 = vld [vmem:[%s9 + $0x384] sm:$0xf]
    %v4248 = vld [vmem:[%s9 + $0x388] sm:$0xf]
    %v4249 = vld [vmem:[%s9 + $0x38c] sm:$0xf]
    %v4250 = vld [vmem:[%s9 + $0x390] sm:$0xf]
    %v4251 = vld [vmem:[%s9 + $0x394] sm:$0xf]
    %v4252 = vld [vmem:[%s9 + $0x398] sm:$0xf]
    %v4253 = vld [vmem:[%s9 + $0x39c] sm:$0xf]
    %v4254 = vld [vmem:[%s9 + $0x3a0] sm:$0xf]
    %v4255 = vld [vmem:[%s9 + $0x3a4] sm:$0xf]
    %v4256 = vld [vmem:[%s9 + $0x3a8] sm:$0xf]
    %v4257 = vld [vmem:[%s9 + $0x3ac] sm:$0xf]
    %v4258 = vld [vmem:[%s9 + $0x3b0] sm:$0xf]
    %v4259 = vld [vmem:[%s9 + $0x3b4] sm:$0xf]
    %v4260 = vld [vmem:[%s9 + $0x3b8] sm:$0xf]
    %v4261 = vld [vmem:[%s9 + $0x3bc] sm:$0xf]
    %v4262 = vld [vmem:[%s9 + $0x3c0] sm:$0xf]
    %v4263 = vld [vmem:[%s9 + $0x3c4] sm:$0xf]
    %v4264 = vld [vmem:[%s9 + $0x3c8] sm:$0xf]
    %v4265 = vld [vmem:[%s9 + $0x3cc] sm:$0xf]
    %v4266 = vld [vmem:[%s9 + $0x3d0] sm:$0xf]
    %v4267 = vld [vmem:[%s9 + $0x3d4] sm:$0xf]
    %v4268 = vld [vmem:[%s9 + $0x3d8] sm:$0xf]
    %v4269 = vld [vmem:[%s9 + $0x3dc] sm:$0xf]
    %v4270 = vld [vmem:[%s9 + $0x3e0] sm:$0xf]
    %v4271 = vld [vmem:[%s9 + $0x3e4] sm:$0xf]
    %v4272 = vld [vmem:[%s9 + $0x3e8] sm:$0xf]
    %v4273 = vld [vmem:[%s9 + $0x3ec] sm:$0xf]
    %v4274 = vld [vmem:[%s9 + $0x3f0] sm:$0xf]
    %v4275 = vld [vmem:[%s9 + $0x3f4] sm:$0xf]
    %v4276 = vld [vmem:[%s9 + $0x3f8] sm:$0xf]
    %v4277 = vld [vmem:[%s9 + $0x3fc] sm:$0xf]
    %v4278 = vld [vmem:[%s10] sm:$0x1]
    %v4280 = vperm.slane %v4278, 0
    %v4538 = vunpack.c.l.b16 %v4022
    %v4539 = vunpack.c.l.b16 %v4023
    %v4540 = vunpack.c.l.b16 %v4024
    %v4541 = vunpack.c.l.b16 %v4025
    %v4542 = vunpack.c.l.b16 %v4026
    %v4543 = vunpack.c.l.b16 %v4027
    %v4544 = vunpack.c.l.b16 %v4028
    %v4545 = vunpack.c.l.b16 %v4029
    %v4546 = vunpack.c.l.b16 %v4030
    %v4547 = vunpack.c.l.b16 %v4031
    %v4548 = vunpack.c.l.b16 %v4032
    %v4549 = vunpack.c.l.b16 %v4033
    %v4550 = vunpack.c.l.b16 %v4034
    %v4551 = vunpack.c.l.b16 %v4035
    %v4552 = vunpack.c.l.b16 %v4036
    %v4553 = vunpack.c.l.b16 %v4037
    %v4554 = vunpack.c.l.b16 %v4038
    %v4555 = vunpack.c.l.b16 %v4039
    %v4556 = vunpack.c.l.b16 %v4040
    %v4557 = vunpack.c.l.b16 %v4041
    %v4558 = vunpack.c.l.b16 %v4042
    %v4559 = vunpack.c.l.b16 %v4043
    %v4560 = vunpack.c.l.b16 %v4044
    %v4561 = vunpack.c.l.b16 %v4045
    %v4562 = vunpack.c.l.b16 %v4046
    %v4563 = vunpack.c.l.b16 %v4047
    %v4564 = vunpack.c.l.b16 %v4048
    %v4565 = vunpack.c.l.b16 %v4049
    %v4566 = vunpack.c.l.b16 %v4050
    %v4567 = vunpack.c.l.b16 %v4051
    %v4568 = vunpack.c.l.b16 %v4052
    %v4569 = vunpack.c.l.b16 %v4053
    %v4570 = vunpack.c.l.b16 %v4054
    %v4571 = vunpack.c.l.b16 %v4055
    %v4572 = vunpack.c.l.b16 %v4056
    %v4573 = vunpack.c.l.b16 %v4057
    %v4574 = vunpack.c.l.b16 %v4058
    %v4575 = vunpack.c.l.b16 %v4059
    %v4576 = vunpack.c.l.b16 %v4060
    %v4577 = vunpack.c.l.b16 %v4061
    %v4578 = vunpack.c.l.b16 %v4062
    %v4579 = vunpack.c.l.b16 %v4063
    %v4580 = vunpack.c.l.b16 %v4064
    %v4581 = vunpack.c.l.b16 %v4065
    %v4582 = vunpack.c.l.b16 %v4066
    %v4583 = vunpack.c.l.b16 %v4067
    %v4584 = vunpack.c.l.b16 %v4068
    %v4585 = vunpack.c.l.b16 %v4069
    %v4586 = vunpack.c.l.b16 %v4070
    %v4587 = vunpack.c.l.b16 %v4071
    %v4588 = vunpack.c.l.b16 %v4072
    %v4589 = vunpack.c.l.b16 %v4073
    %v4590 = vunpack.c.l.b16 %v4074
    %v4591 = vunpack.c.l.b16 %v4075
    %v4592 = vunpack.c.l.b16 %v4076
    %v4593 = vunpack.c.l.b16 %v4077
    %v4594 = vunpack.c.l.b16 %v4078
    %v4595 = vunpack.c.l.b16 %v4079
    %v4596 = vunpack.c.l.b16 %v4080
    %v4597 = vunpack.c.l.b16 %v4081
    %v4598 = vunpack.c.l.b16 %v4082
    %v4599 = vunpack.c.l.b16 %v4083
    %v4600 = vunpack.c.l.b16 %v4084
    %v4601 = vunpack.c.l.b16 %v4085
    %v4602 = vunpack.c.l.b16 %v4086
    %v4603 = vunpack.c.l.b16 %v4087
    %v4604 = vunpack.c.l.b16 %v4088
    %v4605 = vunpack.c.l.b16 %v4089
    %v4606 = vunpack.c.l.b16 %v4090
    %v4607 = vunpack.c.l.b16 %v4091
    %v4608 = vunpack.c.l.b16 %v4092
    %v4609 = vunpack.c.l.b16 %v4093
    %v4610 = vunpack.c.l.b16 %v4094
    %v4611 = vunpack.c.l.b16 %v4095
    %v4612 = vunpack.c.l.b16 %v4096
    %v4613 = vunpack.c.l.b16 %v4097
    %v4614 = vunpack.c.l.b16 %v4098
    %v4615 = vunpack.c.l.b16 %v4099
    %v4616 = vunpack.c.l.b16 %v4100
    %v4617 = vunpack.c.l.b16 %v4101
    %v4618 = vunpack.c.l.b16 %v4102
    %v4619 = vunpack.c.l.b16 %v4103
    %v4620 = vunpack.c.l.b16 %v4104
    %v4621 = vunpack.c.l.b16 %v4105
    %v4622 = vunpack.c.l.b16 %v4106
    %v4623 = vunpack.c.l.b16 %v4107
    %v4624 = vunpack.c.l.b16 %v4108
    %v4625 = vunpack.c.l.b16 %v4109
    %v4626 = vunpack.c.l.b16 %v4110
    %v4627 = vunpack.c.l.b16 %v4111
    %v4628 = vunpack.c.l.b16 %v4112
    %v4629 = vunpack.c.l.b16 %v4113
    %v4630 = vunpack.c.l.b16 %v4114
    %v4631 = vunpack.c.l.b16 %v4115
    %v4632 = vunpack.c.l.b16 %v4116
    %v4633 = vunpack.c.l.b16 %v4117
    %v4634 = vunpack.c.l.b16 %v4118
    %v4635 = vunpack.c.l.b16 %v4119
    %v4636 = vunpack.c.l.b16 %v4120
    %v4637 = vunpack.c.l.b16 %v4121
    %v4638 = vunpack.c.l.b16 %v4122
    %v4639 = vunpack.c.l.b16 %v4123
    %v4640 = vunpack.c.l.b16 %v4124
    %v4641 = vunpack.c.l.b16 %v4125
    %v4642 = vunpack.c.l.b16 %v4126
    %v4643 = vunpack.c.l.b16 %v4127
    %v4644 = vunpack.c.l.b16 %v4128
    %v4645 = vunpack.c.l.b16 %v4129
    %v4646 = vunpack.c.l.b16 %v4130
    %v4647 = vunpack.c.l.b16 %v4131
    %v4648 = vunpack.c.l.b16 %v4132
    %v4649 = vunpack.c.l.b16 %v4133
    %v4650 = vunpack.c.l.b16 %v4134
    %v4651 = vunpack.c.l.b16 %v4135
    %v4652 = vunpack.c.l.b16 %v4136
    %v4653 = vunpack.c.l.b16 %v4137
    %v4654 = vunpack.c.l.b16 %v4138
    %v4655 = vunpack.c.l.b16 %v4139
    %v4656 = vunpack.c.l.b16 %v4140
    %v4657 = vunpack.c.l.b16 %v4141
    %v4658 = vunpack.c.l.b16 %v4142
    %v4659 = vunpack.c.l.b16 %v4143
    %v4660 = vunpack.c.l.b16 %v4144
    %v4661 = vunpack.c.l.b16 %v4145
    %v4662 = vunpack.c.l.b16 %v4146
    %v4663 = vunpack.c.l.b16 %v4147
    %v4664 = vunpack.c.l.b16 %v4148
    %v4665 = vunpack.c.l.b16 %v4149
    %v4666 = vunpack.c.l.b16 %v4150
    %v4667 = vunpack.c.l.b16 %v4151
    %v4668 = vunpack.c.l.b16 %v4152
    %v4669 = vunpack.c.l.b16 %v4153
    %v4670 = vunpack.c.l.b16 %v4154
    %v4671 = vunpack.c.l.b16 %v4155
    %v4672 = vunpack.c.l.b16 %v4156
    %v4673 = vunpack.c.l.b16 %v4157
    %v4674 = vunpack.c.l.b16 %v4158
    %v4675 = vunpack.c.l.b16 %v4159
    %v4676 = vunpack.c.l.b16 %v4160
    %v4677 = vunpack.c.l.b16 %v4161
    %v4678 = vunpack.c.l.b16 %v4162
    %v4679 = vunpack.c.l.b16 %v4163
    %v4680 = vunpack.c.l.b16 %v4164
    %v4681 = vunpack.c.l.b16 %v4165
    %v4682 = vunpack.c.l.b16 %v4166
    %v4683 = vunpack.c.l.b16 %v4167
    %v4684 = vunpack.c.l.b16 %v4168
    %v4685 = vunpack.c.l.b16 %v4169
    %v4686 = vunpack.c.l.b16 %v4170
    %v4687 = vunpack.c.l.b16 %v4171
    %v4688 = vunpack.c.l.b16 %v4172
    %v4689 = vunpack.c.l.b16 %v4173
    %v4690 = vunpack.c.l.b16 %v4174
    %v4691 = vunpack.c.l.b16 %v4175
    %v4692 = vunpack.c.l.b16 %v4176
    %v4693 = vunpack.c.l.b16 %v4177
    %v4694 = vunpack.c.l.b16 %v4178
    %v4695 = vunpack.c.l.b16 %v4179
    %v4696 = vunpack.c.l.b16 %v4180
    %v4697 = vunpack.c.l.b16 %v4181
    %v4698 = vunpack.c.l.b16 %v4182
    %v4699 = vunpack.c.l.b16 %v4183
    %v4700 = vunpack.c.l.b16 %v4184
    %v4701 = vunpack.c.l.b16 %v4185
    %v4702 = vunpack.c.l.b16 %v4186
    %v4703 = vunpack.c.l.b16 %v4187
    %v4704 = vunpack.c.l.b16 %v4188
    %v4705 = vunpack.c.l.b16 %v4189
    %v4706 = vunpack.c.l.b16 %v4190
    %v4707 = vunpack.c.l.b16 %v4191
    %v4708 = vunpack.c.l.b16 %v4192
    %v4709 = vunpack.c.l.b16 %v4193
    %v4710 = vunpack.c.l.b16 %v4194
    %v4711 = vunpack.c.l.b16 %v4195
    %v4712 = vunpack.c.l.b16 %v4196
    %v4713 = vunpack.c.l.b16 %v4197
    %v4714 = vunpack.c.l.b16 %v4198
    %v4715 = vunpack.c.l.b16 %v4199
    %v4716 = vunpack.c.l.b16 %v4200
    %v4717 = vunpack.c.l.b16 %v4201
    %v4718 = vunpack.c.l.b16 %v4202
    %v4719 = vunpack.c.l.b16 %v4203
    %v4720 = vunpack.c.l.b16 %v4204
    %v4721 = vunpack.c.l.b16 %v4205
    %v4722 = vunpack.c.l.b16 %v4206
    %v4723 = vunpack.c.l.b16 %v4207
    %v4724 = vunpack.c.l.b16 %v4208
    %v4725 = vunpack.c.l.b16 %v4209
    %v4726 = vunpack.c.l.b16 %v4210
    %v4727 = vunpack.c.l.b16 %v4211
    %v4728 = vunpack.c.l.b16 %v4212
    %v4729 = vunpack.c.l.b16 %v4213
    %v4730 = vunpack.c.l.b16 %v4214
    %v4731 = vunpack.c.l.b16 %v4215
    %v4732 = vunpack.c.l.b16 %v4216
    %v4733 = vunpack.c.l.b16 %v4217
    %v4734 = vunpack.c.l.b16 %v4218
    %v4735 = vunpack.c.l.b16 %v4219
    %v4736 = vunpack.c.l.b16 %v4220
    %v4737 = vunpack.c.l.b16 %v4221
    %v4738 = vunpack.c.l.b16 %v4222
    %v4739 = vunpack.c.l.b16 %v4223
    %v4740 = vunpack.c.l.b16 %v4224
    %v4741 = vunpack.c.l.b16 %v4225
    %v4742 = vunpack.c.l.b16 %v4226
    %v4743 = vunpack.c.l.b16 %v4227
    %v4744 = vunpack.c.l.b16 %v4228
    %v4745 = vunpack.c.l.b16 %v4229
    %v4746 = vunpack.c.l.b16 %v4230
    %v4747 = vunpack.c.l.b16 %v4231
    %v4748 = vunpack.c.l.b16 %v4232
    %v4749 = vunpack.c.l.b16 %v4233
    %v4750 = vunpack.c.l.b16 %v4234
    %v4751 = vunpack.c.l.b16 %v4235
    %v4752 = vunpack.c.l.b16 %v4236
    %v4753 = vunpack.c.l.b16 %v4237
    %v4754 = vunpack.c.l.b16 %v4238
    %v4755 = vunpack.c.l.b16 %v4239
    %v4756 = vunpack.c.l.b16 %v4240
    %v4757 = vunpack.c.l.b16 %v4241
    %v4758 = vunpack.c.l.b16 %v4242
    %v4759 = vunpack.c.l.b16 %v4243
    %v4760 = vunpack.c.l.b16 %v4244
    %v4761 = vunpack.c.l.b16 %v4245
    %v4762 = vunpack.c.l.b16 %v4246
    %v4763 = vunpack.c.l.b16 %v4247
    %v4764 = vunpack.c.l.b16 %v4248
    %v4765 = vunpack.c.l.b16 %v4249
    %v4766 = vunpack.c.l.b16 %v4250
    %v4767 = vunpack.c.l.b16 %v4251
    %v4768 = vunpack.c.l.b16 %v4252
    %v4769 = vunpack.c.l.b16 %v4253
    %v4770 = vunpack.c.l.b16 %v4254
    %v4771 = vunpack.c.l.b16 %v4255
    %v4772 = vunpack.c.l.b16 %v4256
    %v4773 = vunpack.c.l.b16 %v4257
    %v4774 = vunpack.c.l.b16 %v4258
    %v4775 = vunpack.c.l.b16 %v4259
    %v4776 = vunpack.c.l.b16 %v4260
    %v4777 = vunpack.c.l.b16 %v4261
    %v4778 = vunpack.c.l.b16 %v4262
    %v4779 = vunpack.c.l.b16 %v4263
    %v4780 = vunpack.c.l.b16 %v4264
    %v4781 = vunpack.c.l.b16 %v4265
    %v4782 = vunpack.c.l.b16 %v4266
    %v4783 = vunpack.c.l.b16 %v4267
    %v4784 = vunpack.c.l.b16 %v4268
    %v4785 = vunpack.c.l.b16 %v4269
    %v4786 = vunpack.c.l.b16 %v4270
    %v4787 = vunpack.c.l.b16 %v4271
    %v4788 = vunpack.c.l.b16 %v4272
    %v4789 = vunpack.c.l.b16 %v4273
    %v4790 = vunpack.c.l.b16 %v4274
    %v4791 = vunpack.c.l.b16 %v4275
    %v4792 = vunpack.c.l.b16 %v4276
    %v4793 = vunpack.c.l.b16 %v4277
    %v4794 = vpack.c.b16 %v4539, %v4538
    %v4795 = vpack.c.b16 %v4541, %v4540
    %v4796 = vpack.c.b16 %v4543, %v4542
    %v4797 = vpack.c.b16 %v4545, %v4544
    %v4798 = vpack.c.b16 %v4547, %v4546
    %v4799 = vpack.c.b16 %v4549, %v4548
    %v4800 = vpack.c.b16 %v4551, %v4550
    %v4801 = vpack.c.b16 %v4553, %v4552
    %v4802 = vpack.c.b16 %v4555, %v4554
    %v4803 = vpack.c.b16 %v4557, %v4556
    %v4804 = vpack.c.b16 %v4559, %v4558
    %v4805 = vpack.c.b16 %v4561, %v4560
    %v4806 = vpack.c.b16 %v4563, %v4562
    %v4807 = vpack.c.b16 %v4565, %v4564
    %v4808 = vpack.c.b16 %v4567, %v4566
    %v4809 = vpack.c.b16 %v4569, %v4568
    %v4810 = vpack.c.b16 %v4571, %v4570
    %v4811 = vpack.c.b16 %v4573, %v4572
    %v4812 = vpack.c.b16 %v4575, %v4574
    %v4813 = vpack.c.b16 %v4577, %v4576
    %v4814 = vpack.c.b16 %v4579, %v4578
    %v4815 = vpack.c.b16 %v4581, %v4580
    %v4816 = vpack.c.b16 %v4583, %v4582
    %v4817 = vpack.c.b16 %v4585, %v4584
    %v4818 = vpack.c.b16 %v4587, %v4586
    %v4819 = vpack.c.b16 %v4589, %v4588
    %v4820 = vpack.c.b16 %v4591, %v4590
    %v4821 = vpack.c.b16 %v4593, %v4592
    %v4822 = vpack.c.b16 %v4595, %v4594
    %v4823 = vpack.c.b16 %v4597, %v4596
    %v4824 = vpack.c.b16 %v4599, %v4598
    %v4825 = vpack.c.b16 %v4601, %v4600
    %v4826 = vpack.c.b16 %v4603, %v4602
    %v4827 = vpack.c.b16 %v4605, %v4604
    %v4828 = vpack.c.b16 %v4607, %v4606
    %v4829 = vpack.c.b16 %v4609, %v4608
    %v4830 = vpack.c.b16 %v4611, %v4610
    %v4831 = vpack.c.b16 %v4613, %v4612
    %v4832 = vpack.c.b16 %v4615, %v4614
    %v4833 = vpack.c.b16 %v4617, %v4616
    %v4834 = vpack.c.b16 %v4619, %v4618
    %v4835 = vpack.c.b16 %v4621, %v4620
    %v4836 = vpack.c.b16 %v4623, %v4622
    %v4837 = vpack.c.b16 %v4625, %v4624
    %v4838 = vpack.c.b16 %v4627, %v4626
    %v4839 = vpack.c.b16 %v4629, %v4628
    %v4840 = vpack.c.b16 %v4631, %v4630
    %v4841 = vpack.c.b16 %v4633, %v4632
    %v4842 = vpack.c.b16 %v4635, %v4634
    %v4843 = vpack.c.b16 %v4637, %v4636
    %v4844 = vpack.c.b16 %v4639, %v4638
    %v4845 = vpack.c.b16 %v4641, %v4640
    %v4846 = vpack.c.b16 %v4643, %v4642
    %v4847 = vpack.c.b16 %v4645, %v4644
    %v4848 = vpack.c.b16 %v4647, %v4646
    %v4849 = vpack.c.b16 %v4649, %v4648
    %v4850 = vpack.c.b16 %v4651, %v4650
    %v4851 = vpack.c.b16 %v4653, %v4652
    %v4852 = vpack.c.b16 %v4655, %v4654
    %v4853 = vpack.c.b16 %v4657, %v4656
    %v4854 = vpack.c.b16 %v4659, %v4658
    %v4855 = vpack.c.b16 %v4661, %v4660
    %v4856 = vpack.c.b16 %v4663, %v4662
    %v4857 = vpack.c.b16 %v4665, %v4664
    %v4858 = vpack.c.b16 %v4667, %v4666
    %v4859 = vpack.c.b16 %v4669, %v4668
    %v4860 = vpack.c.b16 %v4671, %v4670
    %v4861 = vpack.c.b16 %v4673, %v4672
    %v4862 = vpack.c.b16 %v4675, %v4674
    %v4863 = vpack.c.b16 %v4677, %v4676
    %v4864 = vpack.c.b16 %v4679, %v4678
    %v4865 = vpack.c.b16 %v4681, %v4680
    %v4866 = vpack.c.b16 %v4683, %v4682
    %v4867 = vpack.c.b16 %v4685, %v4684
    %v4868 = vpack.c.b16 %v4687, %v4686
    %v4869 = vpack.c.b16 %v4689, %v4688
    %v4870 = vpack.c.b16 %v4691, %v4690
    %v4871 = vpack.c.b16 %v4693, %v4692
    %v4872 = vpack.c.b16 %v4695, %v4694
    %v4873 = vpack.c.b16 %v4697, %v4696
    %v4874 = vpack.c.b16 %v4699, %v4698
    %v4875 = vpack.c.b16 %v4701, %v4700
    %v4876 = vpack.c.b16 %v4703, %v4702
    %v4877 = vpack.c.b16 %v4705, %v4704
    %v4878 = vpack.c.b16 %v4707, %v4706
    %v4879 = vpack.c.b16 %v4709, %v4708
    %v4880 = vpack.c.b16 %v4711, %v4710
    %v4881 = vpack.c.b16 %v4713, %v4712
    %v4882 = vpack.c.b16 %v4715, %v4714
    %v4883 = vpack.c.b16 %v4717, %v4716
    %v4884 = vpack.c.b16 %v4719, %v4718
    %v4885 = vpack.c.b16 %v4721, %v4720
    %v4886 = vpack.c.b16 %v4723, %v4722
    %v4887 = vpack.c.b16 %v4725, %v4724
    %v4888 = vpack.c.b16 %v4727, %v4726
    %v4889 = vpack.c.b16 %v4729, %v4728
    %v4890 = vpack.c.b16 %v4731, %v4730
    %v4891 = vpack.c.b16 %v4733, %v4732
    %v4892 = vpack.c.b16 %v4735, %v4734
    %v4893 = vpack.c.b16 %v4737, %v4736
    %v4894 = vpack.c.b16 %v4739, %v4738
    %v4895 = vpack.c.b16 %v4741, %v4740
    %v4896 = vpack.c.b16 %v4743, %v4742
    %v4897 = vpack.c.b16 %v4745, %v4744
    %v4898 = vpack.c.b16 %v4747, %v4746
    %v4899 = vpack.c.b16 %v4749, %v4748
    %v4900 = vpack.c.b16 %v4751, %v4750
    %v4901 = vpack.c.b16 %v4753, %v4752
    %v4902 = vpack.c.b16 %v4755, %v4754
    %v4903 = vpack.c.b16 %v4757, %v4756
    %v4904 = vpack.c.b16 %v4759, %v4758
    %v4905 = vpack.c.b16 %v4761, %v4760
    %v4906 = vpack.c.b16 %v4763, %v4762
    %v4907 = vpack.c.b16 %v4765, %v4764
    %v4908 = vpack.c.b16 %v4767, %v4766
    %v4909 = vpack.c.b16 %v4769, %v4768
    %v4910 = vpack.c.b16 %v4771, %v4770
    %v4911 = vpack.c.b16 %v4773, %v4772
    %v4912 = vpack.c.b16 %v4775, %v4774
    %v4913 = vpack.c.b16 %v4777, %v4776
    %v4914 = vpack.c.b16 %v4779, %v4778
    %v4915 = vpack.c.b16 %v4781, %v4780
    %v4916 = vpack.c.b16 %v4783, %v4782
    %v4917 = vpack.c.b16 %v4785, %v4784
    %v4918 = vpack.c.b16 %v4787, %v4786
    %v4919 = vpack.c.b16 %v4789, %v4788
    %v4920 = vpack.c.b16 %v4791, %v4790
    %v4921 = vpack.c.b16 %v4793, %v4792
    %5050 = vmatpush.bf16.msra.mxu0 %v4801
    %5051 = vmatpush.bf16.msra.mxu0 %v4800
    %5052 = vmatpush.bf16.msra.mxu0 %v4799
    %5053 = vmatpush.bf16.msra.mxu0 %v4798
    %5054 = vmatpush.bf16.msra.mxu0 %v4797
    %5055 = vmatpush.bf16.msra.mxu0 %v4796
    %5056 = vmatpush.bf16.msra.mxu0 %v4795
    %5057 = vmatpush.bf16.msra.mxu0 %v4794
    %5058 = vmatmul.bf16.gmra.mxu0 %v4006
    %v5059 = vpop.f32.mrf.mxu0
    %v5060 = vadd.f32 %v4280, %v5059
    %v5061 = vpop.f32.mrf.mxu0
    %5062 = vdwg.mxu0
    %5063 = vmatpush.bf16.msra.mxu0 %v4809
    %5064 = vmatpush.bf16.msra.mxu0 %v4808
    %5065 = vmatpush.bf16.msra.mxu0 %v4807
    %5066 = vmatpush.bf16.msra.mxu0 %v4806
    %5067 = vmatpush.bf16.msra.mxu0 %v4805
    %5068 = vmatpush.bf16.msra.mxu0 %v4804
    %5069 = vmatpush.bf16.msra.mxu0 %v4803
    %5070 = vmatpush.bf16.msra.mxu0 %v4802
    %5071 = vmatmul.bf16.gmra.mxu0 %v4007
    %v5072 = vpop.f32.mrf.mxu0
    %v5073 = vadd.f32 %v5060, %v5072
    %v5074 = vpop.f32.mrf.mxu0
    %5075 = vdwg.mxu0
    %5076 = vmatpush.bf16.msra.mxu0 %v4817
    %5077 = vmatpush.bf16.msra.mxu0 %v4816
    %5078 = vmatpush.bf16.msra.mxu0 %v4815
    %5079 = vmatpush.bf16.msra.mxu0 %v4814
    %5080 = vmatpush.bf16.msra.mxu0 %v4813
    %5081 = vmatpush.bf16.msra.mxu0 %v4812
    %5082 = vmatpush.bf16.msra.mxu0 %v4811
    %5083 = vmatpush.bf16.msra.mxu0 %v4810
    %5084 = vmatmul.bf16.gmra.mxu0 %v4008
    %v5085 = vpop.f32.mrf.mxu0
    %v5086 = vadd.f32 %v5073, %v5085
    %v5087 = vpop.f32.mrf.mxu0
    %5088 = vdwg.mxu0
    %5089 = vmatpush.bf16.msra.mxu0 %v4825
    %5090 = vmatpush.bf16.msra.mxu0 %v4824
    %5091 = vmatpush.bf16.msra.mxu0 %v4823
    %5092 = vmatpush.bf16.msra.mxu0 %v4822
    %5093 = vmatpush.bf16.msra.mxu0 %v4821
    %5094 = vmatpush.bf16.msra.mxu0 %v4820
    %5095 = vmatpush.bf16.msra.mxu0 %v4819
    %5096 = vmatpush.bf16.msra.mxu0 %v4818
    %5097 = vmatmul.bf16.gmra.mxu0 %v4009
    %v5098 = vpop.f32.mrf.mxu0
    %v5099 = vadd.f32 %v5086, %v5098
    %v5100 = vpop.f32.mrf.mxu0
    %5101 = vdwg.mxu0
    %5102 = vmatpush.bf16.msra.mxu0 %v4833
    %5103 = vmatpush.bf16.msra.mxu0 %v4832
    %5104 = vmatpush.bf16.msra.mxu0 %v4831
    %5105 = vmatpush.bf16.msra.mxu0 %v4830
    %5106 = vmatpush.bf16.msra.mxu0 %v4829
    %5107 = vmatpush.bf16.msra.mxu0 %v4828
    %5108 = vmatpush.bf16.msra.mxu0 %v4827
    %5109 = vmatpush.bf16.msra.mxu0 %v4826
    %5110 = vmatmul.bf16.gmra.mxu0 %v4010
    %v5111 = vpop.f32.mrf.mxu0
    %v5112 = vadd.f32 %v5099, %v5111
    %v5113 = vpop.f32.mrf.mxu0
    %5114 = vdwg.mxu0
    %5115 = vmatpush.bf16.msra.mxu0 %v4841
    %5116 = vmatpush.bf16.msra.mxu0 %v4840
    %5117 = vmatpush.bf16.msra.mxu0 %v4839
    %5118 = vmatpush.bf16.msra.mxu0 %v4838
    %5119 = vmatpush.bf16.msra.mxu0 %v4837
    %5120 = vmatpush.bf16.msra.mxu0 %v4836
    %5121 = vmatpush.bf16.msra.mxu0 %v4835
    %5122 = vmatpush.bf16.msra.mxu0 %v4834
    %5123 = vmatmul.bf16.gmra.mxu0 %v4011
    %v5124 = vpop.f32.mrf.mxu0
    %v5125 = vadd.f32 %v5112, %v5124
    %v5126 = vpop.f32.mrf.mxu0
    %5127 = vdwg.mxu0
    %5128 = vmatpush.bf16.msra.mxu0 %v4849
    %5129 = vmatpush.bf16.msra.mxu0 %v4848
    %5130 = vmatpush.bf16.msra.mxu0 %v4847
    %5131 = vmatpush.bf16.msra.mxu0 %v4846
    %5132 = vmatpush.bf16.msra.mxu0 %v4845
    %5133 = vmatpush.bf16.msra.mxu0 %v4844
    %5134 = vmatpush.bf16.msra.mxu0 %v4843
    %5135 = vmatpush.bf16.msra.mxu0 %v4842
    %5136 = vmatmul.bf16.gmra.mxu0 %v4012
    %v5137 = vpop.f32.mrf.mxu0
    %v5138 = vadd.f32 %v5125, %v5137
    %v5139 = vpop.f32.mrf.mxu0
    %5140 = vdwg.mxu0
    %5141 = vmatpush.bf16.msra.mxu0 %v4857
    %5142 = vmatpush.bf16.msra.mxu0 %v4856
    %5143 = vmatpush.bf16.msra.mxu0 %v4855
    %5144 = vmatpush.bf16.msra.mxu0 %v4854
    %5145 = vmatpush.bf16.msra.mxu0 %v4853
    %5146 = vmatpush.bf16.msra.mxu0 %v4852
    %5147 = vmatpush.bf16.msra.mxu0 %v4851
    %5148 = vmatpush.bf16.msra.mxu0 %v4850
    %5149 = vmatmul.bf16.gmra.mxu0 %v4013
    %v5150 = vpop.f32.mrf.mxu0
    %v5151 = vadd.f32 %v5138, %v5150
    %v5152 = vpop.f32.mrf.mxu0
    %5153 = vdwg.mxu0
    %5154 = vmatpush.bf16.msra.mxu0 %v4865
    %5155 = vmatpush.bf16.msra.mxu0 %v4864
    %5156 = vmatpush.bf16.msra.mxu0 %v4863
    %5157 = vmatpush.bf16.msra.mxu0 %v4862
    %5158 = vmatpush.bf16.msra.mxu0 %v4861
    %5159 = vmatpush.bf16.msra.mxu0 %v4860
    %5160 = vmatpush.bf16.msra.mxu0 %v4859
    %5161 = vmatpush.bf16.msra.mxu0 %v4858
    %5162 = vmatmul.bf16.gmra.mxu0 %v4014
    %v5163 = vpop.f32.mrf.mxu0
    %v5164 = vadd.f32 %v5151, %v5163
    %v5165 = vpop.f32.mrf.mxu0
    %5166 = vdwg.mxu0
    %5167 = vmatpush.bf16.msra.mxu0 %v4873
    %5168 = vmatpush.bf16.msra.mxu0 %v4872
    %5169 = vmatpush.bf16.msra.mxu0 %v4871
    %5170 = vmatpush.bf16.msra.mxu0 %v4870
    %5171 = vmatpush.bf16.msra.mxu0 %v4869
    %5172 = vmatpush.bf16.msra.mxu0 %v4868
    %5173 = vmatpush.bf16.msra.mxu0 %v4867
    %5174 = vmatpush.bf16.msra.mxu0 %v4866
    %5175 = vmatmul.bf16.gmra.mxu0 %v4015
    %v5176 = vpop.f32.mrf.mxu0
    %v5177 = vadd.f32 %v5164, %v5176
    %v5178 = vpop.f32.mrf.mxu0
    %5179 = vdwg.mxu0
    %5180 = vmatpush.bf16.msra.mxu0 %v4881
    %5181 = vmatpush.bf16.msra.mxu0 %v4880
    %5182 = vmatpush.bf16.msra.mxu0 %v4879
    %5183 = vmatpush.bf16.msra.mxu0 %v4878
    %5184 = vmatpush.bf16.msra.mxu0 %v4877
    %5185 = vmatpush.bf16.msra.mxu0 %v4876
    %5186 = vmatpush.bf16.msra.mxu0 %v4875
    %5187 = vmatpush.bf16.msra.mxu0 %v4874
    %5188 = vmatmul.bf16.gmra.mxu0 %v4016
    %v5189 = vpop.f32.mrf.mxu0
    %v5190 = vadd.f32 %v5177, %v5189
    %v5191 = vpop.f32.mrf.mxu0
    %5192 = vdwg.mxu0
    %5193 = vmatpush.bf16.msra.mxu0 %v4889
    %5194 = vmatpush.bf16.msra.mxu0 %v4888
    %5195 = vmatpush.bf16.msra.mxu0 %v4887
    %5196 = vmatpush.bf16.msra.mxu0 %v4886
    %5197 = vmatpush.bf16.msra.mxu0 %v4885
    %5198 = vmatpush.bf16.msra.mxu0 %v4884
    %5199 = vmatpush.bf16.msra.mxu0 %v4883
    %5200 = vmatpush.bf16.msra.mxu0 %v4882
    %5201 = vmatmul.bf16.gmra.mxu0 %v4017
    %v5202 = vpop.f32.mrf.mxu0
    %v5203 = vadd.f32 %v5190, %v5202
    %v5204 = vpop.f32.mrf.mxu0
    %5205 = vdwg.mxu0
    %5206 = vmatpush.bf16.msra.mxu0 %v4897
    %5207 = vmatpush.bf16.msra.mxu0 %v4896
    %5208 = vmatpush.bf16.msra.mxu0 %v4895
    %5209 = vmatpush.bf16.msra.mxu0 %v4894
    %5210 = vmatpush.bf16.msra.mxu0 %v4893
    %5211 = vmatpush.bf16.msra.mxu0 %v4892
    %5212 = vmatpush.bf16.msra.mxu0 %v4891
    %5213 = vmatpush.bf16.msra.mxu0 %v4890
    %5214 = vmatmul.bf16.gmra.mxu0 %v4018
    %v5215 = vpop.f32.mrf.mxu0
    %v5216 = vadd.f32 %v5203, %v5215
    %v5217 = vpop.f32.mrf.mxu0
    %5218 = vdwg.mxu0
    %5219 = vmatpush.bf16.msra.mxu0 %v4905
    %5220 = vmatpush.bf16.msra.mxu0 %v4904
    %5221 = vmatpush.bf16.msra.mxu0 %v4903
    %5222 = vmatpush.bf16.msra.mxu0 %v4902
    %5223 = vmatpush.bf16.msra.mxu0 %v4901
    %5224 = vmatpush.bf16.msra.mxu0 %v4900
    %5225 = vmatpush.bf16.msra.mxu0 %v4899
    %5226 = vmatpush.bf16.msra.mxu0 %v4898
    %5227 = vmatmul.bf16.gmra.mxu0 %v4019
    %v5228 = vpop.f32.mrf.mxu0
    %v5229 = vadd.f32 %v5216, %v5228
    %v5230 = vpop.f32.mrf.mxu0
    %5231 = vdwg.mxu0
    %5232 = vmatpush.bf16.msra.mxu0 %v4913
    %5233 = vmatpush.bf16.msra.mxu0 %v4912
    %5234 = vmatpush.bf16.msra.mxu0 %v4911
    %5235 = vmatpush.bf16.msra.mxu0 %v4910
    %5236 = vmatpush.bf16.msra.mxu0 %v4909
    %5237 = vmatpush.bf16.msra.mxu0 %v4908
    %5238 = vmatpush.bf16.msra.mxu0 %v4907
    %5239 = vmatpush.bf16.msra.mxu0 %v4906
    %5240 = vmatmul.bf16.gmra.mxu0 %v4020
    %v5241 = vpop.f32.mrf.mxu0
    %v5242 = vadd.f32 %v5229, %v5241
    %v5243 = vpop.f32.mrf.mxu0
    %5244 = vdwg.mxu0
    %5245 = vmatpush.bf16.msra.mxu0 %v4921
    %5246 = vmatpush.bf16.msra.mxu0 %v4920
    %5247 = vmatpush.bf16.msra.mxu0 %v4919
    %5248 = vmatpush.bf16.msra.mxu0 %v4918
    %5249 = vmatpush.bf16.msra.mxu0 %v4917
    %5250 = vmatpush.bf16.msra.mxu0 %v4916
    %5251 = vmatpush.bf16.msra.mxu0 %v4915
    %5252 = vmatpush.bf16.msra.mxu0 %v4914
    %5253 = vmatmul.bf16.gmra.mxu0 %v4021
    %v5254 = vpop.f32.mrf.mxu0
    %v5255 = vadd.f32 %v5242, %v5254
    %v5256 = vpop.f32.mrf.mxu0
    %5257 = vdwg.mxu0
    %v5258 = vmax.f32 %v5255, 0.0
    %v5259 = vpack.c.bf16 %v5258, %v5258
    %v5260 = vld [vmem:[%s11] sm:$0xf]
    %v5261 = vld [vmem:[%s11 + $0x4] sm:$0xf]
    %v5262 = vld [vmem:[%s11 + $0x8] sm:$0xf]
    %v5263 = vld [vmem:[%s11 + $0xc] sm:$0xf]
    %v5264 = vld [vmem:[%s12] sm:$0x1]
    %v5266 = vperm.slane %v5264, 0
    %v5272 = vunpack.c.l.b16 %v5260
    %v5273 = vunpack.c.l.b16 %v5261
    %v5274 = vunpack.c.l.b16 %v5262
    %v5275 = vunpack.c.l.b16 %v5263
    %v5276 = vpack.c.b16 %v5273, %v5272
    %v5277 = vpack.c.b16 %v5275, %v5274
    %vm5280 = vcmask 261120
    %v5282 = vsel %vm5280, %v5259, 0
    %5284 = vmatpush.bf16.msra.mxu0 0
    %5285 = vmatpush.bf16.msra.mxu0 0
    %5286 = vmatpush.bf16.msra.mxu0 0
    %5287 = vmatpush.bf16.msra.mxu0 0
    %5288 = vmatpush.bf16.msra.mxu0 0
    %5289 = vmatpush.bf16.msra.mxu0 0
    %5290 = vmatpush.bf16.msra.mxu0 %v5277
    %5291 = vmatpush.bf16.msra.mxu0 %v5276
    %5292 = vmatmul.bf16.gmra.mxu0 %v5282
    %v5293 = vpop.f32.mrf.mxu0
    %v5294 = vadd.f32 %v5266, %v5293
    %v5295 = vpop.f32.mrf.mxu0
    %5296 = vdwg.mxu0
    %vm5297 = vcmask 74752
    %5298 = vst.msk [vmem:[#allocation4] sm:$0x3] %vm5297, %v5294
    // Predicated region
    $region54: #{eurosat_cnn_forward.1} parent=1 // pred_check
      _
    $region55: #{eurosat_cnn_forward.1} parent=1 // pred_check_branch
      %5300 = sbr.rel (0) target = $region57
    $region56: #{eurosat_cnn_forward.1} parent=1 // pred_region
      %5302 = vsyncadd [#allocation5], 0
      %s5304 = sshll.u32 [#allocation4], 4
      %s5305 = int_to_ptr.vmem [resolvable:$true] %s5304
      %s5306 = sshll.u32 %s13, 4
      %s5307 = int_to_ptr.hbm [resolvable:$true] %s5306
      %5309 = dma.vmem_to_hbm [thread:$0]  %s5305, 32, %s5307, [#allocation5]
    $region57: #{eurosat_cnn_forward.1} parent=1 // pred_fallthru
      _
    // Predicated region
    $region58: #{eurosat_cnn_forward.1} parent=1 // pred_check
      _
    $region59: #{eurosat_cnn_forward.1} parent=1 // pred_check_branch
      %5311 = sbr.rel (0) target = $region61
    $region60: #{eurosat_cnn_forward.1} parent=1 // pred_region
      %5313 = dma.done [#allocation5], 32
    $region61: #{eurosat_cnn_forward.1} parent=1 // pred_fallthru
      _
    %5314 = vsyncpa [#allocation5], 1

</llo_original>
